<compile_context>
chip_gen: v6e
topology: v6e:2x2x1
jax: 0.10.0
libtpu: 0.0.40
codegen_flags: <defaults>
</compile_context>

<pallas_src>
from functools import partial

import jax
import jax.numpy as jnp
from jax import lax
from jax.experimental import pallas as pl
from jax.experimental.pallas import tpu as pltpu


def _attention_kernel(x_ref, wqkv_ref, wo_ref, b_ref, o_ref,
                      *, heads, dim_head, hw, hwp):
    """One grid step == one batch element.

    x_ref    : (1, C, HWp)        input slab (HW on lanes, zero-padded to HWp)
    wqkv_ref : (3*hidden, C)      fused QKV weight (scale folded into q rows)
    wo_ref   : (C, hidden)        output projection weight
    b_ref    : (C, 1)             output projection bias
    o_ref    : (1, C, HWp)        output slab
    """
    hidden = heads * dim_head

    x = x_ref[0].astype(jnp.float32)                       # (C, HWp)
    wqkv = wqkv_ref[...].astype(jnp.float32)               # (3*hidden, C)

    # Single fused QKV projection (1x1 conv == channel matmul), HW on lanes.
    qkv = jnp.dot(wqkv, x, preferred_element_type=jnp.float32)   # (3*hidden, HWp)

    if hwp != hw:
        # Padded key positions live on the sublane (j) axis of sim_t.
        key_pad = lax.broadcasted_iota(jnp.int32, (hwp, 1), 0) >= hw   # (HWp, 1)

    outs = []
    for h in range(heads):                                  # short static loop
        q = qkv[h * dim_head:(h + 1) * dim_head].astype(jnp.bfloat16)              # (d, HWp)
        k = qkv[hidden + h * dim_head:hidden + (h + 1) * dim_head].astype(jnp.bfloat16)
        v = qkv[2 * hidden + h * dim_head:2 * hidden + (h + 1) * dim_head].astype(jnp.bfloat16)

        # sim_t[j, i] = sum_d k[d, j] * q[d, i]  (keys on sublanes so the PV
        # matmul below needs no (HW, HW) transpose).
        sim_t = lax.dot_general(k, q, (((0,), (0,)), ((), ())),
                                preferred_element_type=jnp.float32)                # (HWp, HWp)
        if hwp != hw:
            sim_t = jnp.where(key_pad, jnp.float32(-1e30), sim_t)

        # Max-stabilized softmax over keys (axis 0); normalization deferred.
        m = jnp.max(sim_t, axis=0, keepdims=True)                                  # (1, HWp)
        p = jnp.exp(sim_t - m)                                                     # (HWp, HWp)
        l = jnp.sum(p, axis=0, keepdims=True)                                      # (1, HWp)

        # out_u[d, i] = sum_j v[d, j] * p[j, i]   -- plain (m,k)@(k,n).
        out_u = lax.dot_general(v, p.astype(jnp.bfloat16), (((1,), (0,)), ((), ())),
                                preferred_element_type=jnp.float32)                # (d, HWp)

        # Deferred normalization: d*HW multiplies + HW EUP reciprocals.
        outs.append(out_u * pl.reciprocal(l, approx=True))

    out_all = jnp.concatenate(outs, axis=0)                                        # (hidden, HWp)

    # Output 1x1 conv: one 128-deep matmul + bias (kept f32 for accuracy).
    wo = wo_ref[...].astype(jnp.float32)                                           # (C, hidden)
    bias = b_ref[...].astype(jnp.float32)                                          # (C, 1)
    y = jnp.dot(wo, out_all, preferred_element_type=jnp.float32) + bias            # (C, HWp)
    o_ref[0] = y.astype(o_ref.dtype)


def attention_pallas(x, w_qkv, w_out, b_out, *, heads, dim_head):
    """x: (B, C, H, W); w_qkv: (3*heads*dim_head, C) [to_qkv 1x1 conv weight];
    w_out: (C, heads*dim_head); b_out: (C,). Matches Attention.forward."""
    B, C, H, W = x.shape
    HW = H * W
    hidden = heads * dim_head
    scale = dim_head ** (-0.5)

    # Pad the spatial (lane) axis to a multiple of 128 for unmasked stores;
    # padded keys are masked inside the kernel, padded queries sliced off here.
    HWp = max(128, ((HW + 127) // 128) * 128)
    x3 = x.reshape(B, C, HW)
    if HWp != HW:
        x3 = jnp.pad(x3, ((0, 0), (0, 0), (0, HWp - HW)))

    # Fold the attention scale into the query rows of the fused QKV weight.
    w_qkv_s = jnp.concatenate([w_qkv[:hidden] * scale, w_qkv[hidden:]], axis=0)
    b2 = b_out.reshape(C, 1)

    kernel = partial(_attention_kernel, heads=heads, dim_head=dim_head,
                     hw=HW, hwp=HWp)

    out3 = pl.pallas_call(
        kernel,
        out_shape=jax.ShapeDtypeStruct((B, C, HWp), x.dtype),
        grid_spec=pltpu.PrefetchScalarGridSpec(
            num_scalar_prefetch=0,
            grid=(B,),
            in_specs=[
                pl.BlockSpec((1, C, HWp), lambda b: (b, 0, 0)),       # x
                pl.BlockSpec((3 * hidden, C), lambda b: (0, 0)),      # fused QKV weight
                pl.BlockSpec((C, hidden), lambda b: (0, 0)),          # output weight
                pl.BlockSpec((C, 1), lambda b: (0, 0)),               # output bias
            ],
            out_specs=pl.BlockSpec((1, C, HWp), lambda b: (b, 0, 0)),
        ),
        compiler_params=pltpu.CompilerParams(
            dimension_semantics=("parallel",),
            vmem_limit_bytes=48 * 1024 * 1024,
        ),
    )(x3, w_qkv_s, w_out, b2)

    if HWp != HW:
        out3 = out3[..., :HW]
    return out3.reshape(B, C, H, W)


def attention_ref(x, w_qkv, w_out, b_out, heads, dim_head):
    """Pure-JAX reference mirroring the PyTorch forward."""
    B, C, H, W = x.shape
    HW = H * W
    hidden = heads * dim_head
    scale = dim_head ** (-0.5)
    hp = lax.Precision.HIGHEST

    x3 = x.reshape(B, C, HW)
    qkv = jnp.einsum('oc,bcs->bos', w_qkv, x3, precision=hp)           # (B, 3*hidden, HW)
    q, k, v = jnp.split(qkv, 3, axis=1)
    q = q.reshape(B, heads, dim_head, HW) * scale
    k = k.reshape(B, heads, dim_head, HW)
    v = v.reshape(B, heads, dim_head, HW)
    sim = jnp.einsum('bhdi,bhdj->bhij', q, k, precision=hp)
    attn = jax.nn.softmax(sim, axis=-1)
    out = jnp.einsum('bhij,bhdj->bhid', attn, v, precision=hp)         # (B, heads, HW, d)
    out = out.transpose(0, 1, 3, 2).reshape(B, hidden, HW)             # b (h d) (x y)
    y = jnp.einsum('oc,bcs->bos', w_out, out, precision=hp) + b_out.reshape(1, C, 1)
    return y.reshape(B, C, H, W)


if __name__ == "__main__":
    key = jax.random.PRNGKey(0)
    B, dim, H, W = 2, 4, 16, 16
    heads, dim_head = 4, 32
    hidden = heads * dim_head

    k1, k2, k3, k4 = jax.random.split(key, 4)
    x = jax.random.normal(k1, (B, dim, H, W), dtype=jnp.float32)
    # 1x1 conv weights with the spatial (1,1) dims squeezed; torch-like fan-in scale.
    w_qkv = jax.random.normal(k2, (3 * hidden, dim), dtype=jnp.float32) / jnp.sqrt(dim)
    w_out = jax.random.normal(k3, (dim, hidden), dtype=jnp.float32) / jnp.sqrt(hidden)
    b_out = jax.random.normal(k4, (dim,), dtype=jnp.float32) * 0.1

    out = attention_pallas(x, w_qkv, w_out, b_out, heads=heads, dim_head=dim_head)
    jax.block_until_ready(out)

    ref = attention_ref(x, w_qkv, w_out, b_out, heads, dim_head)
    assert out.shape == (B, dim, H, W)
    assert jnp.allclose(out, ref, atol=2e-2, rtol=2e-2), "mismatch vs reference"
    print("KERNEL_OK")
</pallas_src>

<mosaic_0001>
module attributes {stable_mosaic.version = 11 : i64} {
  func.func @_attention_kernel(%arg0: i32, %arg1: memref<1x4x256xf32, #tpu.memory_space<vmem>>, %arg2: memref<384x4xf32, #tpu.memory_space<vmem>>, %arg3: memref<4x128xf32, #tpu.memory_space<vmem>>, %arg4: memref<4x1xf32, #tpu.memory_space<vmem>>, %arg5: memref<1x4x256xf32, #tpu.memory_space<vmem>>) attributes {dimension_semantics = [#tpu.dimension_semantics<parallel>], iteration_bounds = array<i64: 2>, scalar_prefetch = 0 : i64, scratch_operands = 0 : i64, tpu.core_type = #tpu.core_type<tc>, window_params = [{transform_indices = @transform_0, window_bounds = array<i64: 1, 4, 256>}, {pipeline_mode = #tpu.pipeline_mode<synchronous>, transform_indices = @transform_1, window_bounds = array<i64: 384, 4>}, {pipeline_mode = #tpu.pipeline_mode<synchronous>, transform_indices = @transform_2, window_bounds = array<i64: 4, 128>}, {pipeline_mode = #tpu.pipeline_mode<synchronous>, transform_indices = @transform_3, window_bounds = array<i64: 4, 1>}, {transform_indices = @transform_4, window_bounds = array<i64: 1, 4, 256>}]} {
    %c0 = arith.constant 0 : index
    %c0_0 = arith.constant 0 : index
    %c0_1 = arith.constant 0 : index
    %0 = vector.load %arg1[%c0, %c0_0, %c0_1] : memref<1x4x256xf32, #tpu.memory_space<vmem>>, vector<1x4x256xf32>
    %1 = vector.shape_cast %0 : vector<1x4x256xf32> to vector<4x256xf32>
    %c0_2 = arith.constant 0 : index
    %c0_3 = arith.constant 0 : index
    %2 = vector.load %arg2[%c0_2, %c0_3] : memref<384x4xf32, #tpu.memory_space<vmem>>, vector<384x4xf32>
    %cst = arith.constant dense<0.000000e+00> : vector<384x256xf32>
    %3 = tpu.matmul %2, %1, %cst {dimension_numbers = #tpu.dot_dimension_numbers<[1], [0], [0], [1], [0, 0, 1, 1], [], []>} : vector<384x4xf32>, vector<4x256xf32>, vector<384x256xf32> -> vector<384x256xf32>
    %4 = vector.extract_strided_slice %3 {offsets = [0, 0], sizes = [32, 256], strides = [1, 1]} : vector<384x256xf32> to vector<32x256xf32>
    %5 = arith.truncf %4 : vector<32x256xf32> to vector<32x256xbf16>
    %6 = vector.extract_strided_slice %3 {offsets = [128, 0], sizes = [32, 256], strides = [1, 1]} : vector<384x256xf32> to vector<32x256xf32>
    %7 = arith.truncf %6 : vector<32x256xf32> to vector<32x256xbf16>
    %8 = vector.extract_strided_slice %3 {offsets = [256, 0], sizes = [32, 256], strides = [1, 1]} : vector<384x256xf32> to vector<32x256xf32>
    %9 = arith.truncf %8 : vector<32x256xf32> to vector<32x256xbf16>
    %cst_4 = arith.constant dense<0.000000e+00> : vector<256x256xf32>
    %10 = tpu.matmul %7, %5, %cst_4 {dimension_numbers = #tpu.dot_dimension_numbers<[0], [0], [1], [1], [0, 1, 1, 1], [], []>} : vector<32x256xbf16>, vector<32x256xbf16>, vector<256x256xf32> -> vector<256x256xf32>
    %cst_5 = arith.constant dense<0xFF800000> : vector<256xf32>
    %11 = vector.multi_reduction <maximumf>, %10, %cst_5 [0] : vector<256x256xf32> to vector<256xf32>
    %12 = vector.shape_cast %11 : vector<256xf32> to vector<1x256xf32>
    %13 = vector.broadcast %12 : vector<1x256xf32> to vector<256x256xf32>
    %14 = arith.subf %10, %13 : vector<256x256xf32>
    %15 = math.exp %14 : vector<256x256xf32>
    %cst_6 = arith.constant dense<0.000000e+00> : vector<256xf32>
    %16 = vector.multi_reduction <add>, %15, %cst_6 [0] : vector<256x256xf32> to vector<256xf32>
    %17 = vector.shape_cast %16 : vector<256xf32> to vector<1x256xf32>
    %18 = arith.truncf %15 : vector<256x256xf32> to vector<256x256xbf16>
    %cst_7 = arith.constant dense<0.000000e+00> : vector<32x256xf32>
    %19 = tpu.matmul %9, %18, %cst_7 {dimension_numbers = #tpu.dot_dimension_numbers<[1], [0], [0], [1], [0, 0, 1, 1], [], []>} : vector<32x256xbf16>, vector<256x256xbf16>, vector<32x256xf32> -> vector<32x256xf32>
    %20 = tpu.reciprocal %17 {approx = true} : vector<1x256xf32> -> vector<1x256xf32>
    %21 = vector.broadcast %20 : vector<1x256xf32> to vector<32x256xf32>
    %22 = arith.mulf %19, %21 : vector<32x256xf32>
    %23 = vector.extract_strided_slice %3 {offsets = [32, 0], sizes = [32, 256], strides = [1, 1]} : vector<384x256xf32> to vector<32x256xf32>
    %24 = arith.truncf %23 : vector<32x256xf32> to vector<32x256xbf16>
    %25 = vector.extract_strided_slice %3 {offsets = [160, 0], sizes = [32, 256], strides = [1, 1]} : vector<384x256xf32> to vector<32x256xf32>
    %26 = arith.truncf %25 : vector<32x256xf32> to vector<32x256xbf16>
    %27 = vector.extract_strided_slice %3 {offsets = [288, 0], sizes = [32, 256], strides = [1, 1]} : vector<384x256xf32> to vector<32x256xf32>
    %28 = arith.truncf %27 : vector<32x256xf32> to vector<32x256xbf16>
    %cst_8 = arith.constant dense<0.000000e+00> : vector<256x256xf32>
    %29 = tpu.matmul %26, %24, %cst_8 {dimension_numbers = #tpu.dot_dimension_numbers<[0], [0], [1], [1], [0, 1, 1, 1], [], []>} : vector<32x256xbf16>, vector<32x256xbf16>, vector<256x256xf32> -> vector<256x256xf32>
    %cst_9 = arith.constant dense<0xFF800000> : vector<256xf32>
    %30 = vector.multi_reduction <maximumf>, %29, %cst_9 [0] : vector<256x256xf32> to vector<256xf32>
    %31 = vector.shape_cast %30 : vector<256xf32> to vector<1x256xf32>
    %32 = vector.broadcast %31 : vector<1x256xf32> to vector<256x256xf32>
    %33 = arith.subf %29, %32 : vector<256x256xf32>
    %34 = math.exp %33 : vector<256x256xf32>
    %cst_10 = arith.constant dense<0.000000e+00> : vector<256xf32>
    %35 = vector.multi_reduction <add>, %34, %cst_10 [0] : vector<256x256xf32> to vector<256xf32>
    %36 = vector.shape_cast %35 : vector<256xf32> to vector<1x256xf32>
    %37 = arith.truncf %34 : vector<256x256xf32> to vector<256x256xbf16>
    %cst_11 = arith.constant dense<0.000000e+00> : vector<32x256xf32>
    %38 = tpu.matmul %28, %37, %cst_11 {dimension_numbers = #tpu.dot_dimension_numbers<[1], [0], [0], [1], [0, 0, 1, 1], [], []>} : vector<32x256xbf16>, vector<256x256xbf16>, vector<32x256xf32> -> vector<32x256xf32>
    %39 = tpu.reciprocal %36 {approx = true} : vector<1x256xf32> -> vector<1x256xf32>
    %40 = vector.broadcast %39 : vector<1x256xf32> to vector<32x256xf32>
    %41 = arith.mulf %38, %40 : vector<32x256xf32>
    %42 = vector.extract_strided_slice %3 {offsets = [64, 0], sizes = [32, 256], strides = [1, 1]} : vector<384x256xf32> to vector<32x256xf32>
    %43 = arith.truncf %42 : vector<32x256xf32> to vector<32x256xbf16>
    %44 = vector.extract_strided_slice %3 {offsets = [192, 0], sizes = [32, 256], strides = [1, 1]} : vector<384x256xf32> to vector<32x256xf32>
    %45 = arith.truncf %44 : vector<32x256xf32> to vector<32x256xbf16>
    %46 = vector.extract_strided_slice %3 {offsets = [320, 0], sizes = [32, 256], strides = [1, 1]} : vector<384x256xf32> to vector<32x256xf32>
    %47 = arith.truncf %46 : vector<32x256xf32> to vector<32x256xbf16>
    %cst_12 = arith.constant dense<0.000000e+00> : vector<256x256xf32>
    %48 = tpu.matmul %45, %43, %cst_12 {dimension_numbers = #tpu.dot_dimension_numbers<[0], [0], [1], [1], [0, 1, 1, 1], [], []>} : vector<32x256xbf16>, vector<32x256xbf16>, vector<256x256xf32> -> vector<256x256xf32>
    %cst_13 = arith.constant dense<0xFF800000> : vector<256xf32>
    %49 = vector.multi_reduction <maximumf>, %48, %cst_13 [0] : vector<256x256xf32> to vector<256xf32>
    %50 = vector.shape_cast %49 : vector<256xf32> to vector<1x256xf32>
    %51 = vector.broadcast %50 : vector<1x256xf32> to vector<256x256xf32>
    %52 = arith.subf %48, %51 : vector<256x256xf32>
    %53 = math.exp %52 : vector<256x256xf32>
    %cst_14 = arith.constant dense<0.000000e+00> : vector<256xf32>
    %54 = vector.multi_reduction <add>, %53, %cst_14 [0] : vector<256x256xf32> to vector<256xf32>
    %55 = vector.shape_cast %54 : vector<256xf32> to vector<1x256xf32>
    %56 = arith.truncf %53 : vector<256x256xf32> to vector<256x256xbf16>
    %cst_15 = arith.constant dense<0.000000e+00> : vector<32x256xf32>
    %57 = tpu.matmul %47, %56, %cst_15 {dimension_numbers = #tpu.dot_dimension_numbers<[1], [0], [0], [1], [0, 0, 1, 1], [], []>} : vector<32x256xbf16>, vector<256x256xbf16>, vector<32x256xf32> -> vector<32x256xf32>
    %58 = tpu.reciprocal %55 {approx = true} : vector<1x256xf32> -> vector<1x256xf32>
    %59 = vector.broadcast %58 : vector<1x256xf32> to vector<32x256xf32>
    %60 = arith.mulf %57, %59 : vector<32x256xf32>
    %61 = vector.extract_strided_slice %3 {offsets = [96, 0], sizes = [32, 256], strides = [1, 1]} : vector<384x256xf32> to vector<32x256xf32>
    %62 = arith.truncf %61 : vector<32x256xf32> to vector<32x256xbf16>
    %63 = vector.extract_strided_slice %3 {offsets = [224, 0], sizes = [32, 256], strides = [1, 1]} : vector<384x256xf32> to vector<32x256xf32>
    %64 = arith.truncf %63 : vector<32x256xf32> to vector<32x256xbf16>
    %65 = vector.extract_strided_slice %3 {offsets = [352, 0], sizes = [32, 256], strides = [1, 1]} : vector<384x256xf32> to vector<32x256xf32>
    %66 = arith.truncf %65 : vector<32x256xf32> to vector<32x256xbf16>
    %cst_16 = arith.constant dense<0.000000e+00> : vector<256x256xf32>
    %67 = tpu.matmul %64, %62, %cst_16 {dimension_numbers = #tpu.dot_dimension_numbers<[0], [0], [1], [1], [0, 1, 1, 1], [], []>} : vector<32x256xbf16>, vector<32x256xbf16>, vector<256x256xf32> -> vector<256x256xf32>
    %cst_17 = arith.constant dense<0xFF800000> : vector<256xf32>
    %68 = vector.multi_reduction <maximumf>, %67, %cst_17 [0] : vector<256x256xf32> to vector<256xf32>
    %69 = vector.shape_cast %68 : vector<256xf32> to vector<1x256xf32>
    %70 = vector.broadcast %69 : vector<1x256xf32> to vector<256x256xf32>
    %71 = arith.subf %67, %70 : vector<256x256xf32>
    %72 = math.exp %71 : vector<256x256xf32>
    %cst_18 = arith.constant dense<0.000000e+00> : vector<256xf32>
    %73 = vector.multi_reduction <add>, %72, %cst_18 [0] : vector<256x256xf32> to vector<256xf32>
    %74 = vector.shape_cast %73 : vector<256xf32> to vector<1x256xf32>
    %75 = arith.truncf %72 : vector<256x256xf32> to vector<256x256xbf16>
    %cst_19 = arith.constant dense<0.000000e+00> : vector<32x256xf32>
    %76 = tpu.matmul %66, %75, %cst_19 {dimension_numbers = #tpu.dot_dimension_numbers<[1], [0], [0], [1], [0, 0, 1, 1], [], []>} : vector<32x256xbf16>, vector<256x256xbf16>, vector<32x256xf32> -> vector<32x256xf32>
    %77 = tpu.reciprocal %74 {approx = true} : vector<1x256xf32> -> vector<1x256xf32>
    %78 = vector.broadcast %77 : vector<1x256xf32> to vector<32x256xf32>
    %79 = arith.mulf %76, %78 : vector<32x256xf32>
    %80 = tpu.concatenate %22, %41, %60, %79 in 0 : vector<32x256xf32>, vector<32x256xf32>, vector<32x256xf32>, vector<32x256xf32> -> vector<128x256xf32>
    %c0_20 = arith.constant 0 : index
    %c0_21 = arith.constant 0 : index
    %81 = vector.load %arg3[%c0_20, %c0_21] : memref<4x128xf32, #tpu.memory_space<vmem>>, vector<4x128xf32>
    %c0_22 = arith.constant 0 : index
    %c0_23 = arith.constant 0 : index
    %82 = vector.load %arg4[%c0_22, %c0_23] : memref<4x1xf32, #tpu.memory_space<vmem>>, vector<4x1xf32>
    %cst_24 = arith.constant dense<0.000000e+00> : vector<4x256xf32>
    %83 = tpu.matmul %81, %80, %cst_24 {dimension_numbers = #tpu.dot_dimension_numbers<[1], [0], [0], [1], [0, 0, 1, 1], [], []>} : vector<4x128xf32>, vector<128x256xf32>, vector<4x256xf32> -> vector<4x256xf32>
    %84 = vector.broadcast %82 : vector<4x1xf32> to vector<4x256xf32>
    %85 = arith.addf %83, %84 : vector<4x256xf32>
    %c0_25 = arith.constant 0 : index
    %c0_26 = arith.constant 0 : index
    %c0_27 = arith.constant 0 : index
    %86 = vector.load %arg5[%c0_25, %c0_26, %c0_27] : memref<1x4x256xf32, #tpu.memory_space<vmem>>, vector<1x4x256xf32>
    %87 = vector.shape_cast %86 : vector<1x4x256xf32> to vector<4x256xf32>
    %88 = vector.shape_cast %85 : vector<4x256xf32> to vector<1x4x256xf32>
    tpu.vector_store %arg5[%c0_25, %c0_26, %c0_27], %88 {strides = array<i32>} : memref<1x4x256xf32, #tpu.memory_space<vmem>>, vector<1x4x256xf32>,
    return
  }
  func.func @transform_0(%arg0: i32) -> (i32, i32, i32) {
    %c0_i32 = arith.constant 0 : i32
    %c0_i32_0 = arith.constant 0 : i32
    %c0_i32_1 = arith.constant 0 : i32
    return %arg0, %c0_i32, %c0_i32_0 : i32, i32, i32
  }
  func.func @transform_1(%arg0: i32) -> (i32, i32) {
    %c0_i32 = arith.constant 0 : i32
    %c0_i32_0 = arith.constant 0 : i32
    %c0_i32_1 = arith.constant 0 : i32
    return %c0_i32, %c0_i32_0 : i32, i32
  }
  func.func @transform_2(%arg0: i32) -> (i32, i32) {
    %c0_i32 = arith.constant 0 : i32
    %c0_i32_0 = arith.constant 0 : i32
    %c0_i32_1 = arith.constant 0 : i32
    return %c0_i32, %c0_i32_0 : i32, i32
  }
  func.func @transform_3(%arg0: i32) -> (i32, i32) {
    %c0_i32 = arith.constant 0 : i32
    %c0_i32_0 = arith.constant 0 : i32
    %c0_i32_1 = arith.constant 0 : i32
    return %c0_i32, %c0_i32_0 : i32, i32
  }
  func.func @transform_4(%arg0: i32) -> (i32, i32, i32) {
    %c0_i32 = arith.constant 0 : i32
    %c0_i32_0 = arith.constant 0 : i32
    %c0_i32_1 = arith.constant 0 : i32
    return %arg0, %c0_i32, %c0_i32_0 : i32, i32, i32
  }
}

</mosaic_0001>

<llo_original>
// kernel: tpu_custom_call.1
$region0: #{tpu_custom_call.1}
  #allocation0 [shape = 'u32[]', space=smem, size = 0x4, offset = 0x4, fixed_abs, tag = 'smem constant byte address 0x4 - core index']
  #allocation1 [shape = 'u32[144,128]{1,0:T(1,128)}', space=vmem, size = 0x12000, scoped, tag = 'internal scratch']
  %s0 = inlined_call_operand.vmem [shape: f32[2,4,256], index: 0, kind: input, shape index: {}]
  %s1 = inlined_call_operand.vmem [shape: f32[384,4], index: 1, kind: input, shape index: {}]
  %s2 = inlined_call_operand.vmem [shape: f32[4,128], index: 2, kind: input, shape index: {}]
  %s3 = inlined_call_operand.vmem [shape: f32[4,1], index: 3, kind: input, shape index: {}]
  %s4 = inlined_call_operand.hbm [shape: f32[2,4,256], index: 4, kind: output, shape index: {}]
  %s5 = sld [smem:[#allocation0]]
  $region49: #{tpu_custom_call.1} parent=0
    _
  %s7 = ssub.s32 1, %s5
  %s8 = scalar_select 0, %s7, %s5
  $region1: #{tpu_custom_call.1} parent=0
    #allocation2 [shape = 'u8[8192]{0}', space=vmem, size = 0x2000, scoped, tag = 'output window, operand 0']
    #allocation3 [shape = 's32[2]{0}', space=sflag, size = 0x8, scoped, tag = 'scoped memory for tpu_custom_call.1']
    %9 = vsyncpa [#allocation3], 0
    %s10 = scalar_lea.sflag [#allocation3], 1
    %11 = vsyncpa %s10, 0
    loop: start=0, step=1, limit=4
    $region2: #{tpu_custom_call.1} parent=1 // loop_pre_header
      _
    $region3: #{tpu_custom_call.1} parent=1 // loop_header
      %s13 = sphi 0, %s17
      %p14 = scmp.ge.s32.totalorder %s13, 4
      %s23 = sphi 0, %s25
      %s26 = sphi 0, %s23
      %s27 = sphi 0, %s26
      %s43 = sphi 0, %s27
      %s47 = sphi 0, %s47
      %s49 = sphi 0, %s47
      %s50 = sphi 0, %s49
      %s64 = sphi 0, %s50
      %s68 = sphi 0, %s68
      %s70 = sphi 0, %s68
      %s71 = sphi 0, %s70
      %s85 = sphi 0, %s71
      %s89 = sphi 0, %s89
      %s91 = sphi 0, %s89
      %s92 = sphi 0, %s91
      %s106 = sphi 0, %s92
      %s112 = sphi 0, %s114
      %s115 = sphi 0, %s112
      %s116 = sphi 0, %s115
      %s132 = sphi 0, %s116
    $region4: #{tpu_custom_call.1} parent=1 // loop_header_branch
      %16 = sbr.rel (%p14) target = $region8
    $region5: #{tpu_custom_call.1} parent=1 // loop_body
      %s18 = ssub.s32 %s13, 1
      %s19 = ssub.s32 %s13, 2
      %s20 = sadd.s32 %s13, 1
      %s21 = ssub.s32 %s13, %s20
      %p22 = scmp.eq.s32.totalorder %s21, 0
      %s24 = sadd.s32 %s23, 1
      %s25 = scalar_select %p22, %s23, %s24
      %p28 = pneg %p22
      %p29 = scmp.eq.s32.totalorder %s13, 1
      %p30 = por %p28, %p29
      %p31 = scmp.ne.s32.totalorder %s23, %s26
      %p32 = scmp.eq.s32.totalorder %s13, 0
      %p33 = por %p31, %p32
      %p34 = scmp.ne.s32.totalorder %s23, %s26
      %p35 = scmp.eq.s32.totalorder %s18, 1
      %p36 = por %p34, %p35
      %p37 = scmp.ne.s32.totalorder %s26, %s27
      %p38 = scmp.eq.s32.totalorder %s18, 0
      %p39 = por %p37, %p38
      %p40 = scmp.ne.s32.totalorder %s26, %s27
      %p41 = scmp.eq.s32.totalorder %s19, 1
      %p42 = por %p40, %p41
      %p44 = scmp.ne.s32.totalorder %s27, %s43
      %p45 = scmp.eq.s32.totalorder %s19, 0
      %p46 = por %p44, %p45
      %s48 = sadd.s32 %s47, 1
      %p51 = scmp.eq.s32.totalorder %s13, 1
      %p52 = scmp.ne.s32.totalorder %s47, %s49
      %p53 = scmp.eq.s32.totalorder %s13, 0
      %p54 = por %p52, %p53
      %p55 = scmp.ne.s32.totalorder %s47, %s49
      %p56 = scmp.eq.s32.totalorder %s18, 1
      %p57 = por %p55, %p56
      %p58 = scmp.ne.s32.totalorder %s49, %s50
      %p59 = scmp.eq.s32.totalorder %s18, 0
      %p60 = por %p58, %p59
      %p61 = scmp.ne.s32.totalorder %s49, %s50
      %p62 = scmp.eq.s32.totalorder %s19, 1
      %p63 = por %p61, %p62
      %p65 = scmp.ne.s32.totalorder %s50, %s64
      %p66 = scmp.eq.s32.totalorder %s19, 0
      %p67 = por %p65, %p66
      %s69 = sadd.s32 %s68, 1
      %p72 = scmp.eq.s32.totalorder %s13, 1
      %p73 = scmp.ne.s32.totalorder %s68, %s70
      %p74 = scmp.eq.s32.totalorder %s13, 0
      %p75 = por %p73, %p74
      %p76 = scmp.ne.s32.totalorder %s68, %s70
      %p77 = scmp.eq.s32.totalorder %s18, 1
      %p78 = por %p76, %p77
      %p79 = scmp.ne.s32.totalorder %s70, %s71
      %p80 = scmp.eq.s32.totalorder %s18, 0
      %p81 = por %p79, %p80
      %p82 = scmp.ne.s32.totalorder %s70, %s71
      %p83 = scmp.eq.s32.totalorder %s19, 1
      %p84 = por %p82, %p83
      %p86 = scmp.ne.s32.totalorder %s71, %s85
      %p87 = scmp.eq.s32.totalorder %s19, 0
      %p88 = por %p86, %p87
      %s90 = sadd.s32 %s89, 1
      %p93 = scmp.eq.s32.totalorder %s13, 1
      %p94 = scmp.ne.s32.totalorder %s89, %s91
      %p95 = scmp.eq.s32.totalorder %s13, 0
      %p96 = por %p94, %p95
      %p97 = scmp.ne.s32.totalorder %s89, %s91
      %p98 = scmp.eq.s32.totalorder %s18, 1
      %p99 = por %p97, %p98
      %p100 = scmp.ne.s32.totalorder %s91, %s92
      %p101 = scmp.eq.s32.totalorder %s18, 0
      %p102 = por %p100, %p101
      %p103 = scmp.ne.s32.totalorder %s91, %s92
      %p104 = scmp.eq.s32.totalorder %s19, 1
      %p105 = por %p103, %p104
      %p107 = scmp.ne.s32.totalorder %s92, %s106
      %p108 = scmp.eq.s32.totalorder %s19, 0
      %p109 = por %p107, %p108
      %s110 = ssub.s32 %s13, %s20
      %p111 = scmp.eq.s32.totalorder %s110, 0
      %s113 = sadd.s32 %s112, 1
      %s114 = scalar_select %p111, %s112, %s113
      %p117 = pneg %p111
      %p118 = scmp.eq.s32.totalorder %s13, 1
      %p119 = por %p117, %p118
      %p120 = scmp.ne.s32.totalorder %s112, %s115
      %p121 = scmp.eq.s32.totalorder %s13, 0
      %p122 = por %p120, %p121
      %p123 = scmp.ne.s32.totalorder %s112, %s115
      %p124 = scmp.eq.s32.totalorder %s18, 1
      %p125 = por %p123, %p124
      %p126 = scmp.ne.s32.totalorder %s115, %s116
      %p127 = scmp.eq.s32.totalorder %s18, 0
      %p128 = por %p126, %p127
      %p129 = scmp.ne.s32.totalorder %s115, %s116
      %p130 = scmp.eq.s32.totalorder %s19, 1
      %p131 = por %p129, %p130
      %p133 = scmp.ne.s32.totalorder %s116, %s132
      %p134 = scmp.eq.s32.totalorder %s19, 0
      %p135 = por %p133, %p134
      %p136 = scmp.le.s32.totalorder 1, %s13
      %p137 = scmp.lt.s32.totalorder %s13, 3
      %p138 = pnand %p136, %p137
      %p139 = pneg %p138
      // Predicated region
      $region9: #{tpu_custom_call.1} parent=5 // pred_check
        _
      $region10: #{tpu_custom_call.1} parent=5 // pred_check_branch
        %141 = sbr.rel (%p138) target = $region12
      $region11: #{tpu_custom_call.1} parent=5 // pred_region
        %s142 = ssub.s32 %s13, 1
        // Predicated region
        $region13: #{tpu_custom_call.1} parent=11 // pred_check
          %p143 = pneg %p60
        $region14: #{tpu_custom_call.1} parent=11 // pred_check_branch
          %145 = sbr.rel (%p143) target = $region16
        $region15: #{tpu_custom_call.1} parent=11 // pred_region
          _
        $region16: #{tpu_custom_call.1} parent=11 // pred_fallthru
          _
        // Predicated region
        $region17: #{tpu_custom_call.1} parent=11 // pred_check
          %p146 = pneg %p81
        $region18: #{tpu_custom_call.1} parent=11 // pred_check_branch
          %148 = sbr.rel (%p146) target = $region20
        $region19: #{tpu_custom_call.1} parent=11 // pred_region
          _
        $region20: #{tpu_custom_call.1} parent=11 // pred_fallthru
          _
        // Predicated region
        $region21: #{tpu_custom_call.1} parent=11 // pred_check
          %p149 = pneg %p102
        $region22: #{tpu_custom_call.1} parent=11 // pred_check_branch
          %151 = sbr.rel (%p149) target = $region24
        $region23: #{tpu_custom_call.1} parent=11 // pred_region
          _
        $region24: #{tpu_custom_call.1} parent=11 // pred_fallthru
          _
      $region12: #{tpu_custom_call.1} parent=5 // pred_fallthru
        _
      %p152 = scmp.lt.s32.totalorder %s13, 2
      // Predicated region
      $region25: #{tpu_custom_call.1} parent=5 // pred_check
        %p153 = pneg %p152
      $region26: #{tpu_custom_call.1} parent=5 // pred_check_branch
        %155 = sbr.rel (%p153) target = $region28
      $region27: #{tpu_custom_call.1} parent=5 // pred_region
        // Predicated region
        $region29: #{tpu_custom_call.1} parent=27 // pred_check
          %p156 = pneg %p33
        $region30: #{tpu_custom_call.1} parent=27 // pred_check_branch
          %158 = sbr.rel (%p156) target = $region32
        $region31: #{tpu_custom_call.1} parent=27 // pred_region
          %p159 = scmp.lt.s32.totalorder %s13, 1
          %s160 = scalar_select %p159, %s13, 1
          %s161 = smul.addr %s160, 2
          %s162 = smul.addr %s161, 4
          %s163 = scalar_lea.vmem %s0, %s162
        $region32: #{tpu_custom_call.1} parent=27 // pred_fallthru
          _
      $region28: #{tpu_custom_call.1} parent=5 // pred_fallthru
        _
      %p164 = scmp.le.s32.totalorder 1, %s13
      %p165 = scmp.lt.s32.totalorder %s13, 3
      %p166 = pnand %p164, %p165
      %p167 = pneg %p166
      // Predicated region
      $region33: #{tpu_custom_call.1} parent=5 // pred_check
        _
      $region34: #{tpu_custom_call.1} parent=5 // pred_check_branch
        %169 = sbr.rel (%p166) target = $region36
      $region35: #{tpu_custom_call.1} parent=5 // pred_region
        %s170 = ssub.s32 %s13, 1
        %p171 = scmp.lt.s32.totalorder %s18, 1
        %s172 = scalar_select %p171, %s18, 1
        %s173 = smul.addr %s172, 2
        %s174 = smul.addr %s173, 4
        %s175 = scalar_lea.vmem %s0, %s174
        %p176 = pneg %p39
        %p177 = pneg %p36
        %p178 = pneg %p60
        %p179 = pneg %p57
        %p180 = pneg %p81
        %p181 = pneg %p78
        %p182 = pneg %p102
        %p183 = pneg %p99
        %p184 = pneg %p128
        %p185 = pneg %p125
        %s186 = sand.u32 %s115, 1
        %s187 = scalar_lea.sflag [#allocation3], %s186
        %s188 = sand.u32 %s115, 1
        %s189 = smul.addr %s188, 8
        %s190 = scalar_lea.vmem [#allocation2], %s189
        %p191 = scmp.lt.s32.totalorder %s18, 1
        %s192 = scalar_select %p191, %s18, 1
        %s193 = smul.addr %s192, 2
        %s194 = smul.addr %s193, 4
        %s195 = scalar_lea.vmem %s0, %s194
        %v197 = vld [vmem:[%s195] sm:$0xff]
        %v198 = vld [vmem:[%s1] sm:$0xff]
        %v199 = vld [vmem:[%s1 + $0x8] sm:$0xff]
        %v200 = vld [vmem:[%s1 + $0x10] sm:$0xff]
        %v201 = vld [vmem:[%s1 + $0x18] sm:$0xff]
        %v202 = vld [vmem:[%s1 + $0x20] sm:$0xff]
        %v203 = vld [vmem:[%s1 + $0x28] sm:$0xff]
        %v204 = vld [vmem:[%s1 + $0x30] sm:$0xff]
        %v205 = vld [vmem:[%s1 + $0x38] sm:$0xff]
        %v206 = vld [vmem:[%s1 + $0x40] sm:$0xff]
        %v207 = vld [vmem:[%s1 + $0x48] sm:$0xff]
        %v208 = vld [vmem:[%s1 + $0x50] sm:$0xff]
        %v209 = vld [vmem:[%s1 + $0x58] sm:$0xff]
        %v210 = vld [vmem:[%s1 + $0x60] sm:$0xff]
        %v211 = vld [vmem:[%s1 + $0x68] sm:$0xff]
        %v212 = vld [vmem:[%s1 + $0x70] sm:$0xff]
        %v213 = vld [vmem:[%s1 + $0x78] sm:$0xff]
        %v214 = vld [vmem:[%s1 + $0x80] sm:$0xff]
        %v215 = vld [vmem:[%s1 + $0x88] sm:$0xff]
        %v216 = vld [vmem:[%s1 + $0x90] sm:$0xff]
        %v217 = vld [vmem:[%s1 + $0x98] sm:$0xff]
        %v218 = vld [vmem:[%s1 + $0xa0] sm:$0xff]
        %v219 = vld [vmem:[%s1 + $0xa8] sm:$0xff]
        %v220 = vld [vmem:[%s1 + $0xb0] sm:$0xff]
        %v221 = vld [vmem:[%s1 + $0xb8] sm:$0xff]
        %v222 = vld [vmem:[%s1 + $0xc0] sm:$0xff]
        %v223 = vld [vmem:[%s1 + $0xc8] sm:$0xff]
        %v224 = vld [vmem:[%s1 + $0xd0] sm:$0xff]
        %v225 = vld [vmem:[%s1 + $0xd8] sm:$0xff]
        %v226 = vld [vmem:[%s1 + $0xe0] sm:$0xff]
        %v227 = vld [vmem:[%s1 + $0xe8] sm:$0xff]
        %v228 = vld [vmem:[%s1 + $0xf0] sm:$0xff]
        %v229 = vld [vmem:[%s1 + $0xf8] sm:$0xff]
        %v230 = vld [vmem:[%s1 + $0x100] sm:$0xff]
        %v231 = vld [vmem:[%s1 + $0x108] sm:$0xff]
        %v232 = vld [vmem:[%s1 + $0x110] sm:$0xff]
        %v233 = vld [vmem:[%s1 + $0x118] sm:$0xff]
        %v234 = vld [vmem:[%s1 + $0x120] sm:$0xff]
        %v235 = vld [vmem:[%s1 + $0x128] sm:$0xff]
        %v236 = vld [vmem:[%s1 + $0x130] sm:$0xff]
        %v237 = vld [vmem:[%s1 + $0x138] sm:$0xff]
        %v238 = vld [vmem:[%s1 + $0x140] sm:$0xff]
        %v239 = vld [vmem:[%s1 + $0x148] sm:$0xff]
        %v240 = vld [vmem:[%s1 + $0x150] sm:$0xff]
        %v241 = vld [vmem:[%s1 + $0x158] sm:$0xff]
        %v242 = vld [vmem:[%s1 + $0x160] sm:$0xff]
        %v243 = vld [vmem:[%s1 + $0x168] sm:$0xff]
        %v244 = vld [vmem:[%s1 + $0x170] sm:$0xff]
        %v245 = vld [vmem:[%s1 + $0x178] sm:$0xff]
        %v247 = vcombine.high %v197, %v197
        %vm248 = vcmask 31744
        %v250 = vsel %vm248, %v198, 0
        %v253 = vsel %vm248, %v199, 0
        %v256 = vsel %vm248, %v200, 0
        %v259 = vsel %vm248, %v201, 0
        %v262 = vsel %vm248, %v202, 0
        %v265 = vsel %vm248, %v203, 0
        %v268 = vsel %vm248, %v204, 0
        %v271 = vsel %vm248, %v205, 0
        %v274 = vsel %vm248, %v206, 0
        %v277 = vsel %vm248, %v207, 0
        %v280 = vsel %vm248, %v208, 0
        %v283 = vsel %vm248, %v209, 0
        %v286 = vsel %vm248, %v210, 0
        %v289 = vsel %vm248, %v211, 0
        %v292 = vsel %vm248, %v212, 0
        %v295 = vsel %vm248, %v213, 0
        %v298 = vsel %vm248, %v214, 0
        %v301 = vsel %vm248, %v215, 0
        %v304 = vsel %vm248, %v216, 0
        %v307 = vsel %vm248, %v217, 0
        %v310 = vsel %vm248, %v218, 0
        %v313 = vsel %vm248, %v219, 0
        %v316 = vsel %vm248, %v220, 0
        %v319 = vsel %vm248, %v221, 0
        %v322 = vsel %vm248, %v222, 0
        %v325 = vsel %vm248, %v223, 0
        %v328 = vsel %vm248, %v224, 0
        %v331 = vsel %vm248, %v225, 0
        %v334 = vsel %vm248, %v226, 0
        %v337 = vsel %vm248, %v227, 0
        %v340 = vsel %vm248, %v228, 0
        %v343 = vsel %vm248, %v229, 0
        %v346 = vsel %vm248, %v230, 0
        %v349 = vsel %vm248, %v231, 0
        %v352 = vsel %vm248, %v232, 0
        %v355 = vsel %vm248, %v233, 0
        %v358 = vsel %vm248, %v234, 0
        %v361 = vsel %vm248, %v235, 0
        %v364 = vsel %vm248, %v236, 0
        %v367 = vsel %vm248, %v237, 0
        %v370 = vsel %vm248, %v238, 0
        %v373 = vsel %vm248, %v239, 0
        %v376 = vsel %vm248, %v240, 0
        %v379 = vsel %vm248, %v241, 0
        %v382 = vsel %vm248, %v242, 0
        %v385 = vsel %vm248, %v243, 0
        %v388 = vsel %vm248, %v244, 0
        %v391 = vsel %vm248, %v245, 0
        %vm393 = vcmask 1043456
        %v394 = vsel %vm393, %v197, 0
        %v396 = vsel %vm393, %v247, 0
        %398 = vmatprep.subr.mxu0 0.0
        %399 = vmatpush1.msra.mxu0 0.0
        %400 = vmatprep.subr.mxu0 0.0
        %401 = vmatpush1.msra.mxu0 0.0
        %402 = vmatprep.subr.mxu0 0.0
        %403 = vmatpush1.msra.mxu0 0.0
        %404 = vmatprep.subr.mxu0 0.0
        %405 = vmatpush1.msra.mxu0 0.0
        %406 = vmatprep.subr.mxu0 0.0
        %407 = vmatpush1.msra.mxu0 0.0
        %408 = vmatprep.subr.mxu0 0.0
        %409 = vmatpush1.msra.mxu0 0.0
        %410 = vmatprep.subr.mxu0 0.0
        %411 = vmatpush1.msra.mxu0 0.0
        %412 = vmatprep.subr.mxu0 0.0
        %413 = vmatpush1.msra.mxu0 0.0
        %414 = vmatprep.subr.mxu0 0.0
        %415 = vmatpush1.msra.mxu0 0.0
        %416 = vmatprep.subr.mxu0 0.0
        %417 = vmatpush1.msra.mxu0 0.0
        %418 = vmatprep.subr.mxu0 0.0
        %419 = vmatpush1.msra.mxu0 0.0
        %420 = vmatprep.subr.mxu0 0.0
        %421 = vmatpush1.msra.mxu0 0.0
        %422 = vmatprep.subr.mxu0 0.0
        %423 = vmatpush1.msra.mxu0 0.0
        %424 = vmatprep.subr.mxu0 0.0
        %425 = vmatpush1.msra.mxu0 0.0
        %426 = vmatprep.subr.mxu0 0.0
        %427 = vmatpush1.msra.mxu0 0.0
        %428 = vmatprep.subr.mxu0 %v396
        %429 = vmatpush1.msra.mxu0 %v394
        %430 = vmatprep.subr.mxu0 0.0
        %431 = vmatpush2.msra.mxu0 0.0
        %432 = vmatprep.subr.mxu0 0.0
        %433 = vmatpush2.msra.mxu0 0.0
        %434 = vmatprep.subr.mxu0 0.0
        %435 = vmatpush2.msra.mxu0 0.0
        %436 = vmatprep.subr.mxu0 0.0
        %437 = vmatpush2.msra.mxu0 0.0
        %438 = vmatprep.subr.mxu0 0.0
        %439 = vmatpush2.msra.mxu0 0.0
        %440 = vmatprep.subr.mxu0 0.0
        %441 = vmatpush2.msra.mxu0 0.0
        %442 = vmatprep.subr.mxu0 0.0
        %443 = vmatpush2.msra.mxu0 0.0
        %444 = vmatprep.subr.mxu0 0.0
        %445 = vmatpush2.msra.mxu0 0.0
        %446 = vmatprep.subr.mxu0 0.0
        %447 = vmatpush2.msra.mxu0 0.0
        %448 = vmatprep.subr.mxu0 0.0
        %449 = vmatpush2.msra.mxu0 0.0
        %450 = vmatprep.subr.mxu0 0.0
        %451 = vmatpush2.msra.mxu0 0.0
        %452 = vmatprep.subr.mxu0 0.0
        %453 = vmatpush2.msra.mxu0 0.0
        %454 = vmatprep.subr.mxu0 0.0
        %455 = vmatpush2.msra.mxu0 0.0
        %456 = vmatprep.subr.mxu0 0.0
        %457 = vmatpush2.msra.mxu0 0.0
        %458 = vmatprep.subr.mxu0 0.0
        %459 = vmatpush2.msra.mxu0 0.0
        %460 = vmatprep.subr.mxu0 0.0
        %461 = vmatpush2.msra.mxu0 0.0
        %462 = vmatprep.mubr.f32.mxu0 0.0
        %463 = vmatmul.mubr.f32.gmra.mxu0 %v250
        %v464 = vpop.f32.mrf.mxu0
        %v465 = vadd.f32 0.0, %v464
        %v466 = vpop.f32.mrf.mxu0
        %v467 = vadd.f32 0.0, %v466
        %468 = vmatprep.mubr.f32.mxu0 0.0
        %469 = vmatmul.mubr.f32.gmra.mxu0 %v253
        %v470 = vpop.f32.mrf.mxu0
        %v471 = vadd.f32 0.0, %v470
        %v472 = vpop.f32.mrf.mxu0
        %v473 = vadd.f32 0.0, %v472
        %474 = vmatprep.mubr.f32.mxu0 0.0
        %475 = vmatmul.mubr.f32.gmra.mxu0 %v256
        %v476 = vpop.f32.mrf.mxu0
        %v477 = vadd.f32 0.0, %v476
        %v478 = vpop.f32.mrf.mxu0
        %v479 = vadd.f32 0.0, %v478
        %480 = vmatprep.mubr.f32.mxu0 0.0
        %481 = vmatmul.mubr.f32.gmra.mxu0 %v259
        %v482 = vpop.f32.mrf.mxu0
        %v483 = vadd.f32 0.0, %v482
        %v484 = vpop.f32.mrf.mxu0
        %v485 = vadd.f32 0.0, %v484
        %486 = vmatprep.mubr.f32.mxu0 0.0
        %487 = vmatmul.mubr.f32.gmra.mxu0 %v262
        %v488 = vpop.f32.mrf.mxu0
        %v489 = vadd.f32 0.0, %v488
        %v490 = vpop.f32.mrf.mxu0
        %v491 = vadd.f32 0.0, %v490
        %492 = vmatprep.mubr.f32.mxu0 0.0
        %493 = vmatmul.mubr.f32.gmra.mxu0 %v265
        %v494 = vpop.f32.mrf.mxu0
        %v495 = vadd.f32 0.0, %v494
        %v496 = vpop.f32.mrf.mxu0
        %v497 = vadd.f32 0.0, %v496
        %498 = vmatprep.mubr.f32.mxu0 0.0
        %499 = vmatmul.mubr.f32.gmra.mxu0 %v268
        %v500 = vpop.f32.mrf.mxu0
        %v501 = vadd.f32 0.0, %v500
        %v502 = vpop.f32.mrf.mxu0
        %v503 = vadd.f32 0.0, %v502
        %504 = vmatprep.mubr.f32.mxu0 0.0
        %505 = vmatmul.mubr.f32.gmra.mxu0 %v271
        %v506 = vpop.f32.mrf.mxu0
        %v507 = vadd.f32 0.0, %v506
        %v508 = vpop.f32.mrf.mxu0
        %v509 = vadd.f32 0.0, %v508
        %510 = vmatprep.mubr.f32.mxu0 0.0
        %511 = vmatmul.mubr.f32.gmra.mxu0 %v274
        %v512 = vpop.f32.mrf.mxu0
        %v513 = vadd.f32 0.0, %v512
        %v514 = vpop.f32.mrf.mxu0
        %v515 = vadd.f32 0.0, %v514
        %516 = vmatprep.mubr.f32.mxu0 0.0
        %517 = vmatmul.mubr.f32.gmra.mxu0 %v277
        %v518 = vpop.f32.mrf.mxu0
        %v519 = vadd.f32 0.0, %v518
        %v520 = vpop.f32.mrf.mxu0
        %v521 = vadd.f32 0.0, %v520
        %522 = vmatprep.mubr.f32.mxu0 0.0
        %523 = vmatmul.mubr.f32.gmra.mxu0 %v280
        %v524 = vpop.f32.mrf.mxu0
        %v525 = vadd.f32 0.0, %v524
        %v526 = vpop.f32.mrf.mxu0
        %v527 = vadd.f32 0.0, %v526
        %528 = vmatprep.mubr.f32.mxu0 0.0
        %529 = vmatmul.mubr.f32.gmra.mxu0 %v283
        %v530 = vpop.f32.mrf.mxu0
        %v531 = vadd.f32 0.0, %v530
        %v532 = vpop.f32.mrf.mxu0
        %v533 = vadd.f32 0.0, %v532
        %534 = vmatprep.mubr.f32.mxu0 0.0
        %535 = vmatmul.mubr.f32.gmra.mxu0 %v286
        %v536 = vpop.f32.mrf.mxu0
        %v537 = vadd.f32 0.0, %v536
        %v538 = vpop.f32.mrf.mxu0
        %v539 = vadd.f32 0.0, %v538
        %540 = vmatprep.mubr.f32.mxu0 0.0
        %541 = vmatmul.mubr.f32.gmra.mxu0 %v289
        %v542 = vpop.f32.mrf.mxu0
        %v543 = vadd.f32 0.0, %v542
        %v544 = vpop.f32.mrf.mxu0
        %v545 = vadd.f32 0.0, %v544
        %546 = vmatprep.mubr.f32.mxu0 0.0
        %547 = vmatmul.mubr.f32.gmra.mxu0 %v292
        %v548 = vpop.f32.mrf.mxu0
        %v549 = vadd.f32 0.0, %v548
        %v550 = vpop.f32.mrf.mxu0
        %v551 = vadd.f32 0.0, %v550
        %552 = vmatprep.mubr.f32.mxu0 0.0
        %553 = vmatmul.mubr.f32.gmra.mxu0 %v295
        %v554 = vpop.f32.mrf.mxu0
        %v555 = vadd.f32 0.0, %v554
        %v556 = vpop.f32.mrf.mxu0
        %v557 = vadd.f32 0.0, %v556
        %558 = vmatprep.mubr.f32.mxu0 0.0
        %559 = vmatmul.mubr.f32.gmra.mxu0 %v298
        %v560 = vpop.f32.mrf.mxu0
        %v561 = vadd.f32 0.0, %v560
        %v562 = vpop.f32.mrf.mxu0
        %v563 = vadd.f32 0.0, %v562
        %564 = vmatprep.mubr.f32.mxu0 0.0
        %565 = vmatmul.mubr.f32.gmra.mxu0 %v301
        %v566 = vpop.f32.mrf.mxu0
        %v567 = vadd.f32 0.0, %v566
        %v568 = vpop.f32.mrf.mxu0
        %v569 = vadd.f32 0.0, %v568
        %570 = vmatprep.mubr.f32.mxu0 0.0
        %571 = vmatmul.mubr.f32.gmra.mxu0 %v304
        %v572 = vpop.f32.mrf.mxu0
        %v573 = vadd.f32 0.0, %v572
        %v574 = vpop.f32.mrf.mxu0
        %v575 = vadd.f32 0.0, %v574
        %576 = vmatprep.mubr.f32.mxu0 0.0
        %577 = vmatmul.mubr.f32.gmra.mxu0 %v307
        %v578 = vpop.f32.mrf.mxu0
        %v579 = vadd.f32 0.0, %v578
        %v580 = vpop.f32.mrf.mxu0
        %v581 = vadd.f32 0.0, %v580
        %582 = vmatprep.mubr.f32.mxu0 0.0
        %583 = vmatmul.mubr.f32.gmra.mxu0 %v310
        %v584 = vpop.f32.mrf.mxu0
        %v585 = vadd.f32 0.0, %v584
        %v586 = vpop.f32.mrf.mxu0
        %v587 = vadd.f32 0.0, %v586
        %588 = vmatprep.mubr.f32.mxu0 0.0
        %589 = vmatmul.mubr.f32.gmra.mxu0 %v313
        %v590 = vpop.f32.mrf.mxu0
        %v591 = vadd.f32 0.0, %v590
        %v592 = vpop.f32.mrf.mxu0
        %v593 = vadd.f32 0.0, %v592
        %594 = vmatprep.mubr.f32.mxu0 0.0
        %595 = vmatmul.mubr.f32.gmra.mxu0 %v316
        %v596 = vpop.f32.mrf.mxu0
        %v597 = vadd.f32 0.0, %v596
        %v598 = vpop.f32.mrf.mxu0
        %v599 = vadd.f32 0.0, %v598
        %600 = vmatprep.mubr.f32.mxu0 0.0
        %601 = vmatmul.mubr.f32.gmra.mxu0 %v319
        %v602 = vpop.f32.mrf.mxu0
        %v603 = vadd.f32 0.0, %v602
        %v604 = vpop.f32.mrf.mxu0
        %v605 = vadd.f32 0.0, %v604
        %606 = vmatprep.mubr.f32.mxu0 0.0
        %607 = vmatmul.mubr.f32.gmra.mxu0 %v322
        %v608 = vpop.f32.mrf.mxu0
        %v609 = vadd.f32 0.0, %v608
        %v610 = vpop.f32.mrf.mxu0
        %v611 = vadd.f32 0.0, %v610
        %612 = vmatprep.mubr.f32.mxu0 0.0
        %613 = vmatmul.mubr.f32.gmra.mxu0 %v325
        %v614 = vpop.f32.mrf.mxu0
        %v615 = vadd.f32 0.0, %v614
        %v616 = vpop.f32.mrf.mxu0
        %v617 = vadd.f32 0.0, %v616
        %618 = vmatprep.mubr.f32.mxu0 0.0
        %619 = vmatmul.mubr.f32.gmra.mxu0 %v328
        %v620 = vpop.f32.mrf.mxu0
        %v621 = vadd.f32 0.0, %v620
        %v622 = vpop.f32.mrf.mxu0
        %v623 = vadd.f32 0.0, %v622
        %624 = vmatprep.mubr.f32.mxu0 0.0
        %625 = vmatmul.mubr.f32.gmra.mxu0 %v331
        %v626 = vpop.f32.mrf.mxu0
        %v627 = vadd.f32 0.0, %v626
        %v628 = vpop.f32.mrf.mxu0
        %v629 = vadd.f32 0.0, %v628
        %630 = vmatprep.mubr.f32.mxu0 0.0
        %631 = vmatmul.mubr.f32.gmra.mxu0 %v334
        %v632 = vpop.f32.mrf.mxu0
        %v633 = vadd.f32 0.0, %v632
        %v634 = vpop.f32.mrf.mxu0
        %v635 = vadd.f32 0.0, %v634
        %636 = vmatprep.mubr.f32.mxu0 0.0
        %637 = vmatmul.mubr.f32.gmra.mxu0 %v337
        %v638 = vpop.f32.mrf.mxu0
        %v639 = vadd.f32 0.0, %v638
        %v640 = vpop.f32.mrf.mxu0
        %v641 = vadd.f32 0.0, %v640
        %642 = vmatprep.mubr.f32.mxu0 0.0
        %643 = vmatmul.mubr.f32.gmra.mxu0 %v340
        %v644 = vpop.f32.mrf.mxu0
        %v645 = vadd.f32 0.0, %v644
        %v646 = vpop.f32.mrf.mxu0
        %v647 = vadd.f32 0.0, %v646
        %648 = vmatprep.mubr.f32.mxu0 0.0
        %649 = vmatmul.mubr.f32.gmra.mxu0 %v343
        %v650 = vpop.f32.mrf.mxu0
        %v651 = vadd.f32 0.0, %v650
        %v652 = vpop.f32.mrf.mxu0
        %v653 = vadd.f32 0.0, %v652
        %654 = vmatprep.mubr.f32.mxu0 0.0
        %655 = vmatmul.mubr.f32.gmra.mxu0 %v346
        %v656 = vpop.f32.mrf.mxu0
        %v657 = vadd.f32 0.0, %v656
        %v658 = vpop.f32.mrf.mxu0
        %v659 = vadd.f32 0.0, %v658
        %660 = vmatprep.mubr.f32.mxu0 0.0
        %661 = vmatmul.mubr.f32.gmra.mxu0 %v349
        %v662 = vpop.f32.mrf.mxu0
        %v663 = vadd.f32 0.0, %v662
        %v664 = vpop.f32.mrf.mxu0
        %v665 = vadd.f32 0.0, %v664
        %666 = vmatprep.mubr.f32.mxu0 0.0
        %667 = vmatmul.mubr.f32.gmra.mxu0 %v352
        %v668 = vpop.f32.mrf.mxu0
        %v669 = vadd.f32 0.0, %v668
        %v670 = vpop.f32.mrf.mxu0
        %v671 = vadd.f32 0.0, %v670
        %672 = vmatprep.mubr.f32.mxu0 0.0
        %673 = vmatmul.mubr.f32.gmra.mxu0 %v355
        %v674 = vpop.f32.mrf.mxu0
        %v675 = vadd.f32 0.0, %v674
        %v676 = vpop.f32.mrf.mxu0
        %v677 = vadd.f32 0.0, %v676
        %678 = vmatprep.mubr.f32.mxu0 0.0
        %679 = vmatmul.mubr.f32.gmra.mxu0 %v358
        %v680 = vpop.f32.mrf.mxu0
        %v681 = vadd.f32 0.0, %v680
        %v682 = vpop.f32.mrf.mxu0
        %v683 = vadd.f32 0.0, %v682
        %684 = vmatprep.mubr.f32.mxu0 0.0
        %685 = vmatmul.mubr.f32.gmra.mxu0 %v361
        %v686 = vpop.f32.mrf.mxu0
        %v687 = vadd.f32 0.0, %v686
        %v688 = vpop.f32.mrf.mxu0
        %v689 = vadd.f32 0.0, %v688
        %690 = vmatprep.mubr.f32.mxu0 0.0
        %691 = vmatmul.mubr.f32.gmra.mxu0 %v364
        %v692 = vpop.f32.mrf.mxu0
        %v693 = vadd.f32 0.0, %v692
        %v694 = vpop.f32.mrf.mxu0
        %v695 = vadd.f32 0.0, %v694
        %696 = vmatprep.mubr.f32.mxu0 0.0
        %697 = vmatmul.mubr.f32.gmra.mxu0 %v367
        %v698 = vpop.f32.mrf.mxu0
        %v699 = vadd.f32 0.0, %v698
        %v700 = vpop.f32.mrf.mxu0
        %v701 = vadd.f32 0.0, %v700
        %702 = vmatprep.mubr.f32.mxu0 0.0
        %703 = vmatmul.mubr.f32.gmra.mxu0 %v370
        %v704 = vpop.f32.mrf.mxu0
        %v705 = vadd.f32 0.0, %v704
        %v706 = vpop.f32.mrf.mxu0
        %v707 = vadd.f32 0.0, %v706
        %708 = vmatprep.mubr.f32.mxu0 0.0
        %709 = vmatmul.mubr.f32.gmra.mxu0 %v373
        %v710 = vpop.f32.mrf.mxu0
        %v711 = vadd.f32 0.0, %v710
        %v712 = vpop.f32.mrf.mxu0
        %v713 = vadd.f32 0.0, %v712
        %714 = vmatprep.mubr.f32.mxu0 0.0
        %715 = vmatmul.mubr.f32.gmra.mxu0 %v376
        %v716 = vpop.f32.mrf.mxu0
        %v717 = vadd.f32 0.0, %v716
        %v718 = vpop.f32.mrf.mxu0
        %v719 = vadd.f32 0.0, %v718
        %720 = vmatprep.mubr.f32.mxu0 0.0
        %721 = vmatmul.mubr.f32.gmra.mxu0 %v379
        %v722 = vpop.f32.mrf.mxu0
        %v723 = vadd.f32 0.0, %v722
        %v724 = vpop.f32.mrf.mxu0
        %v725 = vadd.f32 0.0, %v724
        %726 = vmatprep.mubr.f32.mxu0 0.0
        %727 = vmatmul.mubr.f32.gmra.mxu0 %v382
        %v728 = vpop.f32.mrf.mxu0
        %v729 = vadd.f32 0.0, %v728
        %v730 = vpop.f32.mrf.mxu0
        %v731 = vadd.f32 0.0, %v730
        %732 = vmatprep.mubr.f32.mxu0 0.0
        %733 = vmatmul.mubr.f32.gmra.mxu0 %v385
        %v734 = vpop.f32.mrf.mxu0
        %v735 = vadd.f32 0.0, %v734
        %v736 = vpop.f32.mrf.mxu0
        %v737 = vadd.f32 0.0, %v736
        %738 = vmatprep.mubr.f32.mxu0 0.0
        %739 = vmatmul.mubr.f32.gmra.mxu0 %v388
        %v740 = vpop.f32.mrf.mxu0
        %v741 = vadd.f32 0.0, %v740
        %v742 = vpop.f32.mrf.mxu0
        %v743 = vadd.f32 0.0, %v742
        %744 = vmatprep.mubr.f32.mxu0 0.0
        %745 = vmatmul.mubr.f32.gmra.mxu0 %v391
        %v746 = vpop.f32.mrf.mxu0
        %v747 = vadd.f32 0.0, %v746
        %v748 = vpop.f32.mrf.mxu0
        %v749 = vadd.f32 0.0, %v748
        %750 = vdwg.mxu0
        %v751 = vpack.c.bf16 %v471, %v465
        %v752 = vpack.c.bf16 %v473, %v467
        %v753 = vpack.c.bf16 %v483, %v477
        %v754 = vpack.c.bf16 %v485, %v479
        %v755 = vpack.c.bf16 %v567, %v561
        %v756 = vpack.c.bf16 %v569, %v563
        %v757 = vpack.c.bf16 %v579, %v573
        %v758 = vpack.c.bf16 %v581, %v575
        %v759 = vpack.c.bf16 %v663, %v657
        %v760 = vpack.c.bf16 %v665, %v659
        %v761 = vpack.c.bf16 %v675, %v669
        %v762 = vpack.c.bf16 %v677, %v671
        %763 = vxpose.xlu0.c.b16.start [1/8] %v755, 128
        %764 = vxpose.xlu0.c.b16.cont [2/8] %v757, 128
        %765 = vxpose.xlu0.c.b16.cont [3/8] 0, 128
        %766 = vxpose.xlu0.c.b16.cont [4/8] 0, 128
        %767 = vxpose.xlu0.c.b16.cont [5/8] 0, 128
        %768 = vxpose.xlu0.c.b16.cont [6/8] 0, 128
        %769 = vxpose.xlu0.c.b16.cont [7/8] 0, 128
        %770 = vxpose.xlu0.c.b16.end [8/8] 0, 128
        %v771 = vpop.trf.xlu0
        %v772 = vpop.trf.xlu0
        %v773 = vpop.trf.xlu0
        %v774 = vpop.trf.xlu0
        %v775 = vpop.trf.xlu0
        %v776 = vpop.trf.xlu0
        %v777 = vpop.trf.xlu0
        %v778 = vpop.trf.xlu0
        %779 = vxpose.xlu0.c.b16.start [1/8] %v756, 128
        %780 = vxpose.xlu0.c.b16.cont [2/8] %v758, 128
        %781 = vxpose.xlu0.c.b16.cont [3/8] 0, 128
        %782 = vxpose.xlu0.c.b16.cont [4/8] 0, 128
        %783 = vxpose.xlu0.c.b16.cont [5/8] 0, 128
        %784 = vxpose.xlu0.c.b16.cont [6/8] 0, 128
        %785 = vxpose.xlu0.c.b16.cont [7/8] 0, 128
        %786 = vxpose.xlu0.c.b16.end [8/8] 0, 128
        %v787 = vpop.trf.xlu0
        %v788 = vpop.trf.xlu0
        %v789 = vpop.trf.xlu0
        %v790 = vpop.trf.xlu0
        %v791 = vpop.trf.xlu0
        %v792 = vpop.trf.xlu0
        %v793 = vpop.trf.xlu0
        %v794 = vpop.trf.xlu0
        %vm795 = vcmask 261120
        %v797 = vsel %vm795, %v771, 0
        %v800 = vsel %vm795, %v772, 0
        %v803 = vsel %vm795, %v773, 0
        %v806 = vsel %vm795, %v774, 0
        %v809 = vsel %vm795, %v775, 0
        %v812 = vsel %vm795, %v776, 0
        %v815 = vsel %vm795, %v777, 0
        %v818 = vsel %vm795, %v778, 0
        %v821 = vsel %vm795, %v787, 0
        %v824 = vsel %vm795, %v788, 0
        %v827 = vsel %vm795, %v789, 0
        %v830 = vsel %vm795, %v790, 0
        %v833 = vsel %vm795, %v791, 0
        %v836 = vsel %vm795, %v792, 0
        %v839 = vsel %vm795, %v793, 0
        %v842 = vsel %vm795, %v794, 0
        %844 = vmatprep.subr.bf16.mxu0 0
        %845 = vmatpush1.bf16.msra.mxu0 0
        %846 = vmatprep.subr.bf16.mxu0 0
        %847 = vmatpush1.bf16.msra.mxu0 0
        %848 = vmatprep.subr.bf16.mxu0 0
        %849 = vmatpush1.bf16.msra.mxu0 0
        %850 = vmatprep.subr.bf16.mxu0 0
        %851 = vmatpush1.bf16.msra.mxu0 0
        %852 = vmatprep.subr.bf16.mxu0 0
        %853 = vmatpush1.bf16.msra.mxu0 0
        %854 = vmatprep.subr.bf16.mxu0 0
        %855 = vmatpush1.bf16.msra.mxu0 0
        %856 = vmatprep.subr.bf16.mxu0 %v754
        %857 = vmatpush1.bf16.msra.mxu0 %v753
        %858 = vmatprep.subr.bf16.mxu0 %v752
        %859 = vmatpush1.bf16.msra.mxu0 %v751
        %860 = vmatprep.subr.bf16.mxu0 0
        %861 = vmatpush2.bf16.msra.mxu0 0
        %862 = vmatprep.subr.bf16.mxu0 0
        %863 = vmatpush2.bf16.msra.mxu0 0
        %864 = vmatprep.subr.bf16.mxu0 0
        %865 = vmatpush2.bf16.msra.mxu0 0
        %866 = vmatprep.subr.bf16.mxu0 0
        %867 = vmatpush2.bf16.msra.mxu0 0
        %868 = vmatprep.subr.bf16.mxu0 0
        %869 = vmatpush2.bf16.msra.mxu0 0
        %870 = vmatprep.subr.bf16.mxu0 0
        %871 = vmatpush2.bf16.msra.mxu0 0
        %872 = vmatprep.subr.bf16.mxu0 0
        %873 = vmatpush2.bf16.msra.mxu0 0
        %874 = vmatprep.subr.bf16.mxu0 0
        %875 = vmatpush2.bf16.msra.mxu0 0
        %876 = vmatprep.mubr.bf16.mxu0 0
        %877 = vmatmul.mubr.bf16.gmra.mxu0 %v797
        %v878 = vpop.f32.mrf.mxu0
        %v879 = vadd.f32 0.0, %v878
        %v880 = vpop.f32.mrf.mxu0
        %v881 = vadd.f32 0.0, %v880
        %v882 = vpop.f32.mrf.mxu0
        %v883 = vadd.f32 0.0, %v882
        %v884 = vpop.f32.mrf.mxu0
        %v885 = vadd.f32 0.0, %v884
        %886 = vmatprep.mubr.bf16.mxu0 0
        %887 = vmatmul.mubr.bf16.gmra.mxu0 %v800
        %v888 = vpop.f32.mrf.mxu0
        %v889 = vadd.f32 0.0, %v888
        %v890 = vpop.f32.mrf.mxu0
        %v891 = vadd.f32 0.0, %v890
        %v892 = vpop.f32.mrf.mxu0
        %v893 = vadd.f32 0.0, %v892
        %v894 = vpop.f32.mrf.mxu0
        %v895 = vadd.f32 0.0, %v894
        %896 = vmatprep.mubr.bf16.mxu0 0
        %897 = vmatmul.mubr.bf16.gmra.mxu0 %v803
        %v898 = vpop.f32.mrf.mxu0
        %v899 = vadd.f32 0.0, %v898
        %v900 = vpop.f32.mrf.mxu0
        %v901 = vadd.f32 0.0, %v900
        %v902 = vpop.f32.mrf.mxu0
        %v903 = vadd.f32 0.0, %v902
        %v904 = vpop.f32.mrf.mxu0
        %v905 = vadd.f32 0.0, %v904
        %906 = vmatprep.mubr.bf16.mxu0 0
        %907 = vmatmul.mubr.bf16.gmra.mxu0 %v806
        %v908 = vpop.f32.mrf.mxu0
        %v909 = vadd.f32 0.0, %v908
        %v910 = vpop.f32.mrf.mxu0
        %v911 = vadd.f32 0.0, %v910
        %v912 = vpop.f32.mrf.mxu0
        %v913 = vadd.f32 0.0, %v912
        %v914 = vpop.f32.mrf.mxu0
        %v915 = vadd.f32 0.0, %v914
        %916 = vmatprep.mubr.bf16.mxu0 0
        %917 = vmatmul.mubr.bf16.gmra.mxu0 %v809
        %v918 = vpop.f32.mrf.mxu0
        %v919 = vadd.f32 0.0, %v918
        %v920 = vpop.f32.mrf.mxu0
        %v921 = vadd.f32 0.0, %v920
        %v922 = vpop.f32.mrf.mxu0
        %v923 = vadd.f32 0.0, %v922
        %v924 = vpop.f32.mrf.mxu0
        %v925 = vadd.f32 0.0, %v924
        %926 = vmatprep.mubr.bf16.mxu0 0
        %927 = vmatmul.mubr.bf16.gmra.mxu0 %v812
        %v928 = vpop.f32.mrf.mxu0
        %v929 = vadd.f32 0.0, %v928
        %v930 = vpop.f32.mrf.mxu0
        %v931 = vadd.f32 0.0, %v930
        %v932 = vpop.f32.mrf.mxu0
        %v933 = vadd.f32 0.0, %v932
        %v934 = vpop.f32.mrf.mxu0
        %v935 = vadd.f32 0.0, %v934
        %936 = vmatprep.mubr.bf16.mxu0 0
        %937 = vmatmul.mubr.bf16.gmra.mxu0 %v815
        %v938 = vpop.f32.mrf.mxu0
        %v939 = vadd.f32 0.0, %v938
        %v940 = vpop.f32.mrf.mxu0
        %v941 = vadd.f32 0.0, %v940
        %v942 = vpop.f32.mrf.mxu0
        %v943 = vadd.f32 0.0, %v942
        %v944 = vpop.f32.mrf.mxu0
        %v945 = vadd.f32 0.0, %v944
        %946 = vmatprep.mubr.bf16.mxu0 0
        %947 = vmatmul.mubr.bf16.gmra.mxu0 %v818
        %v948 = vpop.f32.mrf.mxu0
        %v949 = vadd.f32 0.0, %v948
        %v950 = vpop.f32.mrf.mxu0
        %v951 = vadd.f32 0.0, %v950
        %v952 = vpop.f32.mrf.mxu0
        %v953 = vadd.f32 0.0, %v952
        %v954 = vpop.f32.mrf.mxu0
        %v955 = vadd.f32 0.0, %v954
        %956 = vmatprep.mubr.bf16.mxu0 0
        %957 = vmatmul.mubr.bf16.gmra.mxu0 %v821
        %v958 = vpop.f32.mrf.mxu0
        %v959 = vadd.f32 0.0, %v958
        %v960 = vpop.f32.mrf.mxu0
        %v961 = vadd.f32 0.0, %v960
        %v962 = vpop.f32.mrf.mxu0
        %v963 = vadd.f32 0.0, %v962
        %v964 = vpop.f32.mrf.mxu0
        %v965 = vadd.f32 0.0, %v964
        %966 = vmatprep.mubr.bf16.mxu0 0
        %967 = vmatmul.mubr.bf16.gmra.mxu0 %v824
        %v968 = vpop.f32.mrf.mxu0
        %v969 = vadd.f32 0.0, %v968
        %v970 = vpop.f32.mrf.mxu0
        %v971 = vadd.f32 0.0, %v970
        %v972 = vpop.f32.mrf.mxu0
        %v973 = vadd.f32 0.0, %v972
        %v974 = vpop.f32.mrf.mxu0
        %v975 = vadd.f32 0.0, %v974
        %976 = vmatprep.mubr.bf16.mxu0 0
        %977 = vmatmul.mubr.bf16.gmra.mxu0 %v827
        %v978 = vpop.f32.mrf.mxu0
        %v979 = vadd.f32 0.0, %v978
        %v980 = vpop.f32.mrf.mxu0
        %v981 = vadd.f32 0.0, %v980
        %v982 = vpop.f32.mrf.mxu0
        %v983 = vadd.f32 0.0, %v982
        %v984 = vpop.f32.mrf.mxu0
        %v985 = vadd.f32 0.0, %v984
        %986 = vmatprep.mubr.bf16.mxu0 0
        %987 = vmatmul.mubr.bf16.gmra.mxu0 %v830
        %v988 = vpop.f32.mrf.mxu0
        %v989 = vadd.f32 0.0, %v988
        %v990 = vpop.f32.mrf.mxu0
        %v991 = vadd.f32 0.0, %v990
        %v992 = vpop.f32.mrf.mxu0
        %v993 = vadd.f32 0.0, %v992
        %v994 = vpop.f32.mrf.mxu0
        %v995 = vadd.f32 0.0, %v994
        %996 = vmatprep.mubr.bf16.mxu0 0
        %997 = vmatmul.mubr.bf16.gmra.mxu0 %v833
        %v998 = vpop.f32.mrf.mxu0
        %v999 = vadd.f32 0.0, %v998
        %v1000 = vpop.f32.mrf.mxu0
        %v1001 = vadd.f32 0.0, %v1000
        %v1002 = vpop.f32.mrf.mxu0
        %v1003 = vadd.f32 0.0, %v1002
        %v1004 = vpop.f32.mrf.mxu0
        %v1005 = vadd.f32 0.0, %v1004
        %1006 = vmatprep.mubr.bf16.mxu0 0
        %1007 = vmatmul.mubr.bf16.gmra.mxu0 %v836
        %v1008 = vpop.f32.mrf.mxu0
        %v1009 = vadd.f32 0.0, %v1008
        %v1010 = vpop.f32.mrf.mxu0
        %v1011 = vadd.f32 0.0, %v1010
        %v1012 = vpop.f32.mrf.mxu0
        %v1013 = vadd.f32 0.0, %v1012
        %v1014 = vpop.f32.mrf.mxu0
        %v1015 = vadd.f32 0.0, %v1014
        %1016 = vmatprep.mubr.bf16.mxu0 0
        %1017 = vmatmul.mubr.bf16.gmra.mxu0 %v839
        %v1018 = vpop.f32.mrf.mxu0
        %v1019 = vadd.f32 0.0, %v1018
        %v1020 = vpop.f32.mrf.mxu0
        %v1021 = vadd.f32 0.0, %v1020
        %v1022 = vpop.f32.mrf.mxu0
        %v1023 = vadd.f32 0.0, %v1022
        %v1024 = vpop.f32.mrf.mxu0
        %v1025 = vadd.f32 0.0, %v1024
        %1026 = vmatprep.mubr.bf16.mxu0 0
        %1027 = vmatmul.mubr.bf16.gmra.mxu0 %v842
        %v1028 = vpop.f32.mrf.mxu0
        %v1029 = vadd.f32 0.0, %v1028
        %v1030 = vpop.f32.mrf.mxu0
        %v1031 = vadd.f32 0.0, %v1030
        %v1032 = vpop.f32.mrf.mxu0
        %v1033 = vadd.f32 0.0, %v1032
        %v1034 = vpop.f32.mrf.mxu0
        %v1035 = vadd.f32 0.0, %v1034
        %1036 = vdwg.mxu0
        %v1037 = vmax.f32 %v879, %v889
        %v1038 = vmax.f32 %v883, %v893
        %v1039 = vmax.f32 %v1037, %v899
        %v1040 = vmax.f32 %v1038, %v903
        %v1041 = vmax.f32 %v1039, %v909
        %v1042 = vmax.f32 %v1040, %v913
        %v1043 = vmax.f32 %v1041, %v919
        %v1044 = vmax.f32 %v1042, %v923
        %v1045 = vmax.f32 %v1043, %v929
        %v1046 = vmax.f32 %v1044, %v933
        %v1047 = vmax.f32 %v1045, %v939
        %v1048 = vmax.f32 %v1046, %v943
        %v1049 = vmax.f32 %v1047, %v949
        %v1050 = vmax.f32 %v1048, %v953
        %v1051 = vmax.f32 %v1049, %v959
        %v1052 = vmax.f32 %v1050, %v963
        %v1053 = vmax.f32 %v1051, %v969
        %v1054 = vmax.f32 %v1052, %v973
        %v1055 = vmax.f32 %v1053, %v979
        %v1056 = vmax.f32 %v1054, %v983
        %v1057 = vmax.f32 %v1055, %v989
        %v1058 = vmax.f32 %v1056, %v993
        %v1059 = vmax.f32 %v1057, %v999
        %v1060 = vmax.f32 %v1058, %v1003
        %v1061 = vmax.f32 %v1059, %v1009
        %v1062 = vmax.f32 %v1060, %v1013
        %v1063 = vmax.f32 %v1061, %v1019
        %v1064 = vmax.f32 %v1062, %v1023
        %v1065 = vmax.f32 %v1063, %v1029
        %v1066 = vmax.f32 %v1064, %v1033
        %v1067 = vmax.f32 %v1065, %v1066
        %v1068 = vrot.slane %v1067, 4
        %v1069 = vmax.f32 %v1067, %v1068
        %v1070 = vrot.slane %v1069, 2
        %v1071 = vmax.f32 %v1069, %v1070
        %v1072 = vrot.slane %v1071, 1
        %v1073 = vmax.f32 %v1071, %v1072
        %v1074 = vmax.f32 %v881, %v891
        %v1075 = vmax.f32 %v885, %v895
        %v1076 = vmax.f32 %v1074, %v901
        %v1077 = vmax.f32 %v1075, %v905
        %v1078 = vmax.f32 %v1076, %v911
        %v1079 = vmax.f32 %v1077, %v915
        %v1080 = vmax.f32 %v1078, %v921
        %v1081 = vmax.f32 %v1079, %v925
        %v1082 = vmax.f32 %v1080, %v931
        %v1083 = vmax.f32 %v1081, %v935
        %v1084 = vmax.f32 %v1082, %v941
        %v1085 = vmax.f32 %v1083, %v945
        %v1086 = vmax.f32 %v1084, %v951
        %v1087 = vmax.f32 %v1085, %v955
        %v1088 = vmax.f32 %v1086, %v961
        %v1089 = vmax.f32 %v1087, %v965
        %v1090 = vmax.f32 %v1088, %v971
        %v1091 = vmax.f32 %v1089, %v975
        %v1092 = vmax.f32 %v1090, %v981
        %v1093 = vmax.f32 %v1091, %v985
        %v1094 = vmax.f32 %v1092, %v991
        %v1095 = vmax.f32 %v1093, %v995
        %v1096 = vmax.f32 %v1094, %v1001
        %v1097 = vmax.f32 %v1095, %v1005
        %v1098 = vmax.f32 %v1096, %v1011
        %v1099 = vmax.f32 %v1097, %v1015
        %v1100 = vmax.f32 %v1098, %v1021
        %v1101 = vmax.f32 %v1099, %v1025
        %v1102 = vmax.f32 %v1100, %v1031
        %v1103 = vmax.f32 %v1101, %v1035
        %v1104 = vmax.f32 %v1102, %v1103
        %v1105 = vrot.slane %v1104, 4
        %v1106 = vmax.f32 %v1104, %v1105
        %v1107 = vrot.slane %v1106, 2
        %v1108 = vmax.f32 %v1106, %v1107
        %v1109 = vrot.slane %v1108, 1
        %v1110 = vmax.f32 %v1108, %v1109
        %v1111 = vsub.f32 %v879, %v1073
        %v1112 = vsub.f32 %v881, %v1110
        %v1113 = vsub.f32 %v883, %v1073
        %v1114 = vsub.f32 %v885, %v1110
        %v1115 = vsub.f32 %v889, %v1073
        %v1116 = vsub.f32 %v891, %v1110
        %v1117 = vsub.f32 %v893, %v1073
        %v1118 = vsub.f32 %v895, %v1110
        %v1119 = vsub.f32 %v899, %v1073
        %v1120 = vsub.f32 %v901, %v1110
        %v1121 = vsub.f32 %v903, %v1073
        %v1122 = vsub.f32 %v905, %v1110
        %v1123 = vsub.f32 %v909, %v1073
        %v1124 = vsub.f32 %v911, %v1110
        %v1125 = vsub.f32 %v913, %v1073
        %v1126 = vsub.f32 %v915, %v1110
        %v1127 = vsub.f32 %v919, %v1073
        %v1128 = vsub.f32 %v921, %v1110
        %v1129 = vsub.f32 %v923, %v1073
        %v1130 = vsub.f32 %v925, %v1110
        %v1131 = vsub.f32 %v929, %v1073
        %v1132 = vsub.f32 %v931, %v1110
        %v1133 = vsub.f32 %v933, %v1073
        %v1134 = vsub.f32 %v935, %v1110
        %v1135 = vsub.f32 %v939, %v1073
        %v1136 = vsub.f32 %v941, %v1110
        %v1137 = vsub.f32 %v943, %v1073
        %v1138 = vsub.f32 %v945, %v1110
        %v1139 = vsub.f32 %v949, %v1073
        %v1140 = vsub.f32 %v951, %v1110
        %v1141 = vsub.f32 %v953, %v1073
        %v1142 = vsub.f32 %v955, %v1110
        %v1143 = vsub.f32 %v959, %v1073
        %v1144 = vsub.f32 %v961, %v1110
        %v1145 = vsub.f32 %v963, %v1073
        %v1146 = vsub.f32 %v965, %v1110
        %v1147 = vsub.f32 %v969, %v1073
        %v1148 = vsub.f32 %v971, %v1110
        %v1149 = vsub.f32 %v973, %v1073
        %v1150 = vsub.f32 %v975, %v1110
        %v1151 = vsub.f32 %v979, %v1073
        %v1152 = vsub.f32 %v981, %v1110
        %v1153 = vsub.f32 %v983, %v1073
        %v1154 = vsub.f32 %v985, %v1110
        %v1155 = vsub.f32 %v989, %v1073
        %v1156 = vsub.f32 %v991, %v1110
        %v1157 = vsub.f32 %v993, %v1073
        %v1158 = vsub.f32 %v995, %v1110
        %v1159 = vsub.f32 %v999, %v1073
        %v1160 = vsub.f32 %v1001, %v1110
        %v1161 = vsub.f32 %v1003, %v1073
        %v1162 = vsub.f32 %v1005, %v1110
        %v1163 = vsub.f32 %v1009, %v1073
        %v1164 = vsub.f32 %v1011, %v1110
        %v1165 = vsub.f32 %v1013, %v1073
        %v1166 = vsub.f32 %v1015, %v1110
        %v1167 = vsub.f32 %v1019, %v1073
        %v1168 = vsub.f32 %v1021, %v1110
        %v1169 = vsub.f32 %v1023, %v1073
        %v1170 = vsub.f32 %v1025, %v1110
        %v1171 = vsub.f32 %v1029, %v1073
        %v1172 = vsub.f32 %v1031, %v1110
        %v1173 = vsub.f32 %v1033, %v1073
        %v1174 = vsub.f32 %v1035, %v1110
        %v1175 = vmul.f32 %v1111, 1.442695
        %v1176 = vpow.pop %v1175
        %v1177 = vmul.f32 %v1112, 1.442695
        %v1178 = vpow.pop %v1177
        %v1179 = vmul.f32 %v1113, 1.442695
        %v1180 = vpow.pop %v1179
        %v1181 = vmul.f32 %v1114, 1.442695
        %v1182 = vpow.pop %v1181
        %v1183 = vmul.f32 %v1115, 1.442695
        %v1184 = vpow.pop %v1183
        %v1185 = vmul.f32 %v1116, 1.442695
        %v1186 = vpow.pop %v1185
        %v1187 = vmul.f32 %v1117, 1.442695
        %v1188 = vpow.pop %v1187
        %v1189 = vmul.f32 %v1118, 1.442695
        %v1190 = vpow.pop %v1189
        %v1191 = vmul.f32 %v1119, 1.442695
        %v1192 = vpow.pop %v1191
        %v1193 = vmul.f32 %v1120, 1.442695
        %v1194 = vpow.pop %v1193
        %v1195 = vmul.f32 %v1121, 1.442695
        %v1196 = vpow.pop %v1195
        %v1197 = vmul.f32 %v1122, 1.442695
        %v1198 = vpow.pop %v1197
        %v1199 = vmul.f32 %v1123, 1.442695
        %v1200 = vpow.pop %v1199
        %v1201 = vmul.f32 %v1124, 1.442695
        %v1202 = vpow.pop %v1201
        %v1203 = vmul.f32 %v1125, 1.442695
        %v1204 = vpow.pop %v1203
        %v1205 = vmul.f32 %v1126, 1.442695
        %v1206 = vpow.pop %v1205
        %v1207 = vmul.f32 %v1127, 1.442695
        %v1208 = vpow.pop %v1207
        %v1209 = vmul.f32 %v1128, 1.442695
        %v1210 = vpow.pop %v1209
        %v1211 = vmul.f32 %v1129, 1.442695
        %v1212 = vpow.pop %v1211
        %v1213 = vmul.f32 %v1130, 1.442695
        %v1214 = vpow.pop %v1213
        %v1215 = vmul.f32 %v1131, 1.442695
        %v1216 = vpow.pop %v1215
        %v1217 = vmul.f32 %v1132, 1.442695
        %v1218 = vpow.pop %v1217
        %v1219 = vmul.f32 %v1133, 1.442695
        %v1220 = vpow.pop %v1219
        %v1221 = vmul.f32 %v1134, 1.442695
        %v1222 = vpow.pop %v1221
        %v1223 = vmul.f32 %v1135, 1.442695
        %v1224 = vpow.pop %v1223
        %v1225 = vmul.f32 %v1136, 1.442695
        %v1226 = vpow.pop %v1225
        %v1227 = vmul.f32 %v1137, 1.442695
        %v1228 = vpow.pop %v1227
        %v1229 = vmul.f32 %v1138, 1.442695
        %v1230 = vpow.pop %v1229
        %v1231 = vmul.f32 %v1139, 1.442695
        %v1232 = vpow.pop %v1231
        %v1233 = vmul.f32 %v1140, 1.442695
        %v1234 = vpow.pop %v1233
        %v1235 = vmul.f32 %v1141, 1.442695
        %v1236 = vpow.pop %v1235
        %v1237 = vmul.f32 %v1142, 1.442695
        %v1238 = vpow.pop %v1237
        %v1239 = vmul.f32 %v1143, 1.442695
        %v1240 = vpow.pop %v1239
        %v1241 = vmul.f32 %v1144, 1.442695
        %v1242 = vpow.pop %v1241
        %v1243 = vmul.f32 %v1145, 1.442695
        %v1244 = vpow.pop %v1243
        %v1245 = vmul.f32 %v1146, 1.442695
        %v1246 = vpow.pop %v1245
        %v1247 = vmul.f32 %v1147, 1.442695
        %v1248 = vpow.pop %v1247
        %v1249 = vmul.f32 %v1148, 1.442695
        %v1250 = vpow.pop %v1249
        %v1251 = vmul.f32 %v1149, 1.442695
        %v1252 = vpow.pop %v1251
        %v1253 = vmul.f32 %v1150, 1.442695
        %v1254 = vpow.pop %v1253
        %v1255 = vmul.f32 %v1151, 1.442695
        %v1256 = vpow.pop %v1255
        %v1257 = vmul.f32 %v1152, 1.442695
        %v1258 = vpow.pop %v1257
        %v1259 = vmul.f32 %v1153, 1.442695
        %v1260 = vpow.pop %v1259
        %v1261 = vmul.f32 %v1154, 1.442695
        %v1262 = vpow.pop %v1261
        %v1263 = vmul.f32 %v1155, 1.442695
        %v1264 = vpow.pop %v1263
        %v1265 = vmul.f32 %v1156, 1.442695
        %v1266 = vpow.pop %v1265
        %v1267 = vmul.f32 %v1157, 1.442695
        %v1268 = vpow.pop %v1267
        %v1269 = vmul.f32 %v1158, 1.442695
        %v1270 = vpow.pop %v1269
        %v1271 = vmul.f32 %v1159, 1.442695
        %v1272 = vpow.pop %v1271
        %v1273 = vmul.f32 %v1160, 1.442695
        %v1274 = vpow.pop %v1273
        %v1275 = vmul.f32 %v1161, 1.442695
        %v1276 = vpow.pop %v1275
        %v1277 = vmul.f32 %v1162, 1.442695
        %v1278 = vpow.pop %v1277
        %v1279 = vmul.f32 %v1163, 1.442695
        %v1280 = vpow.pop %v1279
        %v1281 = vmul.f32 %v1164, 1.442695
        %v1282 = vpow.pop %v1281
        %v1283 = vmul.f32 %v1165, 1.442695
        %v1284 = vpow.pop %v1283
        %v1285 = vmul.f32 %v1166, 1.442695
        %v1286 = vpow.pop %v1285
        %v1287 = vmul.f32 %v1167, 1.442695
        %v1288 = vpow.pop %v1287
        %v1289 = vmul.f32 %v1168, 1.442695
        %v1290 = vpow.pop %v1289
        %v1291 = vmul.f32 %v1169, 1.442695
        %v1292 = vpow.pop %v1291
        %v1293 = vmul.f32 %v1170, 1.442695
        %v1294 = vpow.pop %v1293
        %v1295 = vmul.f32 %v1171, 1.442695
        %v1296 = vpow.pop %v1295
        %v1297 = vmul.f32 %v1172, 1.442695
        %v1298 = vpow.pop %v1297
        %v1299 = vmul.f32 %v1173, 1.442695
        %v1300 = vpow.pop %v1299
        %v1301 = vmul.f32 %v1174, 1.442695
        %v1302 = vpow.pop %v1301
        %v1303 = vadd.f32 %v1176, %v1180
        %v1304 = vadd.f32 %v1303, %v1184
        %v1305 = vadd.f32 %v1304, %v1188
        %v1306 = vadd.f32 %v1305, %v1192
        %v1307 = vadd.f32 %v1306, %v1196
        %v1308 = vadd.f32 %v1307, %v1200
        %v1309 = vadd.f32 %v1308, %v1204
        %v1310 = vadd.f32 %v1309, %v1208
        %v1311 = vadd.f32 %v1310, %v1212
        %v1312 = vadd.f32 %v1311, %v1216
        %v1313 = vadd.f32 %v1312, %v1220
        %v1314 = vadd.f32 %v1313, %v1224
        %v1315 = vadd.f32 %v1314, %v1228
        %v1316 = vadd.f32 %v1315, %v1232
        %v1317 = vadd.f32 %v1316, %v1236
        %v1318 = vadd.f32 %v1317, %v1240
        %v1319 = vadd.f32 %v1318, %v1244
        %v1320 = vadd.f32 %v1319, %v1248
        %v1321 = vadd.f32 %v1320, %v1252
        %v1322 = vadd.f32 %v1321, %v1256
        %v1323 = vadd.f32 %v1322, %v1260
        %v1324 = vadd.f32 %v1323, %v1264
        %v1325 = vadd.f32 %v1324, %v1268
        %v1326 = vadd.f32 %v1325, %v1272
        %v1327 = vadd.f32 %v1326, %v1276
        %v1328 = vadd.f32 %v1327, %v1280
        %v1329 = vadd.f32 %v1328, %v1284
        %v1330 = vadd.f32 %v1329, %v1288
        %v1331 = vadd.f32 %v1330, %v1292
        %v1332 = vadd.f32 %v1331, %v1296
        %v1333 = vadd.f32 %v1332, %v1300
        %v1334 = vrot.slane %v1333, 4
        %v1335 = vadd.f32 %v1333, %v1334
        %v1336 = vrot.slane %v1335, 2
        %v1337 = vadd.f32 %v1335, %v1336
        %v1338 = vrot.slane %v1337, 1
        %v1339 = vadd.f32 %v1337, %v1338
        %v1340 = vadd.f32 %v1178, %v1182
        %v1341 = vadd.f32 %v1340, %v1186
        %v1342 = vadd.f32 %v1341, %v1190
        %v1343 = vadd.f32 %v1342, %v1194
        %v1344 = vadd.f32 %v1343, %v1198
        %v1345 = vadd.f32 %v1344, %v1202
        %v1346 = vadd.f32 %v1345, %v1206
        %v1347 = vadd.f32 %v1346, %v1210
        %v1348 = vadd.f32 %v1347, %v1214
        %v1349 = vadd.f32 %v1348, %v1218
        %v1350 = vadd.f32 %v1349, %v1222
        %v1351 = vadd.f32 %v1350, %v1226
        %v1352 = vadd.f32 %v1351, %v1230
        %v1353 = vadd.f32 %v1352, %v1234
        %v1354 = vadd.f32 %v1353, %v1238
        %v1355 = vadd.f32 %v1354, %v1242
        %v1356 = vadd.f32 %v1355, %v1246
        %v1357 = vadd.f32 %v1356, %v1250
        %v1358 = vadd.f32 %v1357, %v1254
        %v1359 = vadd.f32 %v1358, %v1258
        %v1360 = vadd.f32 %v1359, %v1262
        %v1361 = vadd.f32 %v1360, %v1266
        %v1362 = vadd.f32 %v1361, %v1270
        %v1363 = vadd.f32 %v1362, %v1274
        %v1364 = vadd.f32 %v1363, %v1278
        %v1365 = vadd.f32 %v1364, %v1282
        %v1366 = vadd.f32 %v1365, %v1286
        %v1367 = vadd.f32 %v1366, %v1290
        %v1368 = vadd.f32 %v1367, %v1294
        %v1369 = vadd.f32 %v1368, %v1298
        %v1370 = vadd.f32 %v1369, %v1302
        %v1371 = vrot.slane %v1370, 4
        %v1372 = vadd.f32 %v1370, %v1371
        %v1373 = vrot.slane %v1372, 2
        %v1374 = vadd.f32 %v1372, %v1373
        %v1375 = vrot.slane %v1374, 1
        %v1376 = vadd.f32 %v1374, %v1375
        %v1377 = vpack.c.bf16 %v1180, %v1176
        %v1378 = vpack.c.bf16 %v1182, %v1178
        %v1379 = vpack.c.bf16 %v1188, %v1184
        %v1380 = vpack.c.bf16 %v1190, %v1186
        %v1381 = vpack.c.bf16 %v1196, %v1192
        %v1382 = vpack.c.bf16 %v1198, %v1194
        %v1383 = vpack.c.bf16 %v1204, %v1200
        %v1384 = vpack.c.bf16 %v1206, %v1202
        %v1385 = vpack.c.bf16 %v1212, %v1208
        %v1386 = vpack.c.bf16 %v1214, %v1210
        %v1387 = vpack.c.bf16 %v1220, %v1216
        %v1388 = vpack.c.bf16 %v1222, %v1218
        %v1389 = vpack.c.bf16 %v1228, %v1224
        %v1390 = vpack.c.bf16 %v1230, %v1226
        %v1391 = vpack.c.bf16 %v1236, %v1232
        %v1392 = vpack.c.bf16 %v1238, %v1234
        %v1393 = vpack.c.bf16 %v1244, %v1240
        %v1394 = vpack.c.bf16 %v1246, %v1242
        %v1395 = vpack.c.bf16 %v1252, %v1248
        %v1396 = vpack.c.bf16 %v1254, %v1250
        %v1397 = vpack.c.bf16 %v1260, %v1256
        %v1398 = vpack.c.bf16 %v1262, %v1258
        %v1399 = vpack.c.bf16 %v1268, %v1264
        %v1400 = vpack.c.bf16 %v1270, %v1266
        %v1401 = vpack.c.bf16 %v1276, %v1272
        %v1402 = vpack.c.bf16 %v1278, %v1274
        %v1403 = vpack.c.bf16 %v1284, %v1280
        %v1404 = vpack.c.bf16 %v1286, %v1282
        %v1405 = vpack.c.bf16 %v1292, %v1288
        %v1406 = vpack.c.bf16 %v1294, %v1290
        %v1407 = vpack.c.bf16 %v1300, %v1296
        %v1408 = vpack.c.bf16 %v1302, %v1298
        %1409 = vmatprep.subr.bf16.mxu0 %v1392
        %1410 = vmatpush1.bf16.msra.mxu0 %v1391
        %1411 = vmatprep.subr.bf16.mxu0 %v1390
        %1412 = vmatpush1.bf16.msra.mxu0 %v1389
        %1413 = vmatprep.subr.bf16.mxu0 %v1388
        %1414 = vmatpush1.bf16.msra.mxu0 %v1387
        %1415 = vmatprep.subr.bf16.mxu0 %v1386
        %1416 = vmatpush1.bf16.msra.mxu0 %v1385
        %1417 = vmatprep.subr.bf16.mxu0 %v1384
        %1418 = vmatpush1.bf16.msra.mxu0 %v1383
        %1419 = vmatprep.subr.bf16.mxu0 %v1382
        %1420 = vmatpush1.bf16.msra.mxu0 %v1381
        %1421 = vmatprep.subr.bf16.mxu0 %v1380
        %1422 = vmatpush1.bf16.msra.mxu0 %v1379
        %1423 = vmatprep.subr.bf16.mxu0 %v1378
        %1424 = vmatpush1.bf16.msra.mxu0 %v1377
        %1425 = vmatprep.subr.bf16.mxu0 %v1408
        %1426 = vmatpush2.bf16.msra.mxu0 %v1407
        %1427 = vmatprep.subr.bf16.mxu0 %v1406
        %1428 = vmatpush2.bf16.msra.mxu0 %v1405
        %1429 = vmatprep.subr.bf16.mxu0 %v1404
        %1430 = vmatpush2.bf16.msra.mxu0 %v1403
        %1431 = vmatprep.subr.bf16.mxu0 %v1402
        %1432 = vmatpush2.bf16.msra.mxu0 %v1401
        %1433 = vmatprep.subr.bf16.mxu0 %v1400
        %1434 = vmatpush2.bf16.msra.mxu0 %v1399
        %1435 = vmatprep.subr.bf16.mxu0 %v1398
        %1436 = vmatpush2.bf16.msra.mxu0 %v1397
        %1437 = vmatprep.subr.bf16.mxu0 %v1396
        %1438 = vmatpush2.bf16.msra.mxu0 %v1395
        %1439 = vmatprep.subr.bf16.mxu0 %v1394
        %1440 = vmatpush2.bf16.msra.mxu0 %v1393
        %1441 = vmatprep.mubr.bf16.mxu0 %v760
        %1442 = vmatmul.mubr.bf16.gmra.mxu0 %v759
        %v1443 = vpop.f32.mrf.mxu0
        %v1444 = vadd.f32 0.0, %v1443
        %v1445 = vpop.f32.mrf.mxu0
        %v1446 = vadd.f32 0.0, %v1445
        %v1447 = vpop.f32.mrf.mxu0
        %v1448 = vadd.f32 0.0, %v1447
        %v1449 = vpop.f32.mrf.mxu0
        %v1450 = vadd.f32 0.0, %v1449
        %1451 = vmatprep.mubr.bf16.mxu0 %v762
        %1452 = vmatmul.mubr.bf16.gmra.mxu0 %v761
        %v1453 = vpop.f32.mrf.mxu0
        %v1454 = vadd.f32 0.0, %v1453
        %v1455 = vpop.f32.mrf.mxu0
        %v1456 = vadd.f32 0.0, %v1455
        %v1457 = vpop.f32.mrf.mxu0
        %v1458 = vadd.f32 0.0, %v1457
        %v1459 = vpop.f32.mrf.mxu0
        %v1460 = vadd.f32 0.0, %v1459
        %1461 = vdwg.mxu0
        %v1462 = vrcp.pop %v1339
        %v1463 = vrcp.pop %v1376
        %v1464 = vmul.f32 %v1444, %v1462
        %v1465 = vmul.f32 %v1446, %v1463
        %v1466 = vmul.f32 %v1448, %v1462
        %v1467 = vmul.f32 %v1450, %v1463
        %v1468 = vmul.f32 %v1454, %v1462
        %v1469 = vmul.f32 %v1456, %v1463
        %v1470 = vmul.f32 %v1458, %v1462
        %v1471 = vmul.f32 %v1460, %v1463
        %v1472 = vpack.c.bf16 %v495, %v489
        %v1473 = vpack.c.bf16 %v497, %v491
        %v1474 = vpack.c.bf16 %v507, %v501
        %v1475 = vpack.c.bf16 %v509, %v503
        %v1476 = vpack.c.bf16 %v591, %v585
        %v1477 = vpack.c.bf16 %v593, %v587
        %v1478 = vpack.c.bf16 %v603, %v597
        %v1479 = vpack.c.bf16 %v605, %v599
        %v1480 = vpack.c.bf16 %v687, %v681
        %v1481 = vpack.c.bf16 %v689, %v683
        %v1482 = vpack.c.bf16 %v699, %v693
        %v1483 = vpack.c.bf16 %v701, %v695
        %1484 = vxpose.xlu0.c.b16.start [1/8] %v1476, 128
        %1485 = vxpose.xlu0.c.b16.cont [2/8] %v1478, 128
        %1486 = vxpose.xlu0.c.b16.cont [3/8] 0, 128
        %1487 = vxpose.xlu0.c.b16.cont [4/8] 0, 128
        %1488 = vxpose.xlu0.c.b16.cont [5/8] 0, 128
        %1489 = vxpose.xlu0.c.b16.cont [6/8] 0, 128
        %1490 = vxpose.xlu0.c.b16.cont [7/8] 0, 128
        %1491 = vxpose.xlu0.c.b16.end [8/8] 0, 128
        %v1492 = vpop.trf.xlu0
        %v1493 = vpop.trf.xlu0
        %v1494 = vpop.trf.xlu0
        %v1495 = vpop.trf.xlu0
        %v1496 = vpop.trf.xlu0
        %v1497 = vpop.trf.xlu0
        %v1498 = vpop.trf.xlu0
        %v1499 = vpop.trf.xlu0
        %1500 = vxpose.xlu0.c.b16.start [1/8] %v1477, 128
        %1501 = vxpose.xlu0.c.b16.cont [2/8] %v1479, 128
        %1502 = vxpose.xlu0.c.b16.cont [3/8] 0, 128
        %1503 = vxpose.xlu0.c.b16.cont [4/8] 0, 128
        %1504 = vxpose.xlu0.c.b16.cont [5/8] 0, 128
        %1505 = vxpose.xlu0.c.b16.cont [6/8] 0, 128
        %1506 = vxpose.xlu0.c.b16.cont [7/8] 0, 128
        %1507 = vxpose.xlu0.c.b16.end [8/8] 0, 128
        %v1508 = vpop.trf.xlu0
        %v1509 = vpop.trf.xlu0
        %v1510 = vpop.trf.xlu0
        %v1511 = vpop.trf.xlu0
        %v1512 = vpop.trf.xlu0
        %v1513 = vpop.trf.xlu0
        %v1514 = vpop.trf.xlu0
        %v1515 = vpop.trf.xlu0
        %v1517 = vsel %vm795, %v1492, 0
        %v1520 = vsel %vm795, %v1493, 0
        %v1523 = vsel %vm795, %v1494, 0
        %v1526 = vsel %vm795, %v1495, 0
        %v1529 = vsel %vm795, %v1496, 0
        %v1532 = vsel %vm795, %v1497, 0
        %v1535 = vsel %vm795, %v1498, 0
        %v1538 = vsel %vm795, %v1499, 0
        %v1541 = vsel %vm795, %v1508, 0
        %v1544 = vsel %vm795, %v1509, 0
        %v1547 = vsel %vm795, %v1510, 0
        %v1550 = vsel %vm795, %v1511, 0
        %v1553 = vsel %vm795, %v1512, 0
        %v1556 = vsel %vm795, %v1513, 0
        %v1559 = vsel %vm795, %v1514, 0
        %v1562 = vsel %vm795, %v1515, 0
        %1564 = vmatprep.subr.bf16.mxu0 0
        %1565 = vmatpush1.bf16.msra.mxu0 0
        %1566 = vmatprep.subr.bf16.mxu0 0
        %1567 = vmatpush1.bf16.msra.mxu0 0
        %1568 = vmatprep.subr.bf16.mxu0 0
        %1569 = vmatpush1.bf16.msra.mxu0 0
        %1570 = vmatprep.subr.bf16.mxu0 0
        %1571 = vmatpush1.bf16.msra.mxu0 0
        %1572 = vmatprep.subr.bf16.mxu0 0
        %1573 = vmatpush1.bf16.msra.mxu0 0
        %1574 = vmatprep.subr.bf16.mxu0 0
        %1575 = vmatpush1.bf16.msra.mxu0 0
        %1576 = vmatprep.subr.bf16.mxu0 %v1475
        %1577 = vmatpush1.bf16.msra.mxu0 %v1474
        %1578 = vmatprep.subr.bf16.mxu0 %v1473
        %1579 = vmatpush1.bf16.msra.mxu0 %v1472
        %1580 = vmatprep.subr.bf16.mxu0 0
        %1581 = vmatpush2.bf16.msra.mxu0 0
        %1582 = vmatprep.subr.bf16.mxu0 0
        %1583 = vmatpush2.bf16.msra.mxu0 0
        %1584 = vmatprep.subr.bf16.mxu0 0
        %1585 = vmatpush2.bf16.msra.mxu0 0
        %1586 = vmatprep.subr.bf16.mxu0 0
        %1587 = vmatpush2.bf16.msra.mxu0 0
        %1588 = vmatprep.subr.bf16.mxu0 0
        %1589 = vmatpush2.bf16.msra.mxu0 0
        %1590 = vmatprep.subr.bf16.mxu0 0
        %1591 = vmatpush2.bf16.msra.mxu0 0
        %1592 = vmatprep.subr.bf16.mxu0 0
        %1593 = vmatpush2.bf16.msra.mxu0 0
        %1594 = vmatprep.subr.bf16.mxu0 0
        %1595 = vmatpush2.bf16.msra.mxu0 0
        %1596 = vmatprep.mubr.bf16.mxu0 0
        %1597 = vmatmul.mubr.bf16.gmra.mxu0 %v1517
        %v1598 = vpop.f32.mrf.mxu0
        %v1599 = vadd.f32 0.0, %v1598
        %v1600 = vpop.f32.mrf.mxu0
        %v1601 = vadd.f32 0.0, %v1600
        %v1602 = vpop.f32.mrf.mxu0
        %v1603 = vadd.f32 0.0, %v1602
        %v1604 = vpop.f32.mrf.mxu0
        %v1605 = vadd.f32 0.0, %v1604
        %1606 = vmatprep.mubr.bf16.mxu0 0
        %1607 = vmatmul.mubr.bf16.gmra.mxu0 %v1520
        %v1608 = vpop.f32.mrf.mxu0
        %v1609 = vadd.f32 0.0, %v1608
        %v1610 = vpop.f32.mrf.mxu0
        %v1611 = vadd.f32 0.0, %v1610
        %v1612 = vpop.f32.mrf.mxu0
        %v1613 = vadd.f32 0.0, %v1612
        %v1614 = vpop.f32.mrf.mxu0
        %v1615 = vadd.f32 0.0, %v1614
        %1616 = vmatprep.mubr.bf16.mxu0 0
        %1617 = vmatmul.mubr.bf16.gmra.mxu0 %v1523
        %v1618 = vpop.f32.mrf.mxu0
        %v1619 = vadd.f32 0.0, %v1618
        %v1620 = vpop.f32.mrf.mxu0
        %v1621 = vadd.f32 0.0, %v1620
        %v1622 = vpop.f32.mrf.mxu0
        %v1623 = vadd.f32 0.0, %v1622
        %v1624 = vpop.f32.mrf.mxu0
        %v1625 = vadd.f32 0.0, %v1624
        %1626 = vmatprep.mubr.bf16.mxu0 0
        %1627 = vmatmul.mubr.bf16.gmra.mxu0 %v1526
        %v1628 = vpop.f32.mrf.mxu0
        %v1629 = vadd.f32 0.0, %v1628
        %v1630 = vpop.f32.mrf.mxu0
        %v1631 = vadd.f32 0.0, %v1630
        %v1632 = vpop.f32.mrf.mxu0
        %v1633 = vadd.f32 0.0, %v1632
        %v1634 = vpop.f32.mrf.mxu0
        %v1635 = vadd.f32 0.0, %v1634
        %1636 = vmatprep.mubr.bf16.mxu0 0
        %1637 = vmatmul.mubr.bf16.gmra.mxu0 %v1529
        %v1638 = vpop.f32.mrf.mxu0
        %v1639 = vadd.f32 0.0, %v1638
        %v1640 = vpop.f32.mrf.mxu0
        %v1641 = vadd.f32 0.0, %v1640
        %v1642 = vpop.f32.mrf.mxu0
        %v1643 = vadd.f32 0.0, %v1642
        %v1644 = vpop.f32.mrf.mxu0
        %v1645 = vadd.f32 0.0, %v1644
        %1646 = vmatprep.mubr.bf16.mxu0 0
        %1647 = vmatmul.mubr.bf16.gmra.mxu0 %v1532
        %v1648 = vpop.f32.mrf.mxu0
        %v1649 = vadd.f32 0.0, %v1648
        %v1650 = vpop.f32.mrf.mxu0
        %v1651 = vadd.f32 0.0, %v1650
        %v1652 = vpop.f32.mrf.mxu0
        %v1653 = vadd.f32 0.0, %v1652
        %v1654 = vpop.f32.mrf.mxu0
        %v1655 = vadd.f32 0.0, %v1654
        %1656 = vmatprep.mubr.bf16.mxu0 0
        %1657 = vmatmul.mubr.bf16.gmra.mxu0 %v1535
        %v1658 = vpop.f32.mrf.mxu0
        %v1659 = vadd.f32 0.0, %v1658
        %v1660 = vpop.f32.mrf.mxu0
        %v1661 = vadd.f32 0.0, %v1660
        %v1662 = vpop.f32.mrf.mxu0
        %v1663 = vadd.f32 0.0, %v1662
        %v1664 = vpop.f32.mrf.mxu0
        %v1665 = vadd.f32 0.0, %v1664
        %1666 = vmatprep.mubr.bf16.mxu0 0
        %1667 = vmatmul.mubr.bf16.gmra.mxu0 %v1538
        %v1668 = vpop.f32.mrf.mxu0
        %v1669 = vadd.f32 0.0, %v1668
        %v1670 = vpop.f32.mrf.mxu0
        %v1671 = vadd.f32 0.0, %v1670
        %v1672 = vpop.f32.mrf.mxu0
        %v1673 = vadd.f32 0.0, %v1672
        %v1674 = vpop.f32.mrf.mxu0
        %v1675 = vadd.f32 0.0, %v1674
        %1676 = vmatprep.mubr.bf16.mxu0 0
        %1677 = vmatmul.mubr.bf16.gmra.mxu0 %v1541
        %v1678 = vpop.f32.mrf.mxu0
        %v1679 = vadd.f32 0.0, %v1678
        %v1680 = vpop.f32.mrf.mxu0
        %v1681 = vadd.f32 0.0, %v1680
        %v1682 = vpop.f32.mrf.mxu0
        %v1683 = vadd.f32 0.0, %v1682
        %v1684 = vpop.f32.mrf.mxu0
        %v1685 = vadd.f32 0.0, %v1684
        %1686 = vmatprep.mubr.bf16.mxu0 0
        %1687 = vmatmul.mubr.bf16.gmra.mxu0 %v1544
        %v1688 = vpop.f32.mrf.mxu0
        %v1689 = vadd.f32 0.0, %v1688
        %v1690 = vpop.f32.mrf.mxu0
        %v1691 = vadd.f32 0.0, %v1690
        %v1692 = vpop.f32.mrf.mxu0
        %v1693 = vadd.f32 0.0, %v1692
        %v1694 = vpop.f32.mrf.mxu0
        %v1695 = vadd.f32 0.0, %v1694
        %1696 = vmatprep.mubr.bf16.mxu0 0
        %1697 = vmatmul.mubr.bf16.gmra.mxu0 %v1547
        %v1698 = vpop.f32.mrf.mxu0
        %v1699 = vadd.f32 0.0, %v1698
        %v1700 = vpop.f32.mrf.mxu0
        %v1701 = vadd.f32 0.0, %v1700
        %v1702 = vpop.f32.mrf.mxu0
        %v1703 = vadd.f32 0.0, %v1702
        %v1704 = vpop.f32.mrf.mxu0
        %v1705 = vadd.f32 0.0, %v1704
        %1706 = vmatprep.mubr.bf16.mxu0 0
        %1707 = vmatmul.mubr.bf16.gmra.mxu0 %v1550
        %v1708 = vpop.f32.mrf.mxu0
        %v1709 = vadd.f32 0.0, %v1708
        %v1710 = vpop.f32.mrf.mxu0
        %v1711 = vadd.f32 0.0, %v1710
        %v1712 = vpop.f32.mrf.mxu0
        %v1713 = vadd.f32 0.0, %v1712
        %v1714 = vpop.f32.mrf.mxu0
        %v1715 = vadd.f32 0.0, %v1714
        %1716 = vmatprep.mubr.bf16.mxu0 0
        %1717 = vmatmul.mubr.bf16.gmra.mxu0 %v1553
        %v1718 = vpop.f32.mrf.mxu0
        %v1719 = vadd.f32 0.0, %v1718
        %v1720 = vpop.f32.mrf.mxu0
        %v1721 = vadd.f32 0.0, %v1720
        %v1722 = vpop.f32.mrf.mxu0
        %v1723 = vadd.f32 0.0, %v1722
        %v1724 = vpop.f32.mrf.mxu0
        %v1725 = vadd.f32 0.0, %v1724
        %1726 = vmatprep.mubr.bf16.mxu0 0
        %1727 = vmatmul.mubr.bf16.gmra.mxu0 %v1556
        %v1728 = vpop.f32.mrf.mxu0
        %v1729 = vadd.f32 0.0, %v1728
        %v1730 = vpop.f32.mrf.mxu0
        %v1731 = vadd.f32 0.0, %v1730
        %v1732 = vpop.f32.mrf.mxu0
        %v1733 = vadd.f32 0.0, %v1732
        %v1734 = vpop.f32.mrf.mxu0
        %v1735 = vadd.f32 0.0, %v1734
        %1736 = vmatprep.mubr.bf16.mxu0 0
        %1737 = vmatmul.mubr.bf16.gmra.mxu0 %v1559
        %v1738 = vpop.f32.mrf.mxu0
        %v1739 = vadd.f32 0.0, %v1738
        %v1740 = vpop.f32.mrf.mxu0
        %v1741 = vadd.f32 0.0, %v1740
        %v1742 = vpop.f32.mrf.mxu0
        %v1743 = vadd.f32 0.0, %v1742
        %v1744 = vpop.f32.mrf.mxu0
        %v1745 = vadd.f32 0.0, %v1744
        %1746 = vmatprep.mubr.bf16.mxu0 0
        %1747 = vmatmul.mubr.bf16.gmra.mxu0 %v1562
        %v1748 = vpop.f32.mrf.mxu0
        %v1749 = vadd.f32 0.0, %v1748
        %v1750 = vpop.f32.mrf.mxu0
        %v1751 = vadd.f32 0.0, %v1750
        %v1752 = vpop.f32.mrf.mxu0
        %v1753 = vadd.f32 0.0, %v1752
        %v1754 = vpop.f32.mrf.mxu0
        %v1755 = vadd.f32 0.0, %v1754
        %1756 = vdwg.mxu0
        %v1757 = vmax.f32 %v1599, %v1609
        %v1758 = vmax.f32 %v1603, %v1613
        %v1759 = vmax.f32 %v1757, %v1619
        %v1760 = vmax.f32 %v1758, %v1623
        %v1761 = vmax.f32 %v1759, %v1629
        %v1762 = vmax.f32 %v1760, %v1633
        %v1763 = vmax.f32 %v1761, %v1639
        %v1764 = vmax.f32 %v1762, %v1643
        %v1765 = vmax.f32 %v1763, %v1649
        %v1766 = vmax.f32 %v1764, %v1653
        %v1767 = vmax.f32 %v1765, %v1659
        %v1768 = vmax.f32 %v1766, %v1663
        %v1769 = vmax.f32 %v1767, %v1669
        %v1770 = vmax.f32 %v1768, %v1673
        %v1771 = vmax.f32 %v1769, %v1679
        %v1772 = vmax.f32 %v1770, %v1683
        %v1773 = vmax.f32 %v1771, %v1689
        %v1774 = vmax.f32 %v1772, %v1693
        %v1775 = vmax.f32 %v1773, %v1699
        %v1776 = vmax.f32 %v1774, %v1703
        %v1777 = vmax.f32 %v1775, %v1709
        %v1778 = vmax.f32 %v1776, %v1713
        %v1779 = vmax.f32 %v1777, %v1719
        %v1780 = vmax.f32 %v1778, %v1723
        %v1781 = vmax.f32 %v1779, %v1729
        %v1782 = vmax.f32 %v1780, %v1733
        %v1783 = vmax.f32 %v1781, %v1739
        %v1784 = vmax.f32 %v1782, %v1743
        %v1785 = vmax.f32 %v1783, %v1749
        %v1786 = vmax.f32 %v1784, %v1753
        %v1787 = vmax.f32 %v1785, %v1786
        %v1788 = vrot.slane %v1787, 4
        %v1789 = vmax.f32 %v1787, %v1788
        %v1790 = vrot.slane %v1789, 2
        %v1791 = vmax.f32 %v1789, %v1790
        %v1792 = vrot.slane %v1791, 1
        %v1793 = vmax.f32 %v1791, %v1792
        %v1794 = vmax.f32 %v1601, %v1611
        %v1795 = vmax.f32 %v1605, %v1615
        %v1796 = vmax.f32 %v1794, %v1621
        %v1797 = vmax.f32 %v1795, %v1625
        %v1798 = vmax.f32 %v1796, %v1631
        %v1799 = vmax.f32 %v1797, %v1635
        %v1800 = vmax.f32 %v1798, %v1641
        %v1801 = vmax.f32 %v1799, %v1645
        %v1802 = vmax.f32 %v1800, %v1651
        %v1803 = vmax.f32 %v1801, %v1655
        %v1804 = vmax.f32 %v1802, %v1661
        %v1805 = vmax.f32 %v1803, %v1665
        %v1806 = vmax.f32 %v1804, %v1671
        %v1807 = vmax.f32 %v1805, %v1675
        %v1808 = vmax.f32 %v1806, %v1681
        %v1809 = vmax.f32 %v1807, %v1685
        %v1810 = vmax.f32 %v1808, %v1691
        %v1811 = vmax.f32 %v1809, %v1695
        %v1812 = vmax.f32 %v1810, %v1701
        %v1813 = vmax.f32 %v1811, %v1705
        %v1814 = vmax.f32 %v1812, %v1711
        %v1815 = vmax.f32 %v1813, %v1715
        %v1816 = vmax.f32 %v1814, %v1721
        %v1817 = vmax.f32 %v1815, %v1725
        %v1818 = vmax.f32 %v1816, %v1731
        %v1819 = vmax.f32 %v1817, %v1735
        %v1820 = vmax.f32 %v1818, %v1741
        %v1821 = vmax.f32 %v1819, %v1745
        %v1822 = vmax.f32 %v1820, %v1751
        %v1823 = vmax.f32 %v1821, %v1755
        %v1824 = vmax.f32 %v1822, %v1823
        %v1825 = vrot.slane %v1824, 4
        %v1826 = vmax.f32 %v1824, %v1825
        %v1827 = vrot.slane %v1826, 2
        %v1828 = vmax.f32 %v1826, %v1827
        %v1829 = vrot.slane %v1828, 1
        %v1830 = vmax.f32 %v1828, %v1829
        %v1831 = vsub.f32 %v1599, %v1793
        %v1832 = vsub.f32 %v1601, %v1830
        %v1833 = vsub.f32 %v1603, %v1793
        %v1834 = vsub.f32 %v1605, %v1830
        %v1835 = vsub.f32 %v1609, %v1793
        %v1836 = vsub.f32 %v1611, %v1830
        %v1837 = vsub.f32 %v1613, %v1793
        %v1838 = vsub.f32 %v1615, %v1830
        %v1839 = vsub.f32 %v1619, %v1793
        %v1840 = vsub.f32 %v1621, %v1830
        %v1841 = vsub.f32 %v1623, %v1793
        %v1842 = vsub.f32 %v1625, %v1830
        %v1843 = vsub.f32 %v1629, %v1793
        %v1844 = vsub.f32 %v1631, %v1830
        %v1845 = vsub.f32 %v1633, %v1793
        %v1846 = vsub.f32 %v1635, %v1830
        %v1847 = vsub.f32 %v1639, %v1793
        %v1848 = vsub.f32 %v1641, %v1830
        %v1849 = vsub.f32 %v1643, %v1793
        %v1850 = vsub.f32 %v1645, %v1830
        %v1851 = vsub.f32 %v1649, %v1793
        %v1852 = vsub.f32 %v1651, %v1830
        %v1853 = vsub.f32 %v1653, %v1793
        %v1854 = vsub.f32 %v1655, %v1830
        %v1855 = vsub.f32 %v1659, %v1793
        %v1856 = vsub.f32 %v1661, %v1830
        %v1857 = vsub.f32 %v1663, %v1793
        %v1858 = vsub.f32 %v1665, %v1830
        %v1859 = vsub.f32 %v1669, %v1793
        %v1860 = vsub.f32 %v1671, %v1830
        %v1861 = vsub.f32 %v1673, %v1793
        %v1862 = vsub.f32 %v1675, %v1830
        %v1863 = vsub.f32 %v1679, %v1793
        %v1864 = vsub.f32 %v1681, %v1830
        %v1865 = vsub.f32 %v1683, %v1793
        %v1866 = vsub.f32 %v1685, %v1830
        %v1867 = vsub.f32 %v1689, %v1793
        %v1868 = vsub.f32 %v1691, %v1830
        %v1869 = vsub.f32 %v1693, %v1793
        %v1870 = vsub.f32 %v1695, %v1830
        %v1871 = vsub.f32 %v1699, %v1793
        %v1872 = vsub.f32 %v1701, %v1830
        %v1873 = vsub.f32 %v1703, %v1793
        %v1874 = vsub.f32 %v1705, %v1830
        %v1875 = vsub.f32 %v1709, %v1793
        %v1876 = vsub.f32 %v1711, %v1830
        %v1877 = vsub.f32 %v1713, %v1793
        %v1878 = vsub.f32 %v1715, %v1830
        %v1879 = vsub.f32 %v1719, %v1793
        %v1880 = vsub.f32 %v1721, %v1830
        %v1881 = vsub.f32 %v1723, %v1793
        %v1882 = vsub.f32 %v1725, %v1830
        %v1883 = vsub.f32 %v1729, %v1793
        %v1884 = vsub.f32 %v1731, %v1830
        %v1885 = vsub.f32 %v1733, %v1793
        %v1886 = vsub.f32 %v1735, %v1830
        %v1887 = vsub.f32 %v1739, %v1793
        %v1888 = vsub.f32 %v1741, %v1830
        %v1889 = vsub.f32 %v1743, %v1793
        %v1890 = vsub.f32 %v1745, %v1830
        %v1891 = vsub.f32 %v1749, %v1793
        %v1892 = vsub.f32 %v1751, %v1830
        %v1893 = vsub.f32 %v1753, %v1793
        %v1894 = vsub.f32 %v1755, %v1830
        %v1895 = vmul.f32 %v1831, 1.442695
        %v1896 = vpow.pop %v1895
        %v1897 = vmul.f32 %v1832, 1.442695
        %v1898 = vpow.pop %v1897
        %v1899 = vmul.f32 %v1833, 1.442695
        %v1900 = vpow.pop %v1899
        %v1901 = vmul.f32 %v1834, 1.442695
        %v1902 = vpow.pop %v1901
        %v1903 = vmul.f32 %v1835, 1.442695
        %v1904 = vpow.pop %v1903
        %v1905 = vmul.f32 %v1836, 1.442695
        %v1906 = vpow.pop %v1905
        %v1907 = vmul.f32 %v1837, 1.442695
        %v1908 = vpow.pop %v1907
        %v1909 = vmul.f32 %v1838, 1.442695
        %v1910 = vpow.pop %v1909
        %v1911 = vmul.f32 %v1839, 1.442695
        %v1912 = vpow.pop %v1911
        %v1913 = vmul.f32 %v1840, 1.442695
        %v1914 = vpow.pop %v1913
        %v1915 = vmul.f32 %v1841, 1.442695
        %v1916 = vpow.pop %v1915
        %v1917 = vmul.f32 %v1842, 1.442695
        %v1918 = vpow.pop %v1917
        %v1919 = vmul.f32 %v1843, 1.442695
        %v1920 = vpow.pop %v1919
        %v1921 = vmul.f32 %v1844, 1.442695
        %v1922 = vpow.pop %v1921
        %v1923 = vmul.f32 %v1845, 1.442695
        %v1924 = vpow.pop %v1923
        %v1925 = vmul.f32 %v1846, 1.442695
        %v1926 = vpow.pop %v1925
        %v1927 = vmul.f32 %v1847, 1.442695
        %v1928 = vpow.pop %v1927
        %v1929 = vmul.f32 %v1848, 1.442695
        %v1930 = vpow.pop %v1929
        %v1931 = vmul.f32 %v1849, 1.442695
        %v1932 = vpow.pop %v1931
        %v1933 = vmul.f32 %v1850, 1.442695
        %v1934 = vpow.pop %v1933
        %v1935 = vmul.f32 %v1851, 1.442695
        %v1936 = vpow.pop %v1935
        %v1937 = vmul.f32 %v1852, 1.442695
        %v1938 = vpow.pop %v1937
        %v1939 = vmul.f32 %v1853, 1.442695
        %v1940 = vpow.pop %v1939
        %v1941 = vmul.f32 %v1854, 1.442695
        %v1942 = vpow.pop %v1941
        %v1943 = vmul.f32 %v1855, 1.442695
        %v1944 = vpow.pop %v1943
        %v1945 = vmul.f32 %v1856, 1.442695
        %v1946 = vpow.pop %v1945
        %v1947 = vmul.f32 %v1857, 1.442695
        %v1948 = vpow.pop %v1947
        %v1949 = vmul.f32 %v1858, 1.442695
        %v1950 = vpow.pop %v1949
        %v1951 = vmul.f32 %v1859, 1.442695
        %v1952 = vpow.pop %v1951
        %v1953 = vmul.f32 %v1860, 1.442695
        %v1954 = vpow.pop %v1953
        %v1955 = vmul.f32 %v1861, 1.442695
        %v1956 = vpow.pop %v1955
        %v1957 = vmul.f32 %v1862, 1.442695
        %v1958 = vpow.pop %v1957
        %v1959 = vmul.f32 %v1863, 1.442695
        %v1960 = vpow.pop %v1959
        %v1961 = vmul.f32 %v1864, 1.442695
        %v1962 = vpow.pop %v1961
        %v1963 = vmul.f32 %v1865, 1.442695
        %v1964 = vpow.pop %v1963
        %v1965 = vmul.f32 %v1866, 1.442695
        %v1966 = vpow.pop %v1965
        %v1967 = vmul.f32 %v1867, 1.442695
        %v1968 = vpow.pop %v1967
        %v1969 = vmul.f32 %v1868, 1.442695
        %v1970 = vpow.pop %v1969
        %v1971 = vmul.f32 %v1869, 1.442695
        %v1972 = vpow.pop %v1971
        %v1973 = vmul.f32 %v1870, 1.442695
        %v1974 = vpow.pop %v1973
        %v1975 = vmul.f32 %v1871, 1.442695
        %v1976 = vpow.pop %v1975
        %v1977 = vmul.f32 %v1872, 1.442695
        %v1978 = vpow.pop %v1977
        %v1979 = vmul.f32 %v1873, 1.442695
        %v1980 = vpow.pop %v1979
        %v1981 = vmul.f32 %v1874, 1.442695
        %v1982 = vpow.pop %v1981
        %v1983 = vmul.f32 %v1875, 1.442695
        %v1984 = vpow.pop %v1983
        %v1985 = vmul.f32 %v1876, 1.442695
        %v1986 = vpow.pop %v1985
        %v1987 = vmul.f32 %v1877, 1.442695
        %v1988 = vpow.pop %v1987
        %v1989 = vmul.f32 %v1878, 1.442695
        %v1990 = vpow.pop %v1989
        %v1991 = vmul.f32 %v1879, 1.442695
        %v1992 = vpow.pop %v1991
        %v1993 = vmul.f32 %v1880, 1.442695
        %v1994 = vpow.pop %v1993
        %v1995 = vmul.f32 %v1881, 1.442695
        %v1996 = vpow.pop %v1995
        %v1997 = vmul.f32 %v1882, 1.442695
        %v1998 = vpow.pop %v1997
        %v1999 = vmul.f32 %v1883, 1.442695
        %v2000 = vpow.pop %v1999
        %v2001 = vmul.f32 %v1884, 1.442695
        %v2002 = vpow.pop %v2001
        %v2003 = vmul.f32 %v1885, 1.442695
        %v2004 = vpow.pop %v2003
        %v2005 = vmul.f32 %v1886, 1.442695
        %v2006 = vpow.pop %v2005
        %v2007 = vmul.f32 %v1887, 1.442695
        %v2008 = vpow.pop %v2007
        %v2009 = vmul.f32 %v1888, 1.442695
        %v2010 = vpow.pop %v2009
        %v2011 = vmul.f32 %v1889, 1.442695
        %v2012 = vpow.pop %v2011
        %v2013 = vmul.f32 %v1890, 1.442695
        %v2014 = vpow.pop %v2013
        %v2015 = vmul.f32 %v1891, 1.442695
        %v2016 = vpow.pop %v2015
        %v2017 = vmul.f32 %v1892, 1.442695
        %v2018 = vpow.pop %v2017
        %v2019 = vmul.f32 %v1893, 1.442695
        %v2020 = vpow.pop %v2019
        %v2021 = vmul.f32 %v1894, 1.442695
        %v2022 = vpow.pop %v2021
        %v2023 = vadd.f32 %v1896, %v1900
        %v2024 = vadd.f32 %v2023, %v1904
        %v2025 = vadd.f32 %v2024, %v1908
        %v2026 = vadd.f32 %v2025, %v1912
        %v2027 = vadd.f32 %v2026, %v1916
        %v2028 = vadd.f32 %v2027, %v1920
        %v2029 = vadd.f32 %v2028, %v1924
        %v2030 = vadd.f32 %v2029, %v1928
        %v2031 = vadd.f32 %v2030, %v1932
        %v2032 = vadd.f32 %v2031, %v1936
        %v2033 = vadd.f32 %v2032, %v1940
        %v2034 = vadd.f32 %v2033, %v1944
        %v2035 = vadd.f32 %v2034, %v1948
        %v2036 = vadd.f32 %v2035, %v1952
        %v2037 = vadd.f32 %v2036, %v1956
        %v2038 = vadd.f32 %v2037, %v1960
        %v2039 = vadd.f32 %v2038, %v1964
        %v2040 = vadd.f32 %v2039, %v1968
        %v2041 = vadd.f32 %v2040, %v1972
        %v2042 = vadd.f32 %v2041, %v1976
        %v2043 = vadd.f32 %v2042, %v1980
        %v2044 = vadd.f32 %v2043, %v1984
        %v2045 = vadd.f32 %v2044, %v1988
        %v2046 = vadd.f32 %v2045, %v1992
        %v2047 = vadd.f32 %v2046, %v1996
        %v2048 = vadd.f32 %v2047, %v2000
        %v2049 = vadd.f32 %v2048, %v2004
        %v2050 = vadd.f32 %v2049, %v2008
        %v2051 = vadd.f32 %v2050, %v2012
        %v2052 = vadd.f32 %v2051, %v2016
        %v2053 = vadd.f32 %v2052, %v2020
        %v2054 = vrot.slane %v2053, 4
        %v2055 = vadd.f32 %v2053, %v2054
        %v2056 = vrot.slane %v2055, 2
        %v2057 = vadd.f32 %v2055, %v2056
        %v2058 = vrot.slane %v2057, 1
        %v2059 = vadd.f32 %v2057, %v2058
        %v2060 = vadd.f32 %v1898, %v1902
        %v2061 = vadd.f32 %v2060, %v1906
        %v2062 = vadd.f32 %v2061, %v1910
        %v2063 = vadd.f32 %v2062, %v1914
        %v2064 = vadd.f32 %v2063, %v1918
        %v2065 = vadd.f32 %v2064, %v1922
        %v2066 = vadd.f32 %v2065, %v1926
        %v2067 = vadd.f32 %v2066, %v1930
        %v2068 = vadd.f32 %v2067, %v1934
        %v2069 = vadd.f32 %v2068, %v1938
        %v2070 = vadd.f32 %v2069, %v1942
        %v2071 = vadd.f32 %v2070, %v1946
        %v2072 = vadd.f32 %v2071, %v1950
        %v2073 = vadd.f32 %v2072, %v1954
        %v2074 = vadd.f32 %v2073, %v1958
        %v2075 = vadd.f32 %v2074, %v1962
        %v2076 = vadd.f32 %v2075, %v1966
        %v2077 = vadd.f32 %v2076, %v1970
        %v2078 = vadd.f32 %v2077, %v1974
        %v2079 = vadd.f32 %v2078, %v1978
        %v2080 = vadd.f32 %v2079, %v1982
        %v2081 = vadd.f32 %v2080, %v1986
        %v2082 = vadd.f32 %v2081, %v1990
        %v2083 = vadd.f32 %v2082, %v1994
        %v2084 = vadd.f32 %v2083, %v1998
        %v2085 = vadd.f32 %v2084, %v2002
        %v2086 = vadd.f32 %v2085, %v2006
        %v2087 = vadd.f32 %v2086, %v2010
        %v2088 = vadd.f32 %v2087, %v2014
        %v2089 = vadd.f32 %v2088, %v2018
        %v2090 = vadd.f32 %v2089, %v2022
        %v2091 = vrot.slane %v2090, 4
        %v2092 = vadd.f32 %v2090, %v2091
        %v2093 = vrot.slane %v2092, 2
        %v2094 = vadd.f32 %v2092, %v2093
        %v2095 = vrot.slane %v2094, 1
        %v2096 = vadd.f32 %v2094, %v2095
        %v2097 = vpack.c.bf16 %v1900, %v1896
        %v2098 = vpack.c.bf16 %v1902, %v1898
        %v2099 = vpack.c.bf16 %v1908, %v1904
        %v2100 = vpack.c.bf16 %v1910, %v1906
        %v2101 = vpack.c.bf16 %v1916, %v1912
        %v2102 = vpack.c.bf16 %v1918, %v1914
        %v2103 = vpack.c.bf16 %v1924, %v1920
        %v2104 = vpack.c.bf16 %v1926, %v1922
        %v2105 = vpack.c.bf16 %v1932, %v1928
        %v2106 = vpack.c.bf16 %v1934, %v1930
        %v2107 = vpack.c.bf16 %v1940, %v1936
        %v2108 = vpack.c.bf16 %v1942, %v1938
        %v2109 = vpack.c.bf16 %v1948, %v1944
        %v2110 = vpack.c.bf16 %v1950, %v1946
        %v2111 = vpack.c.bf16 %v1956, %v1952
        %v2112 = vpack.c.bf16 %v1958, %v1954
        %v2113 = vpack.c.bf16 %v1964, %v1960
        %v2114 = vpack.c.bf16 %v1966, %v1962
        %v2115 = vpack.c.bf16 %v1972, %v1968
        %v2116 = vpack.c.bf16 %v1974, %v1970
        %v2117 = vpack.c.bf16 %v1980, %v1976
        %v2118 = vpack.c.bf16 %v1982, %v1978
        %v2119 = vpack.c.bf16 %v1988, %v1984
        %v2120 = vpack.c.bf16 %v1990, %v1986
        %v2121 = vpack.c.bf16 %v1996, %v1992
        %v2122 = vpack.c.bf16 %v1998, %v1994
        %v2123 = vpack.c.bf16 %v2004, %v2000
        %v2124 = vpack.c.bf16 %v2006, %v2002
        %v2125 = vpack.c.bf16 %v2012, %v2008
        %v2126 = vpack.c.bf16 %v2014, %v2010
        %v2127 = vpack.c.bf16 %v2020, %v2016
        %v2128 = vpack.c.bf16 %v2022, %v2018
        %2129 = vmatprep.subr.bf16.mxu0 %v2112
        %2130 = vmatpush1.bf16.msra.mxu0 %v2111
        %2131 = vmatprep.subr.bf16.mxu0 %v2110
        %2132 = vmatpush1.bf16.msra.mxu0 %v2109
        %2133 = vmatprep.subr.bf16.mxu0 %v2108
        %2134 = vmatpush1.bf16.msra.mxu0 %v2107
        %2135 = vmatprep.subr.bf16.mxu0 %v2106
        %2136 = vmatpush1.bf16.msra.mxu0 %v2105
        %2137 = vmatprep.subr.bf16.mxu0 %v2104
        %2138 = vmatpush1.bf16.msra.mxu0 %v2103
        %2139 = vmatprep.subr.bf16.mxu0 %v2102
        %2140 = vmatpush1.bf16.msra.mxu0 %v2101
        %2141 = vmatprep.subr.bf16.mxu0 %v2100
        %2142 = vmatpush1.bf16.msra.mxu0 %v2099
        %2143 = vmatprep.subr.bf16.mxu0 %v2098
        %2144 = vmatpush1.bf16.msra.mxu0 %v2097
        %2145 = vmatprep.subr.bf16.mxu0 %v2128
        %2146 = vmatpush2.bf16.msra.mxu0 %v2127
        %2147 = vmatprep.subr.bf16.mxu0 %v2126
        %2148 = vmatpush2.bf16.msra.mxu0 %v2125
        %2149 = vmatprep.subr.bf16.mxu0 %v2124
        %2150 = vmatpush2.bf16.msra.mxu0 %v2123
        %2151 = vmatprep.subr.bf16.mxu0 %v2122
        %2152 = vmatpush2.bf16.msra.mxu0 %v2121
        %2153 = vmatprep.subr.bf16.mxu0 %v2120
        %2154 = vmatpush2.bf16.msra.mxu0 %v2119
        %2155 = vmatprep.subr.bf16.mxu0 %v2118
        %2156 = vmatpush2.bf16.msra.mxu0 %v2117
        %2157 = vmatprep.subr.bf16.mxu0 %v2116
        %2158 = vmatpush2.bf16.msra.mxu0 %v2115
        %2159 = vmatprep.subr.bf16.mxu0 %v2114
        %2160 = vmatpush2.bf16.msra.mxu0 %v2113
        %2161 = vmatprep.mubr.bf16.mxu0 %v1481
        %2162 = vmatmul.mubr.bf16.gmra.mxu0 %v1480
        %v2163 = vpop.f32.mrf.mxu0
        %v2164 = vadd.f32 0.0, %v2163
        %v2165 = vpop.f32.mrf.mxu0
        %v2166 = vadd.f32 0.0, %v2165
        %v2167 = vpop.f32.mrf.mxu0
        %v2168 = vadd.f32 0.0, %v2167
        %v2169 = vpop.f32.mrf.mxu0
        %v2170 = vadd.f32 0.0, %v2169
        %2171 = vmatprep.mubr.bf16.mxu0 %v1483
        %2172 = vmatmul.mubr.bf16.gmra.mxu0 %v1482
        %v2173 = vpop.f32.mrf.mxu0
        %v2174 = vadd.f32 0.0, %v2173
        %v2175 = vpop.f32.mrf.mxu0
        %v2176 = vadd.f32 0.0, %v2175
        %v2177 = vpop.f32.mrf.mxu0
        %v2178 = vadd.f32 0.0, %v2177
        %v2179 = vpop.f32.mrf.mxu0
        %v2180 = vadd.f32 0.0, %v2179
        %2181 = vdwg.mxu0
        %v2182 = vrcp.pop %v2059
        %v2183 = vrcp.pop %v2096
        %v2184 = vmul.f32 %v2164, %v2182
        %v2185 = vmul.f32 %v2166, %v2183
        %v2186 = vmul.f32 %v2168, %v2182
        %v2187 = vmul.f32 %v2170, %v2183
        %v2188 = vmul.f32 %v2174, %v2182
        %v2189 = vmul.f32 %v2176, %v2183
        %v2190 = vmul.f32 %v2178, %v2182
        %v2191 = vmul.f32 %v2180, %v2183
        %v2192 = vpack.c.bf16 %v519, %v513
        %v2193 = vpack.c.bf16 %v521, %v515
        %v2194 = vpack.c.bf16 %v531, %v525
        %v2195 = vpack.c.bf16 %v533, %v527
        %v2196 = vpack.c.bf16 %v615, %v609
        %v2197 = vpack.c.bf16 %v617, %v611
        %v2198 = vpack.c.bf16 %v627, %v621
        %v2199 = vpack.c.bf16 %v629, %v623
        %v2200 = vpack.c.bf16 %v711, %v705
        %v2201 = vpack.c.bf16 %v713, %v707
        %v2202 = vpack.c.bf16 %v723, %v717
        %v2203 = vpack.c.bf16 %v725, %v719
        %2204 = vxpose.xlu0.c.b16.start [1/8] %v2196, 128
        %2205 = vxpose.xlu0.c.b16.cont [2/8] %v2198, 128
        %2206 = vxpose.xlu0.c.b16.cont [3/8] 0, 128
        %2207 = vxpose.xlu0.c.b16.cont [4/8] 0, 128
        %2208 = vxpose.xlu0.c.b16.cont [5/8] 0, 128
        %2209 = vxpose.xlu0.c.b16.cont [6/8] 0, 128
        %2210 = vxpose.xlu0.c.b16.cont [7/8] 0, 128
        %2211 = vxpose.xlu0.c.b16.end [8/8] 0, 128
        %v2212 = vpop.trf.xlu0
        %v2213 = vpop.trf.xlu0
        %v2214 = vpop.trf.xlu0
        %v2215 = vpop.trf.xlu0
        %v2216 = vpop.trf.xlu0
        %v2217 = vpop.trf.xlu0
        %v2218 = vpop.trf.xlu0
        %v2219 = vpop.trf.xlu0
        %2220 = vxpose.xlu0.c.b16.start [1/8] %v2197, 128
        %2221 = vxpose.xlu0.c.b16.cont [2/8] %v2199, 128
        %2222 = vxpose.xlu0.c.b16.cont [3/8] 0, 128
        %2223 = vxpose.xlu0.c.b16.cont [4/8] 0, 128
        %2224 = vxpose.xlu0.c.b16.cont [5/8] 0, 128
        %2225 = vxpose.xlu0.c.b16.cont [6/8] 0, 128
        %2226 = vxpose.xlu0.c.b16.cont [7/8] 0, 128
        %2227 = vxpose.xlu0.c.b16.end [8/8] 0, 128
        %v2228 = vpop.trf.xlu0
        %v2229 = vpop.trf.xlu0
        %v2230 = vpop.trf.xlu0
        %v2231 = vpop.trf.xlu0
        %v2232 = vpop.trf.xlu0
        %v2233 = vpop.trf.xlu0
        %v2234 = vpop.trf.xlu0
        %v2235 = vpop.trf.xlu0
        %v2237 = vsel %vm795, %v2212, 0
        %v2240 = vsel %vm795, %v2213, 0
        %v2243 = vsel %vm795, %v2214, 0
        %v2246 = vsel %vm795, %v2215, 0
        %v2249 = vsel %vm795, %v2216, 0
        %v2252 = vsel %vm795, %v2217, 0
        %v2255 = vsel %vm795, %v2218, 0
        %v2258 = vsel %vm795, %v2219, 0
        %v2261 = vsel %vm795, %v2228, 0
        %v2264 = vsel %vm795, %v2229, 0
        %v2267 = vsel %vm795, %v2230, 0
        %v2270 = vsel %vm795, %v2231, 0
        %v2273 = vsel %vm795, %v2232, 0
        %v2276 = vsel %vm795, %v2233, 0
        %v2279 = vsel %vm795, %v2234, 0
        %v2282 = vsel %vm795, %v2235, 0
        %2284 = vmatprep.subr.bf16.mxu0 0
        %2285 = vmatpush1.bf16.msra.mxu0 0
        %2286 = vmatprep.subr.bf16.mxu0 0
        %2287 = vmatpush1.bf16.msra.mxu0 0
        %2288 = vmatprep.subr.bf16.mxu0 0
        %2289 = vmatpush1.bf16.msra.mxu0 0
        %2290 = vmatprep.subr.bf16.mxu0 0
        %2291 = vmatpush1.bf16.msra.mxu0 0
        %2292 = vmatprep.subr.bf16.mxu0 0
        %2293 = vmatpush1.bf16.msra.mxu0 0
        %2294 = vmatprep.subr.bf16.mxu0 0
        %2295 = vmatpush1.bf16.msra.mxu0 0
        %2296 = vmatprep.subr.bf16.mxu0 %v2195
        %2297 = vmatpush1.bf16.msra.mxu0 %v2194
        %2298 = vmatprep.subr.bf16.mxu0 %v2193
        %2299 = vmatpush1.bf16.msra.mxu0 %v2192
        %2300 = vmatprep.subr.bf16.mxu0 0
        %2301 = vmatpush2.bf16.msra.mxu0 0
        %2302 = vmatprep.subr.bf16.mxu0 0
        %2303 = vmatpush2.bf16.msra.mxu0 0
        %2304 = vmatprep.subr.bf16.mxu0 0
        %2305 = vmatpush2.bf16.msra.mxu0 0
        %2306 = vmatprep.subr.bf16.mxu0 0
        %2307 = vmatpush2.bf16.msra.mxu0 0
        %2308 = vmatprep.subr.bf16.mxu0 0
        %2309 = vmatpush2.bf16.msra.mxu0 0
        %2310 = vmatprep.subr.bf16.mxu0 0
        %2311 = vmatpush2.bf16.msra.mxu0 0
        %2312 = vmatprep.subr.bf16.mxu0 0
        %2313 = vmatpush2.bf16.msra.mxu0 0
        %2314 = vmatprep.subr.bf16.mxu0 0
        %2315 = vmatpush2.bf16.msra.mxu0 0
        %2316 = vmatprep.mubr.bf16.mxu0 0
        %2317 = vmatmul.mubr.bf16.gmra.mxu0 %v2237
        %v2318 = vpop.f32.mrf.mxu0
        %v2319 = vadd.f32 0.0, %v2318
        %v2320 = vpop.f32.mrf.mxu0
        %v2321 = vadd.f32 0.0, %v2320
        %v2322 = vpop.f32.mrf.mxu0
        %v2323 = vadd.f32 0.0, %v2322
        %v2324 = vpop.f32.mrf.mxu0
        %v2325 = vadd.f32 0.0, %v2324
        %2326 = vmatprep.mubr.bf16.mxu0 0
        %2327 = vmatmul.mubr.bf16.gmra.mxu0 %v2240
        %v2328 = vpop.f32.mrf.mxu0
        %v2329 = vadd.f32 0.0, %v2328
        %v2330 = vpop.f32.mrf.mxu0
        %v2331 = vadd.f32 0.0, %v2330
        %v2332 = vpop.f32.mrf.mxu0
        %v2333 = vadd.f32 0.0, %v2332
        %v2334 = vpop.f32.mrf.mxu0
        %v2335 = vadd.f32 0.0, %v2334
        %2336 = vmatprep.mubr.bf16.mxu0 0
        %2337 = vmatmul.mubr.bf16.gmra.mxu0 %v2243
        %v2338 = vpop.f32.mrf.mxu0
        %v2339 = vadd.f32 0.0, %v2338
        %v2340 = vpop.f32.mrf.mxu0
        %v2341 = vadd.f32 0.0, %v2340
        %v2342 = vpop.f32.mrf.mxu0
        %v2343 = vadd.f32 0.0, %v2342
        %v2344 = vpop.f32.mrf.mxu0
        %v2345 = vadd.f32 0.0, %v2344
        %2346 = vmatprep.mubr.bf16.mxu0 0
        %2347 = vmatmul.mubr.bf16.gmra.mxu0 %v2246
        %v2348 = vpop.f32.mrf.mxu0
        %v2349 = vadd.f32 0.0, %v2348
        %v2350 = vpop.f32.mrf.mxu0
        %v2351 = vadd.f32 0.0, %v2350
        %v2352 = vpop.f32.mrf.mxu0
        %v2353 = vadd.f32 0.0, %v2352
        %v2354 = vpop.f32.mrf.mxu0
        %v2355 = vadd.f32 0.0, %v2354
        %2356 = vmatprep.mubr.bf16.mxu0 0
        %2357 = vmatmul.mubr.bf16.gmra.mxu0 %v2249
        %v2358 = vpop.f32.mrf.mxu0
        %v2359 = vadd.f32 0.0, %v2358
        %v2360 = vpop.f32.mrf.mxu0
        %v2361 = vadd.f32 0.0, %v2360
        %v2362 = vpop.f32.mrf.mxu0
        %v2363 = vadd.f32 0.0, %v2362
        %v2364 = vpop.f32.mrf.mxu0
        %v2365 = vadd.f32 0.0, %v2364
        %2366 = vmatprep.mubr.bf16.mxu0 0
        %2367 = vmatmul.mubr.bf16.gmra.mxu0 %v2252
        %v2368 = vpop.f32.mrf.mxu0
        %v2369 = vadd.f32 0.0, %v2368
        %v2370 = vpop.f32.mrf.mxu0
        %v2371 = vadd.f32 0.0, %v2370
        %v2372 = vpop.f32.mrf.mxu0
        %v2373 = vadd.f32 0.0, %v2372
        %v2374 = vpop.f32.mrf.mxu0
        %v2375 = vadd.f32 0.0, %v2374
        %2376 = vmatprep.mubr.bf16.mxu0 0
        %2377 = vmatmul.mubr.bf16.gmra.mxu0 %v2255
        %v2378 = vpop.f32.mrf.mxu0
        %v2379 = vadd.f32 0.0, %v2378
        %v2380 = vpop.f32.mrf.mxu0
        %v2381 = vadd.f32 0.0, %v2380
        %v2382 = vpop.f32.mrf.mxu0
        %v2383 = vadd.f32 0.0, %v2382
        %v2384 = vpop.f32.mrf.mxu0
        %v2385 = vadd.f32 0.0, %v2384
        %2386 = vmatprep.mubr.bf16.mxu0 0
        %2387 = vmatmul.mubr.bf16.gmra.mxu0 %v2258
        %v2388 = vpop.f32.mrf.mxu0
        %v2389 = vadd.f32 0.0, %v2388
        %v2390 = vpop.f32.mrf.mxu0
        %v2391 = vadd.f32 0.0, %v2390
        %v2392 = vpop.f32.mrf.mxu0
        %v2393 = vadd.f32 0.0, %v2392
        %v2394 = vpop.f32.mrf.mxu0
        %v2395 = vadd.f32 0.0, %v2394
        %2396 = vmatprep.mubr.bf16.mxu0 0
        %2397 = vmatmul.mubr.bf16.gmra.mxu0 %v2261
        %v2398 = vpop.f32.mrf.mxu0
        %v2399 = vadd.f32 0.0, %v2398
        %v2400 = vpop.f32.mrf.mxu0
        %v2401 = vadd.f32 0.0, %v2400
        %v2402 = vpop.f32.mrf.mxu0
        %v2403 = vadd.f32 0.0, %v2402
        %v2404 = vpop.f32.mrf.mxu0
        %v2405 = vadd.f32 0.0, %v2404
        %2406 = vmatprep.mubr.bf16.mxu0 0
        %2407 = vmatmul.mubr.bf16.gmra.mxu0 %v2264
        %v2408 = vpop.f32.mrf.mxu0
        %v2409 = vadd.f32 0.0, %v2408
        %v2410 = vpop.f32.mrf.mxu0
        %v2411 = vadd.f32 0.0, %v2410
        %v2412 = vpop.f32.mrf.mxu0
        %v2413 = vadd.f32 0.0, %v2412
        %v2414 = vpop.f32.mrf.mxu0
        %v2415 = vadd.f32 0.0, %v2414
        %2416 = vmatprep.mubr.bf16.mxu0 0
        %2417 = vmatmul.mubr.bf16.gmra.mxu0 %v2267
        %v2418 = vpop.f32.mrf.mxu0
        %v2419 = vadd.f32 0.0, %v2418
        %v2420 = vpop.f32.mrf.mxu0
        %v2421 = vadd.f32 0.0, %v2420
        %v2422 = vpop.f32.mrf.mxu0
        %v2423 = vadd.f32 0.0, %v2422
        %v2424 = vpop.f32.mrf.mxu0
        %v2425 = vadd.f32 0.0, %v2424
        %2426 = vmatprep.mubr.bf16.mxu0 0
        %2427 = vmatmul.mubr.bf16.gmra.mxu0 %v2270
        %v2428 = vpop.f32.mrf.mxu0
        %v2429 = vadd.f32 0.0, %v2428
        %v2430 = vpop.f32.mrf.mxu0
        %v2431 = vadd.f32 0.0, %v2430
        %v2432 = vpop.f32.mrf.mxu0
        %v2433 = vadd.f32 0.0, %v2432
        %v2434 = vpop.f32.mrf.mxu0
        %v2435 = vadd.f32 0.0, %v2434
        %2436 = vmatprep.mubr.bf16.mxu0 0
        %2437 = vmatmul.mubr.bf16.gmra.mxu0 %v2273
        %v2438 = vpop.f32.mrf.mxu0
        %v2439 = vadd.f32 0.0, %v2438
        %v2440 = vpop.f32.mrf.mxu0
        %v2441 = vadd.f32 0.0, %v2440
        %v2442 = vpop.f32.mrf.mxu0
        %v2443 = vadd.f32 0.0, %v2442
        %v2444 = vpop.f32.mrf.mxu0
        %v2445 = vadd.f32 0.0, %v2444
        %2446 = vmatprep.mubr.bf16.mxu0 0
        %2447 = vmatmul.mubr.bf16.gmra.mxu0 %v2276
        %v2448 = vpop.f32.mrf.mxu0
        %v2449 = vadd.f32 0.0, %v2448
        %v2450 = vpop.f32.mrf.mxu0
        %v2451 = vadd.f32 0.0, %v2450
        %v2452 = vpop.f32.mrf.mxu0
        %v2453 = vadd.f32 0.0, %v2452
        %v2454 = vpop.f32.mrf.mxu0
        %v2455 = vadd.f32 0.0, %v2454
        %2456 = vmatprep.mubr.bf16.mxu0 0
        %2457 = vmatmul.mubr.bf16.gmra.mxu0 %v2279
        %v2458 = vpop.f32.mrf.mxu0
        %v2459 = vadd.f32 0.0, %v2458
        %v2460 = vpop.f32.mrf.mxu0
        %v2461 = vadd.f32 0.0, %v2460
        %v2462 = vpop.f32.mrf.mxu0
        %v2463 = vadd.f32 0.0, %v2462
        %v2464 = vpop.f32.mrf.mxu0
        %v2465 = vadd.f32 0.0, %v2464
        %2466 = vmatprep.mubr.bf16.mxu0 0
        %2467 = vmatmul.mubr.bf16.gmra.mxu0 %v2282
        %v2468 = vpop.f32.mrf.mxu0
        %v2469 = vadd.f32 0.0, %v2468
        %v2470 = vpop.f32.mrf.mxu0
        %v2471 = vadd.f32 0.0, %v2470
        %v2472 = vpop.f32.mrf.mxu0
        %v2473 = vadd.f32 0.0, %v2472
        %v2474 = vpop.f32.mrf.mxu0
        %v2475 = vadd.f32 0.0, %v2474
        %2476 = vdwg.mxu0
        %v2477 = vmax.f32 %v2319, %v2329
        %v2478 = vmax.f32 %v2323, %v2333
        %v2479 = vmax.f32 %v2477, %v2339
        %v2480 = vmax.f32 %v2478, %v2343
        %v2481 = vmax.f32 %v2479, %v2349
        %v2482 = vmax.f32 %v2480, %v2353
        %v2483 = vmax.f32 %v2481, %v2359
        %v2484 = vmax.f32 %v2482, %v2363
        %v2485 = vmax.f32 %v2483, %v2369
        %v2486 = vmax.f32 %v2484, %v2373
        %v2487 = vmax.f32 %v2485, %v2379
        %v2488 = vmax.f32 %v2486, %v2383
        %v2489 = vmax.f32 %v2487, %v2389
        %v2490 = vmax.f32 %v2488, %v2393
        %v2491 = vmax.f32 %v2489, %v2399
        %v2492 = vmax.f32 %v2490, %v2403
        %v2493 = vmax.f32 %v2491, %v2409
        %v2494 = vmax.f32 %v2492, %v2413
        %v2495 = vmax.f32 %v2493, %v2419
        %v2496 = vmax.f32 %v2494, %v2423
        %v2497 = vmax.f32 %v2495, %v2429
        %v2498 = vmax.f32 %v2496, %v2433
        %v2499 = vmax.f32 %v2497, %v2439
        %v2500 = vmax.f32 %v2498, %v2443
        %v2501 = vmax.f32 %v2499, %v2449
        %v2502 = vmax.f32 %v2500, %v2453
        %v2503 = vmax.f32 %v2501, %v2459
        %v2504 = vmax.f32 %v2502, %v2463
        %v2505 = vmax.f32 %v2503, %v2469
        %v2506 = vmax.f32 %v2504, %v2473
        %v2507 = vmax.f32 %v2505, %v2506
        %v2508 = vrot.slane %v2507, 4
        %v2509 = vmax.f32 %v2507, %v2508
        %v2510 = vrot.slane %v2509, 2
        %v2511 = vmax.f32 %v2509, %v2510
        %v2512 = vrot.slane %v2511, 1
        %v2513 = vmax.f32 %v2511, %v2512
        %v2514 = vmax.f32 %v2321, %v2331
        %v2515 = vmax.f32 %v2325, %v2335
        %v2516 = vmax.f32 %v2514, %v2341
        %v2517 = vmax.f32 %v2515, %v2345
        %v2518 = vmax.f32 %v2516, %v2351
        %v2519 = vmax.f32 %v2517, %v2355
        %v2520 = vmax.f32 %v2518, %v2361
        %v2521 = vmax.f32 %v2519, %v2365
        %v2522 = vmax.f32 %v2520, %v2371
        %v2523 = vmax.f32 %v2521, %v2375
        %v2524 = vmax.f32 %v2522, %v2381
        %v2525 = vmax.f32 %v2523, %v2385
        %v2526 = vmax.f32 %v2524, %v2391
        %v2527 = vmax.f32 %v2525, %v2395
        %v2528 = vmax.f32 %v2526, %v2401
        %v2529 = vmax.f32 %v2527, %v2405
        %v2530 = vmax.f32 %v2528, %v2411
        %v2531 = vmax.f32 %v2529, %v2415
        %v2532 = vmax.f32 %v2530, %v2421
        %v2533 = vmax.f32 %v2531, %v2425
        %v2534 = vmax.f32 %v2532, %v2431
        %v2535 = vmax.f32 %v2533, %v2435
        %v2536 = vmax.f32 %v2534, %v2441
        %v2537 = vmax.f32 %v2535, %v2445
        %v2538 = vmax.f32 %v2536, %v2451
        %v2539 = vmax.f32 %v2537, %v2455
        %v2540 = vmax.f32 %v2538, %v2461
        %v2541 = vmax.f32 %v2539, %v2465
        %v2542 = vmax.f32 %v2540, %v2471
        %v2543 = vmax.f32 %v2541, %v2475
        %v2544 = vmax.f32 %v2542, %v2543
        %v2545 = vrot.slane %v2544, 4
        %v2546 = vmax.f32 %v2544, %v2545
        %v2547 = vrot.slane %v2546, 2
        %v2548 = vmax.f32 %v2546, %v2547
        %v2549 = vrot.slane %v2548, 1
        %v2550 = vmax.f32 %v2548, %v2549
        %v2551 = vsub.f32 %v2319, %v2513
        %v2552 = vsub.f32 %v2321, %v2550
        %v2553 = vsub.f32 %v2323, %v2513
        %v2554 = vsub.f32 %v2325, %v2550
        %v2555 = vsub.f32 %v2329, %v2513
        %v2556 = vsub.f32 %v2331, %v2550
        %v2557 = vsub.f32 %v2333, %v2513
        %v2558 = vsub.f32 %v2335, %v2550
        %v2559 = vsub.f32 %v2339, %v2513
        %v2560 = vsub.f32 %v2341, %v2550
        %v2561 = vsub.f32 %v2343, %v2513
        %v2562 = vsub.f32 %v2345, %v2550
        %v2563 = vsub.f32 %v2349, %v2513
        %v2564 = vsub.f32 %v2351, %v2550
        %v2565 = vsub.f32 %v2353, %v2513
        %v2566 = vsub.f32 %v2355, %v2550
        %v2567 = vsub.f32 %v2359, %v2513
        %v2568 = vsub.f32 %v2361, %v2550
        %v2569 = vsub.f32 %v2363, %v2513
        %v2570 = vsub.f32 %v2365, %v2550
        %v2571 = vsub.f32 %v2369, %v2513
        %v2572 = vsub.f32 %v2371, %v2550
        %v2573 = vsub.f32 %v2373, %v2513
        %v2574 = vsub.f32 %v2375, %v2550
        %v2575 = vsub.f32 %v2379, %v2513
        %v2576 = vsub.f32 %v2381, %v2550
        %v2577 = vsub.f32 %v2383, %v2513
        %v2578 = vsub.f32 %v2385, %v2550
        %v2579 = vsub.f32 %v2389, %v2513
        %v2580 = vsub.f32 %v2391, %v2550
        %v2581 = vsub.f32 %v2393, %v2513
        %v2582 = vsub.f32 %v2395, %v2550
        %v2583 = vsub.f32 %v2399, %v2513
        %v2584 = vsub.f32 %v2401, %v2550
        %v2585 = vsub.f32 %v2403, %v2513
        %v2586 = vsub.f32 %v2405, %v2550
        %v2587 = vsub.f32 %v2409, %v2513
        %v2588 = vsub.f32 %v2411, %v2550
        %v2589 = vsub.f32 %v2413, %v2513
        %v2590 = vsub.f32 %v2415, %v2550
        %v2591 = vsub.f32 %v2419, %v2513
        %v2592 = vsub.f32 %v2421, %v2550
        %v2593 = vsub.f32 %v2423, %v2513
        %v2594 = vsub.f32 %v2425, %v2550
        %v2595 = vsub.f32 %v2429, %v2513
        %v2596 = vsub.f32 %v2431, %v2550
        %v2597 = vsub.f32 %v2433, %v2513
        %v2598 = vsub.f32 %v2435, %v2550
        %v2599 = vsub.f32 %v2439, %v2513
        %v2600 = vsub.f32 %v2441, %v2550
        %v2601 = vsub.f32 %v2443, %v2513
        %v2602 = vsub.f32 %v2445, %v2550
        %v2603 = vsub.f32 %v2449, %v2513
        %v2604 = vsub.f32 %v2451, %v2550
        %v2605 = vsub.f32 %v2453, %v2513
        %v2606 = vsub.f32 %v2455, %v2550
        %v2607 = vsub.f32 %v2459, %v2513
        %v2608 = vsub.f32 %v2461, %v2550
        %v2609 = vsub.f32 %v2463, %v2513
        %v2610 = vsub.f32 %v2465, %v2550
        %v2611 = vsub.f32 %v2469, %v2513
        %v2612 = vsub.f32 %v2471, %v2550
        %v2613 = vsub.f32 %v2473, %v2513
        %v2614 = vsub.f32 %v2475, %v2550
        %v2615 = vmul.f32 %v2551, 1.442695
        %v2616 = vpow.pop %v2615
        %v2617 = vmul.f32 %v2552, 1.442695
        %v2618 = vpow.pop %v2617
        %v2619 = vmul.f32 %v2553, 1.442695
        %v2620 = vpow.pop %v2619
        %v2621 = vmul.f32 %v2554, 1.442695
        %v2622 = vpow.pop %v2621
        %v2623 = vmul.f32 %v2555, 1.442695
        %v2624 = vpow.pop %v2623
        %v2625 = vmul.f32 %v2556, 1.442695
        %v2626 = vpow.pop %v2625
        %v2627 = vmul.f32 %v2557, 1.442695
        %v2628 = vpow.pop %v2627
        %v2629 = vmul.f32 %v2558, 1.442695
        %v2630 = vpow.pop %v2629
        %v2631 = vmul.f32 %v2559, 1.442695
        %v2632 = vpow.pop %v2631
        %v2633 = vmul.f32 %v2560, 1.442695
        %v2634 = vpow.pop %v2633
        %v2635 = vmul.f32 %v2561, 1.442695
        %v2636 = vpow.pop %v2635
        %v2637 = vmul.f32 %v2562, 1.442695
        %v2638 = vpow.pop %v2637
        %v2639 = vmul.f32 %v2563, 1.442695
        %v2640 = vpow.pop %v2639
        %v2641 = vmul.f32 %v2564, 1.442695
        %v2642 = vpow.pop %v2641
        %v2643 = vmul.f32 %v2565, 1.442695
        %v2644 = vpow.pop %v2643
        %v2645 = vmul.f32 %v2566, 1.442695
        %v2646 = vpow.pop %v2645
        %v2647 = vmul.f32 %v2567, 1.442695
        %v2648 = vpow.pop %v2647
        %v2649 = vmul.f32 %v2568, 1.442695
        %v2650 = vpow.pop %v2649
        %v2651 = vmul.f32 %v2569, 1.442695
        %v2652 = vpow.pop %v2651
        %v2653 = vmul.f32 %v2570, 1.442695
        %v2654 = vpow.pop %v2653
        %v2655 = vmul.f32 %v2571, 1.442695
        %v2656 = vpow.pop %v2655
        %v2657 = vmul.f32 %v2572, 1.442695
        %v2658 = vpow.pop %v2657
        %v2659 = vmul.f32 %v2573, 1.442695
        %v2660 = vpow.pop %v2659
        %v2661 = vmul.f32 %v2574, 1.442695
        %v2662 = vpow.pop %v2661
        %v2663 = vmul.f32 %v2575, 1.442695
        %v2664 = vpow.pop %v2663
        %v2665 = vmul.f32 %v2576, 1.442695
        %v2666 = vpow.pop %v2665
        %v2667 = vmul.f32 %v2577, 1.442695
        %v2668 = vpow.pop %v2667
        %v2669 = vmul.f32 %v2578, 1.442695
        %v2670 = vpow.pop %v2669
        %v2671 = vmul.f32 %v2579, 1.442695
        %v2672 = vpow.pop %v2671
        %v2673 = vmul.f32 %v2580, 1.442695
        %v2674 = vpow.pop %v2673
        %v2675 = vmul.f32 %v2581, 1.442695
        %v2676 = vpow.pop %v2675
        %v2677 = vmul.f32 %v2582, 1.442695
        %v2678 = vpow.pop %v2677
        %v2679 = vmul.f32 %v2583, 1.442695
        %v2680 = vpow.pop %v2679
        %v2681 = vmul.f32 %v2584, 1.442695
        %v2682 = vpow.pop %v2681
        %v2683 = vmul.f32 %v2585, 1.442695
        %v2684 = vpow.pop %v2683
        %v2685 = vmul.f32 %v2586, 1.442695
        %v2686 = vpow.pop %v2685
        %v2687 = vmul.f32 %v2587, 1.442695
        %v2688 = vpow.pop %v2687
        %v2689 = vmul.f32 %v2588, 1.442695
        %v2690 = vpow.pop %v2689
        %v2691 = vmul.f32 %v2589, 1.442695
        %v2692 = vpow.pop %v2691
        %v2693 = vmul.f32 %v2590, 1.442695
        %v2694 = vpow.pop %v2693
        %v2695 = vmul.f32 %v2591, 1.442695
        %v2696 = vpow.pop %v2695
        %v2697 = vmul.f32 %v2592, 1.442695
        %v2698 = vpow.pop %v2697
        %v2699 = vmul.f32 %v2593, 1.442695
        %v2700 = vpow.pop %v2699
        %v2701 = vmul.f32 %v2594, 1.442695
        %v2702 = vpow.pop %v2701
        %v2703 = vmul.f32 %v2595, 1.442695
        %v2704 = vpow.pop %v2703
        %v2705 = vmul.f32 %v2596, 1.442695
        %v2706 = vpow.pop %v2705
        %v2707 = vmul.f32 %v2597, 1.442695
        %v2708 = vpow.pop %v2707
        %v2709 = vmul.f32 %v2598, 1.442695
        %v2710 = vpow.pop %v2709
        %v2711 = vmul.f32 %v2599, 1.442695
        %v2712 = vpow.pop %v2711
        %v2713 = vmul.f32 %v2600, 1.442695
        %v2714 = vpow.pop %v2713
        %v2715 = vmul.f32 %v2601, 1.442695
        %v2716 = vpow.pop %v2715
        %v2717 = vmul.f32 %v2602, 1.442695
        %v2718 = vpow.pop %v2717
        %v2719 = vmul.f32 %v2603, 1.442695
        %v2720 = vpow.pop %v2719
        %v2721 = vmul.f32 %v2604, 1.442695
        %v2722 = vpow.pop %v2721
        %v2723 = vmul.f32 %v2605, 1.442695
        %v2724 = vpow.pop %v2723
        %v2725 = vmul.f32 %v2606, 1.442695
        %v2726 = vpow.pop %v2725
        %v2727 = vmul.f32 %v2607, 1.442695
        %v2728 = vpow.pop %v2727
        %v2729 = vmul.f32 %v2608, 1.442695
        %v2730 = vpow.pop %v2729
        %v2731 = vmul.f32 %v2609, 1.442695
        %v2732 = vpow.pop %v2731
        %v2733 = vmul.f32 %v2610, 1.442695
        %v2734 = vpow.pop %v2733
        %v2735 = vmul.f32 %v2611, 1.442695
        %v2736 = vpow.pop %v2735
        %v2737 = vmul.f32 %v2612, 1.442695
        %v2738 = vpow.pop %v2737
        %v2739 = vmul.f32 %v2613, 1.442695
        %v2740 = vpow.pop %v2739
        %v2741 = vmul.f32 %v2614, 1.442695
        %v2742 = vpow.pop %v2741
        %v2743 = vadd.f32 %v2616, %v2620
        %v2744 = vadd.f32 %v2743, %v2624
        %v2745 = vadd.f32 %v2744, %v2628
        %v2746 = vadd.f32 %v2745, %v2632
        %v2747 = vadd.f32 %v2746, %v2636
        %v2748 = vadd.f32 %v2747, %v2640
        %v2749 = vadd.f32 %v2748, %v2644
        %v2750 = vadd.f32 %v2749, %v2648
        %v2751 = vadd.f32 %v2750, %v2652
        %v2752 = vadd.f32 %v2751, %v2656
        %v2753 = vadd.f32 %v2752, %v2660
        %v2754 = vadd.f32 %v2753, %v2664
        %v2755 = vadd.f32 %v2754, %v2668
        %v2756 = vadd.f32 %v2755, %v2672
        %v2757 = vadd.f32 %v2756, %v2676
        %v2758 = vadd.f32 %v2757, %v2680
        %v2759 = vadd.f32 %v2758, %v2684
        %v2760 = vadd.f32 %v2759, %v2688
        %v2761 = vadd.f32 %v2760, %v2692
        %v2762 = vadd.f32 %v2761, %v2696
        %v2763 = vadd.f32 %v2762, %v2700
        %v2764 = vadd.f32 %v2763, %v2704
        %v2765 = vadd.f32 %v2764, %v2708
        %v2766 = vadd.f32 %v2765, %v2712
        %v2767 = vadd.f32 %v2766, %v2716
        %v2768 = vadd.f32 %v2767, %v2720
        %v2769 = vadd.f32 %v2768, %v2724
        %v2770 = vadd.f32 %v2769, %v2728
        %v2771 = vadd.f32 %v2770, %v2732
        %v2772 = vadd.f32 %v2771, %v2736
        %v2773 = vadd.f32 %v2772, %v2740
        %v2774 = vrot.slane %v2773, 4
        %v2775 = vadd.f32 %v2773, %v2774
        %v2776 = vrot.slane %v2775, 2
        %v2777 = vadd.f32 %v2775, %v2776
        %v2778 = vrot.slane %v2777, 1
        %v2779 = vadd.f32 %v2777, %v2778
        %v2780 = vadd.f32 %v2618, %v2622
        %v2781 = vadd.f32 %v2780, %v2626
        %v2782 = vadd.f32 %v2781, %v2630
        %v2783 = vadd.f32 %v2782, %v2634
        %v2784 = vadd.f32 %v2783, %v2638
        %v2785 = vadd.f32 %v2784, %v2642
        %v2786 = vadd.f32 %v2785, %v2646
        %v2787 = vadd.f32 %v2786, %v2650
        %v2788 = vadd.f32 %v2787, %v2654
        %v2789 = vadd.f32 %v2788, %v2658
        %v2790 = vadd.f32 %v2789, %v2662
        %v2791 = vadd.f32 %v2790, %v2666
        %v2792 = vadd.f32 %v2791, %v2670
        %v2793 = vadd.f32 %v2792, %v2674
        %v2794 = vadd.f32 %v2793, %v2678
        %v2795 = vadd.f32 %v2794, %v2682
        %v2796 = vadd.f32 %v2795, %v2686
        %v2797 = vadd.f32 %v2796, %v2690
        %v2798 = vadd.f32 %v2797, %v2694
        %v2799 = vadd.f32 %v2798, %v2698
        %v2800 = vadd.f32 %v2799, %v2702
        %v2801 = vadd.f32 %v2800, %v2706
        %v2802 = vadd.f32 %v2801, %v2710
        %v2803 = vadd.f32 %v2802, %v2714
        %v2804 = vadd.f32 %v2803, %v2718
        %v2805 = vadd.f32 %v2804, %v2722
        %v2806 = vadd.f32 %v2805, %v2726
        %v2807 = vadd.f32 %v2806, %v2730
        %v2808 = vadd.f32 %v2807, %v2734
        %v2809 = vadd.f32 %v2808, %v2738
        %v2810 = vadd.f32 %v2809, %v2742
        %v2811 = vrot.slane %v2810, 4
        %v2812 = vadd.f32 %v2810, %v2811
        %v2813 = vrot.slane %v2812, 2
        %v2814 = vadd.f32 %v2812, %v2813
        %v2815 = vrot.slane %v2814, 1
        %v2816 = vadd.f32 %v2814, %v2815
        %v2817 = vpack.c.bf16 %v2620, %v2616
        %v2818 = vpack.c.bf16 %v2622, %v2618
        %v2819 = vpack.c.bf16 %v2628, %v2624
        %v2820 = vpack.c.bf16 %v2630, %v2626
        %v2821 = vpack.c.bf16 %v2636, %v2632
        %v2822 = vpack.c.bf16 %v2638, %v2634
        %v2823 = vpack.c.bf16 %v2644, %v2640
        %v2824 = vpack.c.bf16 %v2646, %v2642
        %v2825 = vpack.c.bf16 %v2652, %v2648
        %v2826 = vpack.c.bf16 %v2654, %v2650
        %v2827 = vpack.c.bf16 %v2660, %v2656
        %v2828 = vpack.c.bf16 %v2662, %v2658
        %v2829 = vpack.c.bf16 %v2668, %v2664
        %v2830 = vpack.c.bf16 %v2670, %v2666
        %v2831 = vpack.c.bf16 %v2676, %v2672
        %v2832 = vpack.c.bf16 %v2678, %v2674
        %v2833 = vpack.c.bf16 %v2684, %v2680
        %v2834 = vpack.c.bf16 %v2686, %v2682
        %v2835 = vpack.c.bf16 %v2692, %v2688
        %v2836 = vpack.c.bf16 %v2694, %v2690
        %v2837 = vpack.c.bf16 %v2700, %v2696
        %v2838 = vpack.c.bf16 %v2702, %v2698
        %v2839 = vpack.c.bf16 %v2708, %v2704
        %v2840 = vpack.c.bf16 %v2710, %v2706
        %v2841 = vpack.c.bf16 %v2716, %v2712
        %v2842 = vpack.c.bf16 %v2718, %v2714
        %v2843 = vpack.c.bf16 %v2724, %v2720
        %v2844 = vpack.c.bf16 %v2726, %v2722
        %v2845 = vpack.c.bf16 %v2732, %v2728
        %v2846 = vpack.c.bf16 %v2734, %v2730
        %v2847 = vpack.c.bf16 %v2740, %v2736
        %v2848 = vpack.c.bf16 %v2742, %v2738
        %2849 = vmatprep.subr.bf16.mxu0 %v2832
        %2850 = vmatpush1.bf16.msra.mxu0 %v2831
        %2851 = vmatprep.subr.bf16.mxu0 %v2830
        %2852 = vmatpush1.bf16.msra.mxu0 %v2829
        %2853 = vmatprep.subr.bf16.mxu0 %v2828
        %2854 = vmatpush1.bf16.msra.mxu0 %v2827
        %2855 = vmatprep.subr.bf16.mxu0 %v2826
        %2856 = vmatpush1.bf16.msra.mxu0 %v2825
        %2857 = vmatprep.subr.bf16.mxu0 %v2824
        %2858 = vmatpush1.bf16.msra.mxu0 %v2823
        %2859 = vmatprep.subr.bf16.mxu0 %v2822
        %2860 = vmatpush1.bf16.msra.mxu0 %v2821
        %2861 = vmatprep.subr.bf16.mxu0 %v2820
        %2862 = vmatpush1.bf16.msra.mxu0 %v2819
        %2863 = vmatprep.subr.bf16.mxu0 %v2818
        %2864 = vmatpush1.bf16.msra.mxu0 %v2817
        %2865 = vmatprep.subr.bf16.mxu0 %v2848
        %2866 = vmatpush2.bf16.msra.mxu0 %v2847
        %2867 = vmatprep.subr.bf16.mxu0 %v2846
        %2868 = vmatpush2.bf16.msra.mxu0 %v2845
        %2869 = vmatprep.subr.bf16.mxu0 %v2844
        %2870 = vmatpush2.bf16.msra.mxu0 %v2843
        %2871 = vmatprep.subr.bf16.mxu0 %v2842
        %2872 = vmatpush2.bf16.msra.mxu0 %v2841
        %2873 = vmatprep.subr.bf16.mxu0 %v2840
        %2874 = vmatpush2.bf16.msra.mxu0 %v2839
        %2875 = vmatprep.subr.bf16.mxu0 %v2838
        %2876 = vmatpush2.bf16.msra.mxu0 %v2837
        %2877 = vmatprep.subr.bf16.mxu0 %v2836
        %2878 = vmatpush2.bf16.msra.mxu0 %v2835
        %2879 = vmatprep.subr.bf16.mxu0 %v2834
        %2880 = vmatpush2.bf16.msra.mxu0 %v2833
        %2881 = vmatprep.mubr.bf16.mxu0 %v2201
        %2882 = vmatmul.mubr.bf16.gmra.mxu0 %v2200
        %v2883 = vpop.f32.mrf.mxu0
        %v2884 = vadd.f32 0.0, %v2883
        %v2885 = vpop.f32.mrf.mxu0
        %v2886 = vadd.f32 0.0, %v2885
        %v2887 = vpop.f32.mrf.mxu0
        %v2888 = vadd.f32 0.0, %v2887
        %v2889 = vpop.f32.mrf.mxu0
        %v2890 = vadd.f32 0.0, %v2889
        %2891 = vmatprep.mubr.bf16.mxu0 %v2203
        %2892 = vmatmul.mubr.bf16.gmra.mxu0 %v2202
        %v2893 = vpop.f32.mrf.mxu0
        %v2894 = vadd.f32 0.0, %v2893
        %v2895 = vpop.f32.mrf.mxu0
        %v2896 = vadd.f32 0.0, %v2895
        %v2897 = vpop.f32.mrf.mxu0
        %v2898 = vadd.f32 0.0, %v2897
        %v2899 = vpop.f32.mrf.mxu0
        %v2900 = vadd.f32 0.0, %v2899
        %2901 = vdwg.mxu0
        %v2902 = vrcp.pop %v2779
        %v2903 = vrcp.pop %v2816
        %v2904 = vmul.f32 %v2884, %v2902
        %v2905 = vmul.f32 %v2886, %v2903
        %v2906 = vmul.f32 %v2888, %v2902
        %v2907 = vmul.f32 %v2890, %v2903
        %v2908 = vmul.f32 %v2894, %v2902
        %v2909 = vmul.f32 %v2896, %v2903
        %v2910 = vmul.f32 %v2898, %v2902
        %v2911 = vmul.f32 %v2900, %v2903
        %v2912 = vpack.c.bf16 %v543, %v537
        %v2913 = vpack.c.bf16 %v545, %v539
        %v2914 = vpack.c.bf16 %v555, %v549
        %v2915 = vpack.c.bf16 %v557, %v551
        %v2916 = vpack.c.bf16 %v639, %v633
        %v2917 = vpack.c.bf16 %v641, %v635
        %v2918 = vpack.c.bf16 %v651, %v645
        %v2919 = vpack.c.bf16 %v653, %v647
        %v2920 = vpack.c.bf16 %v735, %v729
        %v2921 = vpack.c.bf16 %v737, %v731
        %v2922 = vpack.c.bf16 %v747, %v741
        %v2923 = vpack.c.bf16 %v749, %v743
        %2924 = vxpose.xlu0.c.b16.start [1/8] %v2916, 128
        %2925 = vxpose.xlu0.c.b16.cont [2/8] %v2918, 128
        %2926 = vxpose.xlu0.c.b16.cont [3/8] 0, 128
        %2927 = vxpose.xlu0.c.b16.cont [4/8] 0, 128
        %2928 = vxpose.xlu0.c.b16.cont [5/8] 0, 128
        %2929 = vxpose.xlu0.c.b16.cont [6/8] 0, 128
        %2930 = vxpose.xlu0.c.b16.cont [7/8] 0, 128
        %2931 = vxpose.xlu0.c.b16.end [8/8] 0, 128
        %v2932 = vpop.trf.xlu0
        %v2933 = vpop.trf.xlu0
        %v2934 = vpop.trf.xlu0
        %v2935 = vpop.trf.xlu0
        %v2936 = vpop.trf.xlu0
        %v2937 = vpop.trf.xlu0
        %v2938 = vpop.trf.xlu0
        %v2939 = vpop.trf.xlu0
        %2940 = vxpose.xlu0.c.b16.start [1/8] %v2917, 128
        %2941 = vxpose.xlu0.c.b16.cont [2/8] %v2919, 128
        %2942 = vxpose.xlu0.c.b16.cont [3/8] 0, 128
        %2943 = vxpose.xlu0.c.b16.cont [4/8] 0, 128
        %2944 = vxpose.xlu0.c.b16.cont [5/8] 0, 128
        %2945 = vxpose.xlu0.c.b16.cont [6/8] 0, 128
        %2946 = vxpose.xlu0.c.b16.cont [7/8] 0, 128
        %2947 = vxpose.xlu0.c.b16.end [8/8] 0, 128
        %v2948 = vpop.trf.xlu0
        %v2949 = vpop.trf.xlu0
        %v2950 = vpop.trf.xlu0
        %v2951 = vpop.trf.xlu0
        %v2952 = vpop.trf.xlu0
        %v2953 = vpop.trf.xlu0
        %v2954 = vpop.trf.xlu0
        %v2955 = vpop.trf.xlu0
        %v2957 = vsel %vm795, %v2932, 0
        %v2960 = vsel %vm795, %v2933, 0
        %v2963 = vsel %vm795, %v2934, 0
        %v2966 = vsel %vm795, %v2935, 0
        %v2969 = vsel %vm795, %v2936, 0
        %v2972 = vsel %vm795, %v2937, 0
        %v2975 = vsel %vm795, %v2938, 0
        %v2978 = vsel %vm795, %v2939, 0
        %v2981 = vsel %vm795, %v2948, 0
        %v2984 = vsel %vm795, %v2949, 0
        %v2987 = vsel %vm795, %v2950, 0
        %v2990 = vsel %vm795, %v2951, 0
        %v2993 = vsel %vm795, %v2952, 0
        %v2996 = vsel %vm795, %v2953, 0
        %v2999 = vsel %vm795, %v2954, 0
        %v3002 = vsel %vm795, %v2955, 0
        %3004 = vmatprep.subr.bf16.mxu0 0
        %3005 = vmatpush1.bf16.msra.mxu0 0
        %3006 = vmatprep.subr.bf16.mxu0 0
        %3007 = vmatpush1.bf16.msra.mxu0 0
        %3008 = vmatprep.subr.bf16.mxu0 0
        %3009 = vmatpush1.bf16.msra.mxu0 0
        %3010 = vmatprep.subr.bf16.mxu0 0
        %3011 = vmatpush1.bf16.msra.mxu0 0
        %3012 = vmatprep.subr.bf16.mxu0 0
        %3013 = vmatpush1.bf16.msra.mxu0 0
        %3014 = vmatprep.subr.bf16.mxu0 0
        %3015 = vmatpush1.bf16.msra.mxu0 0
        %3016 = vmatprep.subr.bf16.mxu0 %v2915
        %3017 = vmatpush1.bf16.msra.mxu0 %v2914
        %3018 = vmatprep.subr.bf16.mxu0 %v2913
        %3019 = vmatpush1.bf16.msra.mxu0 %v2912
        %3020 = vmatprep.subr.bf16.mxu0 0
        %3021 = vmatpush2.bf16.msra.mxu0 0
        %3022 = vmatprep.subr.bf16.mxu0 0
        %3023 = vmatpush2.bf16.msra.mxu0 0
        %3024 = vmatprep.subr.bf16.mxu0 0
        %3025 = vmatpush2.bf16.msra.mxu0 0
        %3026 = vmatprep.subr.bf16.mxu0 0
        %3027 = vmatpush2.bf16.msra.mxu0 0
        %3028 = vmatprep.subr.bf16.mxu0 0
        %3029 = vmatpush2.bf16.msra.mxu0 0
        %3030 = vmatprep.subr.bf16.mxu0 0
        %3031 = vmatpush2.bf16.msra.mxu0 0
        %3032 = vmatprep.subr.bf16.mxu0 0
        %3033 = vmatpush2.bf16.msra.mxu0 0
        %3034 = vmatprep.subr.bf16.mxu0 0
        %3035 = vmatpush2.bf16.msra.mxu0 0
        %3036 = vmatprep.mubr.bf16.mxu0 0
        %3037 = vmatmul.mubr.bf16.gmra.mxu0 %v2957
        %v3038 = vpop.f32.mrf.mxu0
        %v3039 = vadd.f32 0.0, %v3038
        %v3040 = vpop.f32.mrf.mxu0
        %v3041 = vadd.f32 0.0, %v3040
        %v3042 = vpop.f32.mrf.mxu0
        %v3043 = vadd.f32 0.0, %v3042
        %v3044 = vpop.f32.mrf.mxu0
        %v3045 = vadd.f32 0.0, %v3044
        %3046 = vmatprep.mubr.bf16.mxu0 0
        %3047 = vmatmul.mubr.bf16.gmra.mxu0 %v2960
        %v3048 = vpop.f32.mrf.mxu0
        %v3049 = vadd.f32 0.0, %v3048
        %v3050 = vpop.f32.mrf.mxu0
        %v3051 = vadd.f32 0.0, %v3050
        %v3052 = vpop.f32.mrf.mxu0
        %v3053 = vadd.f32 0.0, %v3052
        %v3054 = vpop.f32.mrf.mxu0
        %v3055 = vadd.f32 0.0, %v3054
        %3056 = vmatprep.mubr.bf16.mxu0 0
        %3057 = vmatmul.mubr.bf16.gmra.mxu0 %v2963
        %v3058 = vpop.f32.mrf.mxu0
        %v3059 = vadd.f32 0.0, %v3058
        %v3060 = vpop.f32.mrf.mxu0
        %v3061 = vadd.f32 0.0, %v3060
        %v3062 = vpop.f32.mrf.mxu0
        %v3063 = vadd.f32 0.0, %v3062
        %v3064 = vpop.f32.mrf.mxu0
        %v3065 = vadd.f32 0.0, %v3064
        %3066 = vmatprep.mubr.bf16.mxu0 0
        %3067 = vmatmul.mubr.bf16.gmra.mxu0 %v2966
        %v3068 = vpop.f32.mrf.mxu0
        %v3069 = vadd.f32 0.0, %v3068
        %v3070 = vpop.f32.mrf.mxu0
        %v3071 = vadd.f32 0.0, %v3070
        %v3072 = vpop.f32.mrf.mxu0
        %v3073 = vadd.f32 0.0, %v3072
        %v3074 = vpop.f32.mrf.mxu0
        %v3075 = vadd.f32 0.0, %v3074
        %3076 = vmatprep.mubr.bf16.mxu0 0
        %3077 = vmatmul.mubr.bf16.gmra.mxu0 %v2969
        %v3078 = vpop.f32.mrf.mxu0
        %v3079 = vadd.f32 0.0, %v3078
        %v3080 = vpop.f32.mrf.mxu0
        %v3081 = vadd.f32 0.0, %v3080
        %v3082 = vpop.f32.mrf.mxu0
        %v3083 = vadd.f32 0.0, %v3082
        %v3084 = vpop.f32.mrf.mxu0
        %v3085 = vadd.f32 0.0, %v3084
        %3086 = vmatprep.mubr.bf16.mxu0 0
        %3087 = vmatmul.mubr.bf16.gmra.mxu0 %v2972
        %v3088 = vpop.f32.mrf.mxu0
        %v3089 = vadd.f32 0.0, %v3088
        %v3090 = vpop.f32.mrf.mxu0
        %v3091 = vadd.f32 0.0, %v3090
        %v3092 = vpop.f32.mrf.mxu0
        %v3093 = vadd.f32 0.0, %v3092
        %v3094 = vpop.f32.mrf.mxu0
        %v3095 = vadd.f32 0.0, %v3094
        %3096 = vmatprep.mubr.bf16.mxu0 0
        %3097 = vmatmul.mubr.bf16.gmra.mxu0 %v2975
        %v3098 = vpop.f32.mrf.mxu0
        %v3099 = vadd.f32 0.0, %v3098
        %v3100 = vpop.f32.mrf.mxu0
        %v3101 = vadd.f32 0.0, %v3100
        %v3102 = vpop.f32.mrf.mxu0
        %v3103 = vadd.f32 0.0, %v3102
        %v3104 = vpop.f32.mrf.mxu0
        %v3105 = vadd.f32 0.0, %v3104
        %3106 = vmatprep.mubr.bf16.mxu0 0
        %3107 = vmatmul.mubr.bf16.gmra.mxu0 %v2978
        %v3108 = vpop.f32.mrf.mxu0
        %v3109 = vadd.f32 0.0, %v3108
        %v3110 = vpop.f32.mrf.mxu0
        %v3111 = vadd.f32 0.0, %v3110
        %v3112 = vpop.f32.mrf.mxu0
        %v3113 = vadd.f32 0.0, %v3112
        %v3114 = vpop.f32.mrf.mxu0
        %v3115 = vadd.f32 0.0, %v3114
        %3116 = vmatprep.mubr.bf16.mxu0 0
        %3117 = vmatmul.mubr.bf16.gmra.mxu0 %v2981
        %v3118 = vpop.f32.mrf.mxu0
        %v3119 = vadd.f32 0.0, %v3118
        %v3120 = vpop.f32.mrf.mxu0
        %v3121 = vadd.f32 0.0, %v3120
        %v3122 = vpop.f32.mrf.mxu0
        %v3123 = vadd.f32 0.0, %v3122
        %v3124 = vpop.f32.mrf.mxu0
        %v3125 = vadd.f32 0.0, %v3124
        %3126 = vmatprep.mubr.bf16.mxu0 0
        %3127 = vmatmul.mubr.bf16.gmra.mxu0 %v2984
        %v3128 = vpop.f32.mrf.mxu0
        %v3129 = vadd.f32 0.0, %v3128
        %v3130 = vpop.f32.mrf.mxu0
        %v3131 = vadd.f32 0.0, %v3130
        %v3132 = vpop.f32.mrf.mxu0
        %v3133 = vadd.f32 0.0, %v3132
        %v3134 = vpop.f32.mrf.mxu0
        %v3135 = vadd.f32 0.0, %v3134
        %3136 = vmatprep.mubr.bf16.mxu0 0
        %3137 = vmatmul.mubr.bf16.gmra.mxu0 %v2987
        %v3138 = vpop.f32.mrf.mxu0
        %v3139 = vadd.f32 0.0, %v3138
        %v3140 = vpop.f32.mrf.mxu0
        %v3141 = vadd.f32 0.0, %v3140
        %v3142 = vpop.f32.mrf.mxu0
        %v3143 = vadd.f32 0.0, %v3142
        %v3144 = vpop.f32.mrf.mxu0
        %v3145 = vadd.f32 0.0, %v3144
        %3146 = vmatprep.mubr.bf16.mxu0 0
        %3147 = vmatmul.mubr.bf16.gmra.mxu0 %v2990
        %v3148 = vpop.f32.mrf.mxu0
        %v3149 = vadd.f32 0.0, %v3148
        %v3150 = vpop.f32.mrf.mxu0
        %v3151 = vadd.f32 0.0, %v3150
        %v3152 = vpop.f32.mrf.mxu0
        %v3153 = vadd.f32 0.0, %v3152
        %v3154 = vpop.f32.mrf.mxu0
        %v3155 = vadd.f32 0.0, %v3154
        %3156 = vmatprep.mubr.bf16.mxu0 0
        %3157 = vmatmul.mubr.bf16.gmra.mxu0 %v2993
        %v3158 = vpop.f32.mrf.mxu0
        %v3159 = vadd.f32 0.0, %v3158
        %v3160 = vpop.f32.mrf.mxu0
        %v3161 = vadd.f32 0.0, %v3160
        %v3162 = vpop.f32.mrf.mxu0
        %v3163 = vadd.f32 0.0, %v3162
        %v3164 = vpop.f32.mrf.mxu0
        %v3165 = vadd.f32 0.0, %v3164
        %3166 = vmatprep.mubr.bf16.mxu0 0
        %3167 = vmatmul.mubr.bf16.gmra.mxu0 %v2996
        %v3168 = vpop.f32.mrf.mxu0
        %v3169 = vadd.f32 0.0, %v3168
        %v3170 = vpop.f32.mrf.mxu0
        %v3171 = vadd.f32 0.0, %v3170
        %v3172 = vpop.f32.mrf.mxu0
        %v3173 = vadd.f32 0.0, %v3172
        %v3174 = vpop.f32.mrf.mxu0
        %v3175 = vadd.f32 0.0, %v3174
        %3176 = vmatprep.mubr.bf16.mxu0 0
        %3177 = vmatmul.mubr.bf16.gmra.mxu0 %v2999
        %v3178 = vpop.f32.mrf.mxu0
        %v3179 = vadd.f32 0.0, %v3178
        %v3180 = vpop.f32.mrf.mxu0
        %v3181 = vadd.f32 0.0, %v3180
        %v3182 = vpop.f32.mrf.mxu0
        %v3183 = vadd.f32 0.0, %v3182
        %v3184 = vpop.f32.mrf.mxu0
        %v3185 = vadd.f32 0.0, %v3184
        %3186 = vmatprep.mubr.bf16.mxu0 0
        %3187 = vmatmul.mubr.bf16.gmra.mxu0 %v3002
        %v3188 = vpop.f32.mrf.mxu0
        %v3189 = vadd.f32 0.0, %v3188
        %v3190 = vpop.f32.mrf.mxu0
        %v3191 = vadd.f32 0.0, %v3190
        %v3192 = vpop.f32.mrf.mxu0
        %v3193 = vadd.f32 0.0, %v3192
        %v3194 = vpop.f32.mrf.mxu0
        %v3195 = vadd.f32 0.0, %v3194
        %3196 = vdwg.mxu0
        %v3197 = vmax.f32 %v3039, %v3049
        %v3198 = vmax.f32 %v3043, %v3053
        %v3199 = vmax.f32 %v3197, %v3059
        %v3200 = vmax.f32 %v3198, %v3063
        %v3201 = vmax.f32 %v3199, %v3069
        %v3202 = vmax.f32 %v3200, %v3073
        %v3203 = vmax.f32 %v3201, %v3079
        %v3204 = vmax.f32 %v3202, %v3083
        %v3205 = vmax.f32 %v3203, %v3089
        %v3206 = vmax.f32 %v3204, %v3093
        %v3207 = vmax.f32 %v3205, %v3099
        %v3208 = vmax.f32 %v3206, %v3103
        %v3209 = vmax.f32 %v3207, %v3109
        %v3210 = vmax.f32 %v3208, %v3113
        %v3211 = vmax.f32 %v3209, %v3119
        %v3212 = vmax.f32 %v3210, %v3123
        %v3213 = vmax.f32 %v3211, %v3129
        %v3214 = vmax.f32 %v3212, %v3133
        %v3215 = vmax.f32 %v3213, %v3139
        %v3216 = vmax.f32 %v3214, %v3143
        %v3217 = vmax.f32 %v3215, %v3149
        %v3218 = vmax.f32 %v3216, %v3153
        %v3219 = vmax.f32 %v3217, %v3159
        %v3220 = vmax.f32 %v3218, %v3163
        %v3221 = vmax.f32 %v3219, %v3169
        %v3222 = vmax.f32 %v3220, %v3173
        %v3223 = vmax.f32 %v3221, %v3179
        %v3224 = vmax.f32 %v3222, %v3183
        %v3225 = vmax.f32 %v3223, %v3189
        %v3226 = vmax.f32 %v3224, %v3193
        %v3227 = vmax.f32 %v3225, %v3226
        %v3228 = vrot.slane %v3227, 4
        %v3229 = vmax.f32 %v3227, %v3228
        %v3230 = vrot.slane %v3229, 2
        %v3231 = vmax.f32 %v3229, %v3230
        %v3232 = vrot.slane %v3231, 1
        %v3233 = vmax.f32 %v3231, %v3232
        %v3234 = vmax.f32 %v3041, %v3051
        %v3235 = vmax.f32 %v3045, %v3055
        %v3236 = vmax.f32 %v3234, %v3061
        %v3237 = vmax.f32 %v3235, %v3065
        %v3238 = vmax.f32 %v3236, %v3071
        %v3239 = vmax.f32 %v3237, %v3075
        %v3240 = vmax.f32 %v3238, %v3081
        %v3241 = vmax.f32 %v3239, %v3085
        %v3242 = vmax.f32 %v3240, %v3091
        %v3243 = vmax.f32 %v3241, %v3095
        %v3244 = vmax.f32 %v3242, %v3101
        %v3245 = vmax.f32 %v3243, %v3105
        %v3246 = vmax.f32 %v3244, %v3111
        %v3247 = vmax.f32 %v3245, %v3115
        %v3248 = vmax.f32 %v3246, %v3121
        %v3249 = vmax.f32 %v3247, %v3125
        %v3250 = vmax.f32 %v3248, %v3131
        %v3251 = vmax.f32 %v3249, %v3135
        %v3252 = vmax.f32 %v3250, %v3141
        %v3253 = vmax.f32 %v3251, %v3145
        %v3254 = vmax.f32 %v3252, %v3151
        %v3255 = vmax.f32 %v3253, %v3155
        %v3256 = vmax.f32 %v3254, %v3161
        %v3257 = vmax.f32 %v3255, %v3165
        %v3258 = vmax.f32 %v3256, %v3171
        %v3259 = vmax.f32 %v3257, %v3175
        %v3260 = vmax.f32 %v3258, %v3181
        %v3261 = vmax.f32 %v3259, %v3185
        %v3262 = vmax.f32 %v3260, %v3191
        %v3263 = vmax.f32 %v3261, %v3195
        %v3264 = vmax.f32 %v3262, %v3263
        %v3265 = vrot.slane %v3264, 4
        %v3266 = vmax.f32 %v3264, %v3265
        %v3267 = vrot.slane %v3266, 2
        %v3268 = vmax.f32 %v3266, %v3267
        %v3269 = vrot.slane %v3268, 1
        %v3270 = vmax.f32 %v3268, %v3269
        %v3271 = vsub.f32 %v3039, %v3233
        %v3272 = vsub.f32 %v3041, %v3270
        %v3273 = vsub.f32 %v3043, %v3233
        %v3274 = vsub.f32 %v3045, %v3270
        %v3275 = vsub.f32 %v3049, %v3233
        %v3276 = vsub.f32 %v3051, %v3270
        %v3277 = vsub.f32 %v3053, %v3233
        %v3278 = vsub.f32 %v3055, %v3270
        %v3279 = vsub.f32 %v3059, %v3233
        %v3280 = vsub.f32 %v3061, %v3270
        %v3281 = vsub.f32 %v3063, %v3233
        %v3282 = vsub.f32 %v3065, %v3270
        %v3283 = vsub.f32 %v3069, %v3233
        %v3284 = vsub.f32 %v3071, %v3270
        %v3285 = vsub.f32 %v3073, %v3233
        %v3286 = vsub.f32 %v3075, %v3270
        %v3287 = vsub.f32 %v3079, %v3233
        %v3288 = vsub.f32 %v3081, %v3270
        %v3289 = vsub.f32 %v3083, %v3233
        %v3290 = vsub.f32 %v3085, %v3270
        %v3291 = vsub.f32 %v3089, %v3233
        %v3292 = vsub.f32 %v3091, %v3270
        %v3293 = vsub.f32 %v3093, %v3233
        %v3294 = vsub.f32 %v3095, %v3270
        %v3295 = vsub.f32 %v3099, %v3233
        %v3296 = vsub.f32 %v3101, %v3270
        %v3297 = vsub.f32 %v3103, %v3233
        %v3298 = vsub.f32 %v3105, %v3270
        %v3299 = vsub.f32 %v3109, %v3233
        %v3300 = vsub.f32 %v3111, %v3270
        %v3301 = vsub.f32 %v3113, %v3233
        %v3302 = vsub.f32 %v3115, %v3270
        %v3303 = vsub.f32 %v3119, %v3233
        %v3304 = vsub.f32 %v3121, %v3270
        %v3305 = vsub.f32 %v3123, %v3233
        %v3306 = vsub.f32 %v3125, %v3270
        %v3307 = vsub.f32 %v3129, %v3233
        %v3308 = vsub.f32 %v3131, %v3270
        %v3309 = vsub.f32 %v3133, %v3233
        %v3310 = vsub.f32 %v3135, %v3270
        %v3311 = vsub.f32 %v3139, %v3233
        %v3312 = vsub.f32 %v3141, %v3270
        %v3313 = vsub.f32 %v3143, %v3233
        %v3314 = vsub.f32 %v3145, %v3270
        %v3315 = vsub.f32 %v3149, %v3233
        %v3316 = vsub.f32 %v3151, %v3270
        %v3317 = vsub.f32 %v3153, %v3233
        %v3318 = vsub.f32 %v3155, %v3270
        %v3319 = vsub.f32 %v3159, %v3233
        %v3320 = vsub.f32 %v3161, %v3270
        %v3321 = vsub.f32 %v3163, %v3233
        %v3322 = vsub.f32 %v3165, %v3270
        %v3323 = vsub.f32 %v3169, %v3233
        %v3324 = vsub.f32 %v3171, %v3270
        %v3325 = vsub.f32 %v3173, %v3233
        %v3326 = vsub.f32 %v3175, %v3270
        %v3327 = vsub.f32 %v3179, %v3233
        %v3328 = vsub.f32 %v3181, %v3270
        %v3329 = vsub.f32 %v3183, %v3233
        %v3330 = vsub.f32 %v3185, %v3270
        %v3331 = vsub.f32 %v3189, %v3233
        %v3332 = vsub.f32 %v3191, %v3270
        %v3333 = vsub.f32 %v3193, %v3233
        %v3334 = vsub.f32 %v3195, %v3270
        %v3335 = vmul.f32 %v3271, 1.442695
        %v3336 = vpow.pop %v3335
        %v3337 = vmul.f32 %v3272, 1.442695
        %v3338 = vpow.pop %v3337
        %v3339 = vmul.f32 %v3273, 1.442695
        %v3340 = vpow.pop %v3339
        %v3341 = vmul.f32 %v3274, 1.442695
        %v3342 = vpow.pop %v3341
        %v3343 = vmul.f32 %v3275, 1.442695
        %v3344 = vpow.pop %v3343
        %v3345 = vmul.f32 %v3276, 1.442695
        %v3346 = vpow.pop %v3345
        %v3347 = vmul.f32 %v3277, 1.442695
        %v3348 = vpow.pop %v3347
        %v3349 = vmul.f32 %v3278, 1.442695
        %v3350 = vpow.pop %v3349
        %v3351 = vmul.f32 %v3279, 1.442695
        %v3352 = vpow.pop %v3351
        %v3353 = vmul.f32 %v3280, 1.442695
        %v3354 = vpow.pop %v3353
        %v3355 = vmul.f32 %v3281, 1.442695
        %v3356 = vpow.pop %v3355
        %v3357 = vmul.f32 %v3282, 1.442695
        %v3358 = vpow.pop %v3357
        %v3359 = vmul.f32 %v3283, 1.442695
        %v3360 = vpow.pop %v3359
        %v3361 = vmul.f32 %v3284, 1.442695
        %v3362 = vpow.pop %v3361
        %v3363 = vmul.f32 %v3285, 1.442695
        %v3364 = vpow.pop %v3363
        %v3365 = vmul.f32 %v3286, 1.442695
        %v3366 = vpow.pop %v3365
        %v3367 = vmul.f32 %v3287, 1.442695
        %v3368 = vpow.pop %v3367
        %v3369 = vmul.f32 %v3288, 1.442695
        %v3370 = vpow.pop %v3369
        %v3371 = vmul.f32 %v3289, 1.442695
        %v3372 = vpow.pop %v3371
        %v3373 = vmul.f32 %v3290, 1.442695
        %v3374 = vpow.pop %v3373
        %v3375 = vmul.f32 %v3291, 1.442695
        %v3376 = vpow.pop %v3375
        %v3377 = vmul.f32 %v3292, 1.442695
        %v3378 = vpow.pop %v3377
        %v3379 = vmul.f32 %v3293, 1.442695
        %v3380 = vpow.pop %v3379
        %v3381 = vmul.f32 %v3294, 1.442695
        %v3382 = vpow.pop %v3381
        %v3383 = vmul.f32 %v3295, 1.442695
        %v3384 = vpow.pop %v3383
        %v3385 = vmul.f32 %v3296, 1.442695
        %v3386 = vpow.pop %v3385
        %v3387 = vmul.f32 %v3297, 1.442695
        %v3388 = vpow.pop %v3387
        %v3389 = vmul.f32 %v3298, 1.442695
        %v3390 = vpow.pop %v3389
        %v3391 = vmul.f32 %v3299, 1.442695
        %v3392 = vpow.pop %v3391
        %v3393 = vmul.f32 %v3300, 1.442695
        %v3394 = vpow.pop %v3393
        %v3395 = vmul.f32 %v3301, 1.442695
        %v3396 = vpow.pop %v3395
        %v3397 = vmul.f32 %v3302, 1.442695
        %v3398 = vpow.pop %v3397
        %v3399 = vmul.f32 %v3303, 1.442695
        %v3400 = vpow.pop %v3399
        %v3401 = vmul.f32 %v3304, 1.442695
        %v3402 = vpow.pop %v3401
        %v3403 = vmul.f32 %v3305, 1.442695
        %v3404 = vpow.pop %v3403
        %v3405 = vmul.f32 %v3306, 1.442695
        %v3406 = vpow.pop %v3405
        %v3407 = vmul.f32 %v3307, 1.442695
        %v3408 = vpow.pop %v3407
        %v3409 = vmul.f32 %v3308, 1.442695
        %v3410 = vpow.pop %v3409
        %v3411 = vmul.f32 %v3309, 1.442695
        %v3412 = vpow.pop %v3411
        %v3413 = vmul.f32 %v3310, 1.442695
        %v3414 = vpow.pop %v3413
        %v3415 = vmul.f32 %v3311, 1.442695
        %v3416 = vpow.pop %v3415
        %v3417 = vmul.f32 %v3312, 1.442695
        %v3418 = vpow.pop %v3417
        %v3419 = vmul.f32 %v3313, 1.442695
        %v3420 = vpow.pop %v3419
        %v3421 = vmul.f32 %v3314, 1.442695
        %v3422 = vpow.pop %v3421
        %v3423 = vmul.f32 %v3315, 1.442695
        %v3424 = vpow.pop %v3423
        %v3425 = vmul.f32 %v3316, 1.442695
        %v3426 = vpow.pop %v3425
        %v3427 = vmul.f32 %v3317, 1.442695
        %v3428 = vpow.pop %v3427
        %v3429 = vmul.f32 %v3318, 1.442695
        %v3430 = vpow.pop %v3429
        %v3431 = vmul.f32 %v3319, 1.442695
        %v3432 = vpow.pop %v3431
        %v3433 = vmul.f32 %v3320, 1.442695
        %v3434 = vpow.pop %v3433
        %v3435 = vmul.f32 %v3321, 1.442695
        %v3436 = vpow.pop %v3435
        %v3437 = vmul.f32 %v3322, 1.442695
        %v3438 = vpow.pop %v3437
        %v3439 = vmul.f32 %v3323, 1.442695
        %v3440 = vpow.pop %v3439
        %v3441 = vmul.f32 %v3324, 1.442695
        %v3442 = vpow.pop %v3441
        %v3443 = vmul.f32 %v3325, 1.442695
        %v3444 = vpow.pop %v3443
        %v3445 = vmul.f32 %v3326, 1.442695
        %v3446 = vpow.pop %v3445
        %v3447 = vmul.f32 %v3327, 1.442695
        %v3448 = vpow.pop %v3447
        %v3449 = vmul.f32 %v3328, 1.442695
        %v3450 = vpow.pop %v3449
        %v3451 = vmul.f32 %v3329, 1.442695
        %v3452 = vpow.pop %v3451
        %v3453 = vmul.f32 %v3330, 1.442695
        %v3454 = vpow.pop %v3453
        %v3455 = vmul.f32 %v3331, 1.442695
        %v3456 = vpow.pop %v3455
        %v3457 = vmul.f32 %v3332, 1.442695
        %v3458 = vpow.pop %v3457
        %v3459 = vmul.f32 %v3333, 1.442695
        %v3460 = vpow.pop %v3459
        %v3461 = vmul.f32 %v3334, 1.442695
        %v3462 = vpow.pop %v3461
        %v3463 = vadd.f32 %v3336, %v3340
        %v3464 = vadd.f32 %v3463, %v3344
        %v3465 = vadd.f32 %v3464, %v3348
        %v3466 = vadd.f32 %v3465, %v3352
        %v3467 = vadd.f32 %v3466, %v3356
        %v3468 = vadd.f32 %v3467, %v3360
        %v3469 = vadd.f32 %v3468, %v3364
        %v3470 = vadd.f32 %v3469, %v3368
        %v3471 = vadd.f32 %v3470, %v3372
        %v3472 = vadd.f32 %v3471, %v3376
        %v3473 = vadd.f32 %v3472, %v3380
        %v3474 = vadd.f32 %v3473, %v3384
        %v3475 = vadd.f32 %v3474, %v3388
        %v3476 = vadd.f32 %v3475, %v3392
        %v3477 = vadd.f32 %v3476, %v3396
        %v3478 = vadd.f32 %v3477, %v3400
        %v3479 = vadd.f32 %v3478, %v3404
        %v3480 = vadd.f32 %v3479, %v3408
        %v3481 = vadd.f32 %v3480, %v3412
        %v3482 = vadd.f32 %v3481, %v3416
        %v3483 = vadd.f32 %v3482, %v3420
        %v3484 = vadd.f32 %v3483, %v3424
        %v3485 = vadd.f32 %v3484, %v3428
        %v3486 = vadd.f32 %v3485, %v3432
        %v3487 = vadd.f32 %v3486, %v3436
        %v3488 = vadd.f32 %v3487, %v3440
        %v3489 = vadd.f32 %v3488, %v3444
        %v3490 = vadd.f32 %v3489, %v3448
        %v3491 = vadd.f32 %v3490, %v3452
        %v3492 = vadd.f32 %v3491, %v3456
        %v3493 = vadd.f32 %v3492, %v3460
        %v3494 = vrot.slane %v3493, 4
        %v3495 = vadd.f32 %v3493, %v3494
        %v3496 = vrot.slane %v3495, 2
        %v3497 = vadd.f32 %v3495, %v3496
        %v3498 = vrot.slane %v3497, 1
        %v3499 = vadd.f32 %v3497, %v3498
        %v3500 = vadd.f32 %v3338, %v3342
        %v3501 = vadd.f32 %v3500, %v3346
        %v3502 = vadd.f32 %v3501, %v3350
        %v3503 = vadd.f32 %v3502, %v3354
        %v3504 = vadd.f32 %v3503, %v3358
        %v3505 = vadd.f32 %v3504, %v3362
        %v3506 = vadd.f32 %v3505, %v3366
        %v3507 = vadd.f32 %v3506, %v3370
        %v3508 = vadd.f32 %v3507, %v3374
        %v3509 = vadd.f32 %v3508, %v3378
        %v3510 = vadd.f32 %v3509, %v3382
        %v3511 = vadd.f32 %v3510, %v3386
        %v3512 = vadd.f32 %v3511, %v3390
        %v3513 = vadd.f32 %v3512, %v3394
        %v3514 = vadd.f32 %v3513, %v3398
        %v3515 = vadd.f32 %v3514, %v3402
        %v3516 = vadd.f32 %v3515, %v3406
        %v3517 = vadd.f32 %v3516, %v3410
        %v3518 = vadd.f32 %v3517, %v3414
        %v3519 = vadd.f32 %v3518, %v3418
        %v3520 = vadd.f32 %v3519, %v3422
        %v3521 = vadd.f32 %v3520, %v3426
        %v3522 = vadd.f32 %v3521, %v3430
        %v3523 = vadd.f32 %v3522, %v3434
        %v3524 = vadd.f32 %v3523, %v3438
        %v3525 = vadd.f32 %v3524, %v3442
        %v3526 = vadd.f32 %v3525, %v3446
        %v3527 = vadd.f32 %v3526, %v3450
        %v3528 = vadd.f32 %v3527, %v3454
        %v3529 = vadd.f32 %v3528, %v3458
        %v3530 = vadd.f32 %v3529, %v3462
        %v3531 = vrot.slane %v3530, 4
        %v3532 = vadd.f32 %v3530, %v3531
        %v3533 = vrot.slane %v3532, 2
        %v3534 = vadd.f32 %v3532, %v3533
        %v3535 = vrot.slane %v3534, 1
        %v3536 = vadd.f32 %v3534, %v3535
        %v3537 = vpack.c.bf16 %v3340, %v3336
        %v3538 = vpack.c.bf16 %v3342, %v3338
        %v3539 = vpack.c.bf16 %v3348, %v3344
        %v3540 = vpack.c.bf16 %v3350, %v3346
        %v3541 = vpack.c.bf16 %v3356, %v3352
        %v3542 = vpack.c.bf16 %v3358, %v3354
        %v3543 = vpack.c.bf16 %v3364, %v3360
        %v3544 = vpack.c.bf16 %v3366, %v3362
        %v3545 = vpack.c.bf16 %v3372, %v3368
        %v3546 = vpack.c.bf16 %v3374, %v3370
        %v3547 = vpack.c.bf16 %v3380, %v3376
        %v3548 = vpack.c.bf16 %v3382, %v3378
        %v3549 = vpack.c.bf16 %v3388, %v3384
        %v3550 = vpack.c.bf16 %v3390, %v3386
        %v3551 = vpack.c.bf16 %v3396, %v3392
        %v3552 = vpack.c.bf16 %v3398, %v3394
        %v3553 = vpack.c.bf16 %v3404, %v3400
        %v3554 = vpack.c.bf16 %v3406, %v3402
        %v3555 = vpack.c.bf16 %v3412, %v3408
        %v3556 = vpack.c.bf16 %v3414, %v3410
        %v3557 = vpack.c.bf16 %v3420, %v3416
        %v3558 = vpack.c.bf16 %v3422, %v3418
        %v3559 = vpack.c.bf16 %v3428, %v3424
        %v3560 = vpack.c.bf16 %v3430, %v3426
        %v3561 = vpack.c.bf16 %v3436, %v3432
        %v3562 = vpack.c.bf16 %v3438, %v3434
        %v3563 = vpack.c.bf16 %v3444, %v3440
        %v3564 = vpack.c.bf16 %v3446, %v3442
        %v3565 = vpack.c.bf16 %v3452, %v3448
        %v3566 = vpack.c.bf16 %v3454, %v3450
        %v3567 = vpack.c.bf16 %v3460, %v3456
        %v3568 = vpack.c.bf16 %v3462, %v3458
        %3569 = vmatprep.subr.bf16.mxu0 %v3552
        %3570 = vmatpush1.bf16.msra.mxu0 %v3551
        %3571 = vmatprep.subr.bf16.mxu0 %v3550
        %3572 = vmatpush1.bf16.msra.mxu0 %v3549
        %3573 = vmatprep.subr.bf16.mxu0 %v3548
        %3574 = vmatpush1.bf16.msra.mxu0 %v3547
        %3575 = vmatprep.subr.bf16.mxu0 %v3546
        %3576 = vmatpush1.bf16.msra.mxu0 %v3545
        %3577 = vmatprep.subr.bf16.mxu0 %v3544
        %3578 = vmatpush1.bf16.msra.mxu0 %v3543
        %3579 = vmatprep.subr.bf16.mxu0 %v3542
        %3580 = vmatpush1.bf16.msra.mxu0 %v3541
        %3581 = vmatprep.subr.bf16.mxu0 %v3540
        %3582 = vmatpush1.bf16.msra.mxu0 %v3539
        %3583 = vmatprep.subr.bf16.mxu0 %v3538
        %3584 = vmatpush1.bf16.msra.mxu0 %v3537
        %3585 = vmatprep.subr.bf16.mxu0 %v3568
        %3586 = vmatpush2.bf16.msra.mxu0 %v3567
        %3587 = vmatprep.subr.bf16.mxu0 %v3566
        %3588 = vmatpush2.bf16.msra.mxu0 %v3565
        %3589 = vmatprep.subr.bf16.mxu0 %v3564
        %3590 = vmatpush2.bf16.msra.mxu0 %v3563
        %3591 = vmatprep.subr.bf16.mxu0 %v3562
        %3592 = vmatpush2.bf16.msra.mxu0 %v3561
        %3593 = vmatprep.subr.bf16.mxu0 %v3560
        %3594 = vmatpush2.bf16.msra.mxu0 %v3559
        %3595 = vmatprep.subr.bf16.mxu0 %v3558
        %3596 = vmatpush2.bf16.msra.mxu0 %v3557
        %3597 = vmatprep.subr.bf16.mxu0 %v3556
        %3598 = vmatpush2.bf16.msra.mxu0 %v3555
        %3599 = vmatprep.subr.bf16.mxu0 %v3554
        %3600 = vmatpush2.bf16.msra.mxu0 %v3553
        %3601 = vmatprep.mubr.bf16.mxu0 %v2921
        %3602 = vmatmul.mubr.bf16.gmra.mxu0 %v2920
        %v3603 = vpop.f32.mrf.mxu0
        %v3604 = vadd.f32 0.0, %v3603
        %v3605 = vpop.f32.mrf.mxu0
        %v3606 = vadd.f32 0.0, %v3605
        %v3607 = vpop.f32.mrf.mxu0
        %v3608 = vadd.f32 0.0, %v3607
        %v3609 = vpop.f32.mrf.mxu0
        %v3610 = vadd.f32 0.0, %v3609
        %3611 = vmatprep.mubr.bf16.mxu0 %v2923
        %3612 = vmatmul.mubr.bf16.gmra.mxu0 %v2922
        %v3613 = vpop.f32.mrf.mxu0
        %v3614 = vadd.f32 0.0, %v3613
        %v3615 = vpop.f32.mrf.mxu0
        %v3616 = vadd.f32 0.0, %v3615
        %v3617 = vpop.f32.mrf.mxu0
        %v3618 = vadd.f32 0.0, %v3617
        %v3619 = vpop.f32.mrf.mxu0
        %v3620 = vadd.f32 0.0, %v3619
        %3621 = vdwg.mxu0
        %v3622 = vrcp.pop %v3499
        %v3623 = vrcp.pop %v3536
        %v3624 = vmul.f32 %v3604, %v3622
        %v3625 = vmul.f32 %v3606, %v3623
        %v3626 = vmul.f32 %v3608, %v3622
        %v3627 = vmul.f32 %v3610, %v3623
        %v3628 = vmul.f32 %v3614, %v3622
        %v3629 = vmul.f32 %v3616, %v3623
        %v3630 = vmul.f32 %v3618, %v3622
        %v3631 = vmul.f32 %v3620, %v3623
        %v3632 = vld [vmem:[%s2] sm:$0xf]
        %v3633 = vld [vmem:[%s3] sm:$0xf]
        %3635 = vset.pattern.permute.xlu0 0
        %3636 = vperm.xlu0 %3635, %v3633
        %v3637 = vpop.permute.xlu0 %3636
        %3639 = vmatprep.subr.mxu0 %v3631
        %3640 = vmatpush1.msra.mxu0 %v3630
        %3641 = vmatprep.subr.mxu0 %v3629
        %3642 = vmatpush1.msra.mxu0 %v3628
        %3643 = vmatprep.subr.mxu0 %v3627
        %3644 = vmatpush1.msra.mxu0 %v3626
        %3645 = vmatprep.subr.mxu0 %v3625
        %3646 = vmatpush1.msra.mxu0 %v3624
        %3647 = vmatprep.subr.mxu0 %v2911
        %3648 = vmatpush1.msra.mxu0 %v2910
        %3649 = vmatprep.subr.mxu0 %v2909
        %3650 = vmatpush1.msra.mxu0 %v2908
        %3651 = vmatprep.subr.mxu0 %v2907
        %3652 = vmatpush1.msra.mxu0 %v2906
        %3653 = vmatprep.subr.mxu0 %v2905
        %3654 = vmatpush1.msra.mxu0 %v2904
        %3655 = vmatprep.subr.mxu0 %v2191
        %3656 = vmatpush1.msra.mxu0 %v2190
        %3657 = vmatprep.subr.mxu0 %v2189
        %3658 = vmatpush1.msra.mxu0 %v2188
        %3659 = vmatprep.subr.mxu0 %v2187
        %3660 = vmatpush1.msra.mxu0 %v2186
        %3661 = vmatprep.subr.mxu0 %v2185
        %3662 = vmatpush1.msra.mxu0 %v2184
        %3663 = vmatprep.subr.mxu0 %v1471
        %3664 = vmatpush1.msra.mxu0 %v1470
        %3665 = vmatprep.subr.mxu0 %v1469
        %3666 = vmatpush1.msra.mxu0 %v1468
        %3667 = vmatprep.subr.mxu0 %v1467
        %3668 = vmatpush1.msra.mxu0 %v1466
        %3669 = vmatprep.subr.mxu0 %v1465
        %3670 = vmatpush1.msra.mxu0 %v1464
        %3671 = vmatprep.subr.mxu0 0.0
        %3672 = vmatpush2.msra.mxu0 0.0
        %3673 = vmatprep.subr.mxu0 0.0
        %3674 = vmatpush2.msra.mxu0 0.0
        %3675 = vmatprep.subr.mxu0 0.0
        %3676 = vmatpush2.msra.mxu0 0.0
        %3677 = vmatprep.subr.mxu0 0.0
        %3678 = vmatpush2.msra.mxu0 0.0
        %3679 = vmatprep.subr.mxu0 0.0
        %3680 = vmatpush2.msra.mxu0 0.0
        %3681 = vmatprep.subr.mxu0 0.0
        %3682 = vmatpush2.msra.mxu0 0.0
        %3683 = vmatprep.subr.mxu0 0.0
        %3684 = vmatpush2.msra.mxu0 0.0
        %3685 = vmatprep.subr.mxu0 0.0
        %3686 = vmatpush2.msra.mxu0 0.0
        %3687 = vmatprep.subr.mxu0 0.0
        %3688 = vmatpush2.msra.mxu0 0.0
        %3689 = vmatprep.subr.mxu0 0.0
        %3690 = vmatpush2.msra.mxu0 0.0
        %3691 = vmatprep.subr.mxu0 0.0
        %3692 = vmatpush2.msra.mxu0 0.0
        %3693 = vmatprep.subr.mxu0 0.0
        %3694 = vmatpush2.msra.mxu0 0.0
        %3695 = vmatprep.subr.mxu0 0.0
        %3696 = vmatpush2.msra.mxu0 0.0
        %3697 = vmatprep.subr.mxu0 0.0
        %3698 = vmatpush2.msra.mxu0 0.0
        %3699 = vmatprep.subr.mxu0 0.0
        %3700 = vmatpush2.msra.mxu0 0.0
        %3701 = vmatprep.subr.mxu0 0.0
        %3702 = vmatpush2.msra.mxu0 0.0
        %3703 = vmatprep.mubr.f32.mxu0 0.0
        %3704 = vmatmul.mubr.f32.gmra.mxu0 %v3632
        %v3705 = vpop.f32.mrf.mxu0
        %v3706 = vadd.f32 %v3637, %v3705
        %v3707 = vpop.f32.mrf.mxu0
        %v3708 = vadd.f32 %v3637, %v3707
        %3709 = vdwg.mxu0
        %v3712 = vcombine.low %v3706, %v3708
        %3714 = vst [vmem:[%s190] sm:$0xff] %v3712
        %s3715 = sand.u32 %s115, 1
        %s3716 = scalar_lea.sflag [#allocation3], %s3715
        %s3717 = sand.u32 %s115, 1
        %s3718 = smul.addr %s3717, 8
        %s3719 = scalar_lea.vmem [#allocation2], %s3718
        // Predicated region
        $region37: #{tpu_custom_call.1} parent=35 // pred_check
          %p3720 = pneg %p125
        $region38: #{tpu_custom_call.1} parent=35 // pred_check_branch
          %3722 = sbr.rel (%p3720) target = $region40
        $region39: #{tpu_custom_call.1} parent=35 // pred_region
          %s3724 = ssub.s32 128, 128
          %3725 = vsyncadd %s3716, %s3724
          %s3726 = smul.addr %s18, 2
          %s3727 = smul.addr %s3726, 64
          %s3728 = scalar_lea.hbm %s4, %s3727
          %s3730 = sshll.u32 %s3719, 4
          %s3731 = int_to_ptr.vmem [resolvable:$true] %s3730
          %3733 = dma.vmem_to_hbm [thread:$0]  %s3731, 128, %s3728, %s3716
        $region40: #{tpu_custom_call.1} parent=35 // pred_fallthru
          _
      $region36: #{tpu_custom_call.1} parent=5 // pred_fallthru
        _
      %p3734 = scmp.le.s32.totalorder 2, %s13
      // Predicated region
      $region41: #{tpu_custom_call.1} parent=5 // pred_check
        %p3735 = pneg %p3734
      $region42: #{tpu_custom_call.1} parent=5 // pred_check_branch
        %3737 = sbr.rel (%p3735) target = $region44
      $region43: #{tpu_custom_call.1} parent=5 // pred_region
        %s3738 = ssub.s32 %s13, 2
        // Predicated region
        $region45: #{tpu_custom_call.1} parent=43 // pred_check
          %p3739 = pneg %p131
        $region46: #{tpu_custom_call.1} parent=43 // pred_check_branch
          %3741 = sbr.rel (%p3739) target = $region48
        $region47: #{tpu_custom_call.1} parent=43 // pred_region
          %s3742 = sand.u32 %s116, 1
          %s3743 = scalar_lea.sflag [#allocation3], %s3742
          %s3744 = sand.u32 %s116, 1
          %s3745 = smul.addr %s3744, 8
          %s3746 = scalar_lea.vmem [#allocation2], %s3745
          %3747 = dma.done %s3743, 128
        $region48: #{tpu_custom_call.1} parent=43 // pred_fallthru
          _
      $region44: #{tpu_custom_call.1} parent=5 // pred_fallthru
        _
    $region6: #{tpu_custom_call.1} parent=1 // loop_footer
      %s17 = sadd.s32 1, %s13
    $region7: #{tpu_custom_call.1} parent=1 // loop_footer_branch
      %12 = sbr.rel target = $region3
    $region8: #{tpu_custom_call.1} parent=1 // loop_exit
      _
    %3748 = vsyncpa [#allocation3], 1
    %s3749 = scalar_lea.sflag [#allocation3], 1
    %3750 = vsyncpa %s3749, 1

</llo_original>
